<compile_context>
chip_gen: v6e
topology: v6e:2x2x1
jax: 0.10.0
libtpu: 0.0.40
codegen_flags: <defaults>
</compile_context>

<pallas_src>
import functools
import math

import jax
import jax.numpy as jnp
from jax.experimental import pallas as pl
from jax.experimental.pallas import tpu as pltpu


def _round_up(x, m):
    return (x + m - 1) // m * m


def _vmem_limit_bytes():
    """Per-generation scoped-VMEM limit: 3/4 of physical VMEM, capped at 96 MiB."""
    cap = 64 * 1024 * 1024  # conservative default (v7x physical)
    try:
        info = pltpu.get_tpu_info()
        cap = int(getattr(info, "vmem_capacity_bytes", cap))
    except Exception:
        pass
    return int(min(cap * 3 // 4, 96 * 1024 * 1024))


def _pad_cast(a, shape, dtype):
    """Cast first, then zero-pad (avoids materializing an f32 N^2 temp)."""
    a = a.astype(dtype)
    pads = [(0, s - d) for s, d in zip(shape, a.shape)]
    if any(p[1] for p in pads):
        a = jnp.pad(a, pads)
    return a


# --------------------------- fused single-call path --------------------------
def _gcn_fused_kernel(x_ref, adj_ref, w1_ref, b1_ref, w2_ref, b2_ref, o_ref,
                      *, valid_cols):
    bf16 = jnp.bfloat16
    # layer 1: h1 = relu(A @ (x @ W1) + b1)
    s1 = jnp.dot(x_ref[...], w1_ref[...], preferred_element_type=jnp.float32)
    h1 = jnp.dot(adj_ref[...], s1.astype(bf16),
                 preferred_element_type=jnp.float32) + b1_ref[...]
    h1 = jnp.maximum(h1, 0.0)
    # dropout(p) is identity in inference mode.
    # TODO(synk): training-mode dropout (pltpu.prng_*) not implemented.
    # layer 2: h2 = A @ (h1 @ W2) + b2
    s2 = jnp.dot(h1.astype(bf16), w2_ref[...],
                 preferred_element_type=jnp.float32)
    h2 = jnp.dot(adj_ref[...], s2.astype(bf16),
                 preferred_element_type=jnp.float32) + b2_ref[...]
    # masked log_softmax over the valid output lanes only
    col = jax.lax.broadcasted_iota(jnp.int32, h2.shape, 1)
    h2 = jnp.where(col < valid_cols, h2, -1e30)
    m = jnp.max(h2, axis=-1, keepdims=True)
    z = h2 - m
    lse = jnp.log(jnp.sum(jnp.exp(z), axis=-1, keepdims=True))
    o_ref[...] = z - lse


def _gcn_fused(x_p, adj_p, w1_p, b1_p, w2_p, b2_p, f_out, vmem_limit):
    np_ = adj_p.shape[0]
    f_out_p = w2_p.shape[1]
    vmem_spec = lambda: pl.BlockSpec(memory_space=pltpu.MemorySpace.VMEM)
    return pl.pallas_call(
        functools.partial(_gcn_fused_kernel, valid_cols=f_out),
        out_shape=jax.ShapeDtypeStruct((np_, f_out_p), jnp.float32),
        in_specs=[vmem_spec() for _ in range(6)],
        out_specs=vmem_spec(),
        compiler_params=pltpu.CompilerParams(vmem_limit_bytes=vmem_limit),
    )(x_p, adj_p, w1_p, b1_p, w2_p, b2_p)


# -------------------------- tiled two-call path (large N) --------------------
def _agg1_kernel(adj_ref, x_ref, w1_ref, b1_ref, w2_ref, o_ref, acc_ref):
    """support2 = relu(A @ (x @ W1) + b1) @ W2   (projection fused per k-tile)."""
    k = pl.program_id(1)

    @pl.when(k == 0)
    def _():
        acc_ref[...] = jnp.broadcast_to(b1_ref[...], acc_ref.shape)

    s1 = jnp.dot(x_ref[...], w1_ref[...], preferred_element_type=jnp.float32)
    acc_ref[...] += jnp.dot(adj_ref[...], s1.astype(adj_ref.dtype),
                            preferred_element_type=jnp.float32)

    @pl.when(k == pl.num_programs(1) - 1)
    def _():
        h1 = jnp.maximum(acc_ref[...], 0.0)
        # dropout(p) identity in inference mode.
        o_ref[...] = jnp.dot(h1.astype(w2_ref.dtype), w2_ref[...],
                             preferred_element_type=jnp.float32
                             ).astype(o_ref.dtype)


def _agg2_kernel(adj_ref, s2_ref, b2_ref, o_ref, acc_ref, *, valid_cols):
    """out = log_softmax(A @ support2 + b2, axis=1)."""
    k = pl.program_id(1)

    @pl.when(k == 0)
    def _():
        acc_ref[...] = jnp.broadcast_to(b2_ref[...], acc_ref.shape)

    acc_ref[...] += jnp.dot(adj_ref[...], s2_ref[...],
                            preferred_element_type=jnp.float32)

    @pl.when(k == pl.num_programs(1) - 1)
    def _():
        h2 = acc_ref[...]
        col = jax.lax.broadcasted_iota(jnp.int32, h2.shape, 1)
        h2 = jnp.where(col < valid_cols, h2, -1e30)
        m = jnp.max(h2, axis=-1, keepdims=True)
        z = h2 - m
        lse = jnp.log(jnp.sum(jnp.exp(z), axis=-1, keepdims=True))
        o_ref[...] = z - lse


def _gcn_tiled(x_p, adj_p, w1_p, b1_p, w2_p, b2_p, f_out, vmem_limit, tm, tk):
    np_ = adj_p.shape[0]
    f_in_p, hid_p = w1_p.shape
    f_out_p = w2_p.shape[1]
    n_row, n_k = np_ // tm, np_ // tk

    cp = pltpu.CompilerParams(
        dimension_semantics=("parallel", "arbitrary"),
        vmem_limit_bytes=vmem_limit,
    )

    # stage B (stage A fused in): support2 = relu(A @ (x @ W1) + b1) @ W2
    support2 = pl.pallas_call(
        _agg1_kernel,
        out_shape=jax.ShapeDtypeStruct((np_, f_out_p), jnp.bfloat16),
        grid_spec=pltpu.PrefetchScalarGridSpec(
            num_scalar_prefetch=0,
            grid=(n_row, n_k),
            in_specs=[
                pl.BlockSpec((tm, tk), lambda i, k: (i, k)),
                pl.BlockSpec((tk, f_in_p), lambda i, k: (k, 0)),
                pl.BlockSpec((f_in_p, hid_p), lambda i, k: (0, 0)),
                pl.BlockSpec((1, hid_p), lambda i, k: (0, 0)),
                pl.BlockSpec((hid_p, f_out_p), lambda i, k: (0, 0)),
            ],
            out_specs=pl.BlockSpec((tm, f_out_p), lambda i, k: (i, 0)),
            scratch_shapes=[pltpu.VMEM((tm, hid_p), jnp.float32)],
        ),
        compiler_params=cp,
    )(adj_p, x_p, w1_p, b1_p, w2_p)

    # stage C: out = log_softmax(A @ support2 + b2)
    out_p = pl.pallas_call(
        functools.partial(_agg2_kernel, valid_cols=f_out),
        out_shape=jax.ShapeDtypeStruct((np_, f_out_p), jnp.float32),
        grid_spec=pltpu.PrefetchScalarGridSpec(
            num_scalar_prefetch=0,
            grid=(n_row, n_k),
            in_specs=[
                pl.BlockSpec((tm, tk), lambda i, k: (i, k)),
                pl.BlockSpec((tk, f_out_p), lambda i, k: (k, 0)),
                pl.BlockSpec((1, f_out_p), lambda i, k: (0, 0)),
            ],
            out_specs=pl.BlockSpec((tm, f_out_p), lambda i, k: (i, 0)),
            scratch_shapes=[pltpu.VMEM((tm, f_out_p), jnp.float32)],
        ),
        compiler_params=cp,
    )(adj_p, support2, b2_p)

    return out_p


# ------------------------------- public forward ------------------------------
def gcn_forward(x, adj_dense, w1, b1, w2, b2, *, force_tiled=False):
    N, f_in = x.shape
    hid = w1.shape[1]
    f_out = w2.shape[1]

    f32, bf16 = jnp.float32, jnp.bfloat16

    # lane padding (feature dims -> multiples of 128)
    f_in_p = _round_up(f_in, 128)
    hid_p = _round_up(hid, 128)
    f_out_p = _round_up(f_out, 128)

    vmem_limit = _vmem_limit_bytes()

    # ---- fused single-call path: whole padded problem resident in VMEM ----
    np_f = _round_up(N, 256)
    fused_bytes = (
        np_f * np_f * 2                               # adj bf16
        + np_f * f_in_p * 2                           # x bf16
        + (f_in_p * hid_p + hid_p * f_out_p) * 2      # weights bf16
        + np_f * f_out_p * 4                          # output f32
        + np_f * (hid_p + f_out_p) * 4 * 2            # intermediates (generous)
    )
    if (not force_tiled) and fused_bytes <= vmem_limit // 3:
        x_p = _pad_cast(x, (np_f, f_in_p), bf16)
        adj_p = _pad_cast(adj_dense, (np_f, np_f), bf16)  # integer counts: exact
        w1_p = _pad_cast(w1, (f_in_p, hid_p), bf16)
        w2_p = _pad_cast(w2, (hid_p, f_out_p), bf16)
        b1_p = _pad_cast(b1.reshape(1, -1), (1, hid_p), f32)
        b2_p = _pad_cast(b2.reshape(1, -1), (1, f_out_p), f32)
        out_p = _gcn_fused(x_p, adj_p, w1_p, b1_p, w2_p, b2_p, f_out, vmem_limit)
        return out_p[:N, :f_out]

    # ---- tiled two-call path (large graphs) ----
    np_ = _round_up(N, 512)
    tm = 512
    if (np_ // tm) > 1 and (np_ // tm) % 2 == 1:
        tm = 256  # even row-tile count -> balanced sharding on v7x's 2 TCs
    tk = max(t for t in (2048, 1024, 512) if np_ % t == 0)

    x_p = _pad_cast(x, (np_, f_in_p), bf16)
    adj_p = _pad_cast(adj_dense, (np_, np_), bf16)
    w1_p = _pad_cast(w1, (f_in_p, hid_p), bf16)
    w2_p = _pad_cast(w2, (hid_p, f_out_p), bf16)
    b1_p = _pad_cast(b1.reshape(1, -1), (1, hid_p), f32)
    b2_p = _pad_cast(b2.reshape(1, -1), (1, f_out_p), f32)

    out_p = _gcn_tiled(x_p, adj_p, w1_p, b1_p, w2_p, b2_p,
                       f_out, vmem_limit, tm, tk)
    return out_p[:N, :f_out]


# --------------------------------- glue --------------------------------------
def init_gcn_params(key, in_feats, out_feats):
    """Deterministic analogue of GraphConvolution.reset_parameters()."""
    hid = 2 * out_feats
    k1, k2, k3, k4 = jax.random.split(key, 4)
    stdv1 = 1.0 / math.sqrt(hid)
    stdv2 = 1.0 / math.sqrt(out_feats)
    w1 = jax.random.uniform(k1, (in_feats, hid), jnp.float32, -stdv1, stdv1)
    b1 = jax.random.uniform(k2, (hid,), jnp.float32, -stdv1, stdv1)
    w2 = jax.random.uniform(k3, (hid, out_feats), jnp.float32, -stdv2, stdv2)
    b2 = jax.random.uniform(k4, (out_feats,), jnp.float32, -stdv2, stdv2)
    return w1, b1, w2, b2


def to_dense_adj(edge_index, num_nodes):
    """Dense adjacency from a (2, E) edge_index (like torch_geometric's)."""
    src, dst = edge_index[0], edge_index[1]
    adj = jnp.zeros((num_nodes, num_nodes), jnp.float32)
    return adj.at[src, dst].add(1.0)


if __name__ == "__main__":
    key = jax.random.PRNGKey(0)
    k_x, k_e, k_p = jax.random.split(key, 3)

    N = 300
    in_feats = 16
    out_feats = 8
    E = 900

    x = jax.random.normal(k_x, (N, in_feats), jnp.float32)
    edge_index = jax.random.randint(k_e, (2, E), 0, N, jnp.int32)
    adj_dense = to_dense_adj(edge_index, N)

    w1, b1, w2, b2 = init_gcn_params(k_p, in_feats, out_feats)

    # pure-f32 reference of the same forward pass
    h1_ref = jnp.maximum(adj_dense @ (x @ w1) + b1, 0.0)
    h2_ref = adj_dense @ (h1_ref @ w2) + b2
    ref = jax.nn.log_softmax(h2_ref, axis=1)

    # fused single-call path (chosen automatically at this size)
    out = gcn_forward(x, adj_dense, w1, b1, w2, b2)
    jax.block_until_ready(out)
    assert out.shape == (N, out_feats)
    row_sums = jnp.sum(jnp.exp(out), axis=1)
    assert bool(jnp.all(jnp.abs(row_sums - 1.0) < 1e-3))
    # bf16 MXU operands (f32 accumulation) -> small drift vs pure-f32 reference
    assert bool(jnp.max(jnp.abs(out - ref)) < 0.1)

    # tiled path exercised explicitly so the large-graph code is validated too
    out_t = gcn_forward(x, adj_dense, w1, b1, w2, b2, force_tiled=True)
    jax.block_until_ready(out_t)
    assert out_t.shape == (N, out_feats)
    assert bool(jnp.max(jnp.abs(out_t - ref)) < 0.1)

    print("KERNEL_OK")
</pallas_src>

<mosaic_0001>
module attributes {stable_mosaic.version = 11 : i64} {
  func.func @_gcn_fused_kernel(%arg0: memref<512x128xbf16, #tpu.memory_space<vmem>>, %arg1: memref<512x512xbf16, #tpu.memory_space<vmem>>, %arg2: memref<128x128xbf16, #tpu.memory_space<vmem>>, %arg3: memref<1x128xf32, #tpu.memory_space<vmem>>, %arg4: memref<128x128xbf16, #tpu.memory_space<vmem>>, %arg5: memref<1x128xf32, #tpu.memory_space<vmem>>, %arg6: memref<512x128xf32, #tpu.memory_space<vmem>>) attributes {dimension_semantics = [], scalar_prefetch = 0 : i64, scratch_operands = 0 : i64, tpu.core_type = #tpu.core_type<tc>} {
    %c0 = arith.constant 0 : index
    %c0_0 = arith.constant 0 : index
    %0 = vector.load %arg0[%c0, %c0_0] : memref<512x128xbf16, #tpu.memory_space<vmem>>, vector<512x128xbf16>
    %c0_1 = arith.constant 0 : index
    %c0_2 = arith.constant 0 : index
    %1 = vector.load %arg2[%c0_1, %c0_2] : memref<128x128xbf16, #tpu.memory_space<vmem>>, vector<128x128xbf16>
    %cst = arith.constant dense<0.000000e+00> : vector<512x128xf32>
    %2 = tpu.matmul %0, %1, %cst {dimension_numbers = #tpu.dot_dimension_numbers<[1], [0], [0], [1], [0, 0, 1, 1], [], []>} : vector<512x128xbf16>, vector<128x128xbf16>, vector<512x128xf32> -> vector<512x128xf32>
    %c0_3 = arith.constant 0 : index
    %c0_4 = arith.constant 0 : index
    %3 = vector.load %arg1[%c0_3, %c0_4] : memref<512x512xbf16, #tpu.memory_space<vmem>>, vector<512x512xbf16>
    %4 = arith.truncf %2 : vector<512x128xf32> to vector<512x128xbf16>
    %cst_5 = arith.constant dense<0.000000e+00> : vector<512x128xf32>
    %5 = tpu.matmul %3, %4, %cst_5 {dimension_numbers = #tpu.dot_dimension_numbers<[1], [0], [0], [1], [0, 0, 1, 1], [], []>} : vector<512x512xbf16>, vector<512x128xbf16>, vector<512x128xf32> -> vector<512x128xf32>
    %c0_6 = arith.constant 0 : index
    %c0_7 = arith.constant 0 : index
    %6 = vector.load %arg3[%c0_6, %c0_7] : memref<1x128xf32, #tpu.memory_space<vmem>>, vector<1x128xf32>
    %7 = vector.broadcast %6 : vector<1x128xf32> to vector<512x128xf32>
    %8 = arith.addf %5, %7 : vector<512x128xf32>
    %cst_8 = arith.constant 0.000000e+00 : f32
    %9 = vector.broadcast %cst_8 : f32 to vector<512x128xf32>
    %10 = arith.maximumf %8, %9 : vector<512x128xf32>
    %11 = arith.truncf %10 : vector<512x128xf32> to vector<512x128xbf16>
    %c0_9 = arith.constant 0 : index
    %c0_10 = arith.constant 0 : index
    %12 = vector.load %arg4[%c0_9, %c0_10] : memref<128x128xbf16, #tpu.memory_space<vmem>>, vector<128x128xbf16>
    %cst_11 = arith.constant dense<0.000000e+00> : vector<512x128xf32>
    %13 = tpu.matmul %11, %12, %cst_11 {dimension_numbers = #tpu.dot_dimension_numbers<[1], [0], [0], [1], [0, 0, 1, 1], [], []>} : vector<512x128xbf16>, vector<128x128xbf16>, vector<512x128xf32> -> vector<512x128xf32>
    %c0_12 = arith.constant 0 : index
    %c0_13 = arith.constant 0 : index
    %14 = vector.load %arg1[%c0_12, %c0_13] : memref<512x512xbf16, #tpu.memory_space<vmem>>, vector<512x512xbf16>
    %15 = arith.truncf %13 : vector<512x128xf32> to vector<512x128xbf16>
    %cst_14 = arith.constant dense<0.000000e+00> : vector<512x128xf32>
    %16 = tpu.matmul %14, %15, %cst_14 {dimension_numbers = #tpu.dot_dimension_numbers<[1], [0], [0], [1], [0, 0, 1, 1], [], []>} : vector<512x512xbf16>, vector<512x128xbf16>, vector<512x128xf32> -> vector<512x128xf32>
    %c0_15 = arith.constant 0 : index
    %c0_16 = arith.constant 0 : index
    %17 = vector.load %arg5[%c0_15, %c0_16] : memref<1x128xf32, #tpu.memory_space<vmem>>, vector<1x128xf32>
    %18 = vector.broadcast %17 : vector<1x128xf32> to vector<512x128xf32>
    %19 = arith.addf %16, %18 : vector<512x128xf32>
    %20 = tpu.iota {dimensions = array<i32: 1>} : vector<512x128xi32>
    %c8_i32 = arith.constant 8 : i32
    %21 = vector.broadcast %c8_i32 : i32 to vector<512x128xi32>
    %22 = arith.cmpi slt, %20, %21 : vector<512x128xi32>
    %cst_17 = arith.constant -1.000000e+30 : f32
    %23 = vector.broadcast %cst_17 : f32 to vector<512x128xf32>
    %24 = arith.select %22, %19, %23 : vector<512x128xi1>, vector<512x128xf32>
    %cst_18 = arith.constant dense<0xFF800000> : vector<512xf32>
    %25 = vector.multi_reduction <maximumf>, %24, %cst_18 [1] : vector<512x128xf32> to vector<512xf32>
    %26 = vector.shape_cast %25 : vector<512xf32> to vector<512x1xf32>
    %27 = vector.broadcast %26 : vector<512x1xf32> to vector<512x128xf32>
    %28 = arith.subf %24, %27 : vector<512x128xf32>
    %29 = math.exp %28 : vector<512x128xf32>
    %cst_19 = arith.constant dense<0.000000e+00> : vector<512xf32>
    %30 = vector.multi_reduction <add>, %29, %cst_19 [1] : vector<512x128xf32> to vector<512xf32>
    %31 = vector.shape_cast %30 : vector<512xf32> to vector<512x1xf32>
    %32 = math.log %31 : vector<512x1xf32>
    %33 = vector.broadcast %32 : vector<512x1xf32> to vector<512x128xf32>
    %34 = arith.subf %28, %33 : vector<512x128xf32>
    %c0_20 = arith.constant 0 : index
    %c0_21 = arith.constant 0 : index
    %35 = vector.load %arg6[%c0_20, %c0_21] : memref<512x128xf32, #tpu.memory_space<vmem>>, vector<512x128xf32>
    tpu.vector_store %arg6[%c0_20, %c0_21], %34 {strides = array<i32>} : memref<512x128xf32, #tpu.memory_space<vmem>>, vector<512x128xf32>,
    return
  }
}

</mosaic_0001>

<llo_original>
// kernel: tpu_custom_call.1
$region0: #{tpu_custom_call.1}
  #allocation0 [shape = 'u32[]', space=smem, size = 0x4, offset = 0x4, fixed_abs, tag = 'smem constant byte address 0x4 - core index']
  #allocation1 [shape = 'u32[144,128]{1,0:T(1,128)}', space=vmem, size = 0x12000, scoped, tag = 'internal scratch']
  %s0 = inlined_call_operand.hbm [shape: bf16[512,128], index: 0, kind: input, shape index: {}]
  %s1 = inlined_call_operand.hbm [shape: bf16[512,512], index: 1, kind: input, shape index: {}]
  %s2 = inlined_call_operand.hbm [shape: bf16[128,128], index: 2, kind: input, shape index: {}]
  %s3 = inlined_call_operand.vmem [shape: f32[1,128], index: 3, kind: input, shape index: {}]
  %s4 = inlined_call_operand.hbm [shape: bf16[128,128], index: 4, kind: input, shape index: {}]
  %s5 = inlined_call_operand.vmem [shape: f32[1,128], index: 5, kind: input, shape index: {}]
  %s6 = inlined_call_operand.hbm [shape: f32[512,128], index: 6, kind: output, shape index: {}]
  %s7 = sld [smem:[#allocation0]]
  $region50: #{tpu_custom_call.1} parent=0
    _
  %s9 = ssub.s32 1, %s7
  %s10 = scalar_select 0, %s9, %s7
  $region1: #{tpu_custom_call.1} parent=0
    #allocation2 [shape = 'u8[131072]{0}', space=vmem, size = 0x20000, scoped, tag = 'input window, operand 0, single buffered']
    #allocation3 [shape = 's32[1]{0}', space=sflag, size = 0x4, scoped, tag = 'scoped memory for tpu_custom_call.1']
    #allocation4 [shape = 's32[1]{0}', space=sflag, size = 0x4, scoped, tag = 'scoped memory for tpu_custom_call.1']
    #allocation5 [shape = 'u8[524288]{0}', space=vmem, size = 0x80000, scoped, tag = 'input window, operand 1, single buffered']
    #allocation6 [shape = 's32[1]{0}', space=sflag, size = 0x4, scoped, tag = 'scoped memory for tpu_custom_call.1']
    #allocation7 [shape = 'u8[32768]{0}', space=vmem, size = 0x8000, scoped, tag = 'input window, operand 2, single buffered']
    #allocation8 [shape = 'u8[32768]{0}', space=vmem, size = 0x8000, scoped, tag = 'input window, operand 4, single buffered']
    #allocation9 [shape = 's32[1]{0}', space=sflag, size = 0x4, scoped, tag = 'scoped memory for tpu_custom_call.1']
    #allocation10 [shape = 'u8[262144]{0}', space=vmem, size = 0x40000, scoped, tag = 'output window, operand 0, single buffered']
    %11 = vsyncpa [#allocation3], 0
    %12 = vsyncpa [#allocation6], 0
    %13 = vsyncpa [#allocation9], 0
    %14 = vsyncpa [#allocation4], 0
    // Predicated region
    $region2: #{tpu_custom_call.1} parent=1 // pred_check
      _
    $region3: #{tpu_custom_call.1} parent=1 // pred_check_branch
      %16 = sbr.rel (0) target = $region5
    $region4: #{tpu_custom_call.1} parent=1 // pred_region
      %s18 = ssub.s32 4096, 4096
      %19 = vsyncadd [#allocation3], %s18
      %s20 = sshll.u32 [#allocation2], 4
      %s21 = int_to_ptr.vmem [resolvable:$true] %s20
      %26 = dma.hbm_to_vmem [thread:$0]  %s0, 4096, %s21, [#allocation3], 64, 64, 4
    $region5: #{tpu_custom_call.1} parent=1 // pred_fallthru
      _
    // Predicated region
    $region6: #{tpu_custom_call.1} parent=1 // pred_check
      _
    $region7: #{tpu_custom_call.1} parent=1 // pred_check_branch
      %28 = sbr.rel (0) target = $region9
    $region8: #{tpu_custom_call.1} parent=1 // pred_region
      %s30 = ssub.s32 16384, 16384
      %31 = vsyncadd [#allocation6], %s30
      %s32 = sshll.u32 [#allocation5], 4
      %s33 = int_to_ptr.vmem [resolvable:$true] %s32
      %38 = dma.hbm_to_vmem [thread:$0]  %s1, 16384, %s33, [#allocation6], 256, 256, 16
    $region9: #{tpu_custom_call.1} parent=1 // pred_fallthru
      _
    // Predicated region
    $region10: #{tpu_custom_call.1} parent=1 // pred_check
      _
    $region11: #{tpu_custom_call.1} parent=1 // pred_check_branch
      %40 = sbr.rel (0) target = $region13
    $region12: #{tpu_custom_call.1} parent=1 // pred_region
      %s42 = ssub.s32 1024, 1024
      %43 = vsyncadd [#allocation6], %s42
      %s44 = sshll.u32 [#allocation7], 4
      %s45 = int_to_ptr.vmem [resolvable:$true] %s44
      %50 = dma.hbm_to_vmem [thread:$0]  %s2, 1024, %s45, [#allocation6], 64, 64, 4
    $region13: #{tpu_custom_call.1} parent=1 // pred_fallthru
      _
    // Predicated region
    $region14: #{tpu_custom_call.1} parent=1 // pred_check
      _
    $region15: #{tpu_custom_call.1} parent=1 // pred_check_branch
      %52 = sbr.rel (0) target = $region17
    $region16: #{tpu_custom_call.1} parent=1 // pred_region
      _
    $region17: #{tpu_custom_call.1} parent=1 // pred_fallthru
      _
    // Predicated region
    $region18: #{tpu_custom_call.1} parent=1 // pred_check
      _
    $region19: #{tpu_custom_call.1} parent=1 // pred_check_branch
      %54 = sbr.rel (0) target = $region21
    $region20: #{tpu_custom_call.1} parent=1 // pred_region
      %s56 = ssub.s32 1024, 1024
      %57 = vsyncadd [#allocation9], %s56
      %s58 = sshll.u32 [#allocation8], 4
      %s59 = int_to_ptr.vmem [resolvable:$true] %s58
      %64 = dma.hbm_to_vmem [thread:$0]  %s4, 1024, %s59, [#allocation9], 64, 64, 4
    $region21: #{tpu_custom_call.1} parent=1 // pred_fallthru
      _
    // Predicated region
    $region22: #{tpu_custom_call.1} parent=1 // pred_check
      _
    $region23: #{tpu_custom_call.1} parent=1 // pred_check_branch
      %66 = sbr.rel (0) target = $region25
    $region24: #{tpu_custom_call.1} parent=1 // pred_region
      _
    $region25: #{tpu_custom_call.1} parent=1 // pred_fallthru
      _
    // Predicated region
    $region26: #{tpu_custom_call.1} parent=1 // pred_check
      _
    $region27: #{tpu_custom_call.1} parent=1 // pred_check_branch
      %68 = sbr.rel (0) target = $region29
    $region28: #{tpu_custom_call.1} parent=1 // pred_region
      %69 = dma.done [#allocation3], 4096
    $region29: #{tpu_custom_call.1} parent=1 // pred_fallthru
      _
    // Predicated region
    $region30: #{tpu_custom_call.1} parent=1 // pred_check
      _
    $region31: #{tpu_custom_call.1} parent=1 // pred_check_branch
      %71 = sbr.rel (0) target = $region33
    $region32: #{tpu_custom_call.1} parent=1 // pred_region
      %72 = dma.done [#allocation6], 16384
    $region33: #{tpu_custom_call.1} parent=1 // pred_fallthru
      _
    // Predicated region
    $region34: #{tpu_custom_call.1} parent=1 // pred_check
      _
    $region35: #{tpu_custom_call.1} parent=1 // pred_check_branch
      %74 = sbr.rel (0) target = $region37
    $region36: #{tpu_custom_call.1} parent=1 // pred_region
      %75 = dma.done [#allocation6], 1024
    $region37: #{tpu_custom_call.1} parent=1 // pred_fallthru
      _
    // Predicated region
    $region38: #{tpu_custom_call.1} parent=1 // pred_check
      _
    $region39: #{tpu_custom_call.1} parent=1 // pred_check_branch
      %77 = sbr.rel (0) target = $region41
    $region40: #{tpu_custom_call.1} parent=1 // pred_region
      %78 = dma.done [#allocation9], 1024
    $region41: #{tpu_custom_call.1} parent=1 // pred_fallthru
      _
    %v80 = vld [vmem:[#allocation2] sm:$0xf]
    %v81 = vld [vmem:[#allocation2 + $0x4] sm:$0xf]
    %v82 = vld [vmem:[#allocation2 + $0x8] sm:$0xf]
    %v83 = vld [vmem:[#allocation2 + $0xc] sm:$0xf]
    %v84 = vld [vmem:[#allocation2 + $0x10] sm:$0xf]
    %v85 = vld [vmem:[#allocation2 + $0x14] sm:$0xf]
    %v86 = vld [vmem:[#allocation2 + $0x18] sm:$0xf]
    %v87 = vld [vmem:[#allocation2 + $0x1c] sm:$0xf]
    %v88 = vld [vmem:[#allocation2 + $0x20] sm:$0xf]
    %v89 = vld [vmem:[#allocation2 + $0x24] sm:$0xf]
    %v90 = vld [vmem:[#allocation2 + $0x28] sm:$0xf]
    %v91 = vld [vmem:[#allocation2 + $0x2c] sm:$0xf]
    %v92 = vld [vmem:[#allocation2 + $0x30] sm:$0xf]
    %v93 = vld [vmem:[#allocation2 + $0x34] sm:$0xf]
    %v94 = vld [vmem:[#allocation2 + $0x38] sm:$0xf]
    %v95 = vld [vmem:[#allocation2 + $0x3c] sm:$0xf]
    %v96 = vld [vmem:[#allocation2 + $0x40] sm:$0xf]
    %v97 = vld [vmem:[#allocation2 + $0x44] sm:$0xf]
    %v98 = vld [vmem:[#allocation2 + $0x48] sm:$0xf]
    %v99 = vld [vmem:[#allocation2 + $0x4c] sm:$0xf]
    %v100 = vld [vmem:[#allocation2 + $0x50] sm:$0xf]
    %v101 = vld [vmem:[#allocation2 + $0x54] sm:$0xf]
    %v102 = vld [vmem:[#allocation2 + $0x58] sm:$0xf]
    %v103 = vld [vmem:[#allocation2 + $0x5c] sm:$0xf]
    %v104 = vld [vmem:[#allocation2 + $0x60] sm:$0xf]
    %v105 = vld [vmem:[#allocation2 + $0x64] sm:$0xf]
    %v106 = vld [vmem:[#allocation2 + $0x68] sm:$0xf]
    %v107 = vld [vmem:[#allocation2 + $0x6c] sm:$0xf]
    %v108 = vld [vmem:[#allocation2 + $0x70] sm:$0xf]
    %v109 = vld [vmem:[#allocation2 + $0x74] sm:$0xf]
    %v110 = vld [vmem:[#allocation2 + $0x78] sm:$0xf]
    %v111 = vld [vmem:[#allocation2 + $0x7c] sm:$0xf]
    %v112 = vld [vmem:[#allocation2 + $0x80] sm:$0xf]
    %v113 = vld [vmem:[#allocation2 + $0x84] sm:$0xf]
    %v114 = vld [vmem:[#allocation2 + $0x88] sm:$0xf]
    %v115 = vld [vmem:[#allocation2 + $0x8c] sm:$0xf]
    %v116 = vld [vmem:[#allocation2 + $0x90] sm:$0xf]
    %v117 = vld [vmem:[#allocation2 + $0x94] sm:$0xf]
    %v118 = vld [vmem:[#allocation2 + $0x98] sm:$0xf]
    %v119 = vld [vmem:[#allocation2 + $0x9c] sm:$0xf]
    %v120 = vld [vmem:[#allocation2 + $0xa0] sm:$0xf]
    %v121 = vld [vmem:[#allocation2 + $0xa4] sm:$0xf]
    %v122 = vld [vmem:[#allocation2 + $0xa8] sm:$0xf]
    %v123 = vld [vmem:[#allocation2 + $0xac] sm:$0xf]
    %v124 = vld [vmem:[#allocation2 + $0xb0] sm:$0xf]
    %v125 = vld [vmem:[#allocation2 + $0xb4] sm:$0xf]
    %v126 = vld [vmem:[#allocation2 + $0xb8] sm:$0xf]
    %v127 = vld [vmem:[#allocation2 + $0xbc] sm:$0xf]
    %v128 = vld [vmem:[#allocation2 + $0xc0] sm:$0xf]
    %v129 = vld [vmem:[#allocation2 + $0xc4] sm:$0xf]
    %v130 = vld [vmem:[#allocation2 + $0xc8] sm:$0xf]
    %v131 = vld [vmem:[#allocation2 + $0xcc] sm:$0xf]
    %v132 = vld [vmem:[#allocation2 + $0xd0] sm:$0xf]
    %v133 = vld [vmem:[#allocation2 + $0xd4] sm:$0xf]
    %v134 = vld [vmem:[#allocation2 + $0xd8] sm:$0xf]
    %v135 = vld [vmem:[#allocation2 + $0xdc] sm:$0xf]
    %v136 = vld [vmem:[#allocation2 + $0xe0] sm:$0xf]
    %v137 = vld [vmem:[#allocation2 + $0xe4] sm:$0xf]
    %v138 = vld [vmem:[#allocation2 + $0xe8] sm:$0xf]
    %v139 = vld [vmem:[#allocation2 + $0xec] sm:$0xf]
    %v140 = vld [vmem:[#allocation2 + $0xf0] sm:$0xf]
    %v141 = vld [vmem:[#allocation2 + $0xf4] sm:$0xf]
    %v142 = vld [vmem:[#allocation2 + $0xf8] sm:$0xf]
    %v143 = vld [vmem:[#allocation2 + $0xfc] sm:$0xf]
    %v144 = vld [vmem:[#allocation7] sm:$0xf]
    %v145 = vld [vmem:[#allocation7 + $0x4] sm:$0xf]
    %v146 = vld [vmem:[#allocation7 + $0x8] sm:$0xf]
    %v147 = vld [vmem:[#allocation7 + $0xc] sm:$0xf]
    %v148 = vld [vmem:[#allocation7 + $0x10] sm:$0xf]
    %v149 = vld [vmem:[#allocation7 + $0x14] sm:$0xf]
    %v150 = vld [vmem:[#allocation7 + $0x18] sm:$0xf]
    %v151 = vld [vmem:[#allocation7 + $0x1c] sm:$0xf]
    %v152 = vld [vmem:[#allocation7 + $0x20] sm:$0xf]
    %v153 = vld [vmem:[#allocation7 + $0x24] sm:$0xf]
    %v154 = vld [vmem:[#allocation7 + $0x28] sm:$0xf]
    %v155 = vld [vmem:[#allocation7 + $0x2c] sm:$0xf]
    %v156 = vld [vmem:[#allocation7 + $0x30] sm:$0xf]
    %v157 = vld [vmem:[#allocation7 + $0x34] sm:$0xf]
    %v158 = vld [vmem:[#allocation7 + $0x38] sm:$0xf]
    %v159 = vld [vmem:[#allocation7 + $0x3c] sm:$0xf]
    %v224 = vunpack.c.l.b16 %v80
    %v225 = vunpack.c.l.b16 %v81
    %v226 = vunpack.c.l.b16 %v82
    %v227 = vunpack.c.l.b16 %v83
    %v228 = vunpack.c.l.b16 %v84
    %v229 = vunpack.c.l.b16 %v85
    %v230 = vunpack.c.l.b16 %v86
    %v231 = vunpack.c.l.b16 %v87
    %v232 = vunpack.c.l.b16 %v88
    %v233 = vunpack.c.l.b16 %v89
    %v234 = vunpack.c.l.b16 %v90
    %v235 = vunpack.c.l.b16 %v91
    %v236 = vunpack.c.l.b16 %v92
    %v237 = vunpack.c.l.b16 %v93
    %v238 = vunpack.c.l.b16 %v94
    %v239 = vunpack.c.l.b16 %v95
    %v240 = vunpack.c.l.b16 %v96
    %v241 = vunpack.c.l.b16 %v97
    %v242 = vunpack.c.l.b16 %v98
    %v243 = vunpack.c.l.b16 %v99
    %v244 = vunpack.c.l.b16 %v100
    %v245 = vunpack.c.l.b16 %v101
    %v246 = vunpack.c.l.b16 %v102
    %v247 = vunpack.c.l.b16 %v103
    %v248 = vunpack.c.l.b16 %v104
    %v249 = vunpack.c.l.b16 %v105
    %v250 = vunpack.c.l.b16 %v106
    %v251 = vunpack.c.l.b16 %v107
    %v252 = vunpack.c.l.b16 %v108
    %v253 = vunpack.c.l.b16 %v109
    %v254 = vunpack.c.l.b16 %v110
    %v255 = vunpack.c.l.b16 %v111
    %v256 = vunpack.c.l.b16 %v112
    %v257 = vunpack.c.l.b16 %v113
    %v258 = vunpack.c.l.b16 %v114
    %v259 = vunpack.c.l.b16 %v115
    %v260 = vunpack.c.l.b16 %v116
    %v261 = vunpack.c.l.b16 %v117
    %v262 = vunpack.c.l.b16 %v118
    %v263 = vunpack.c.l.b16 %v119
    %v264 = vunpack.c.l.b16 %v120
    %v265 = vunpack.c.l.b16 %v121
    %v266 = vunpack.c.l.b16 %v122
    %v267 = vunpack.c.l.b16 %v123
    %v268 = vunpack.c.l.b16 %v124
    %v269 = vunpack.c.l.b16 %v125
    %v270 = vunpack.c.l.b16 %v126
    %v271 = vunpack.c.l.b16 %v127
    %v272 = vunpack.c.l.b16 %v128
    %v273 = vunpack.c.l.b16 %v129
    %v274 = vunpack.c.l.b16 %v130
    %v275 = vunpack.c.l.b16 %v131
    %v276 = vunpack.c.l.b16 %v132
    %v277 = vunpack.c.l.b16 %v133
    %v278 = vunpack.c.l.b16 %v134
    %v279 = vunpack.c.l.b16 %v135
    %v280 = vunpack.c.l.b16 %v136
    %v281 = vunpack.c.l.b16 %v137
    %v282 = vunpack.c.l.b16 %v138
    %v283 = vunpack.c.l.b16 %v139
    %v284 = vunpack.c.l.b16 %v140
    %v285 = vunpack.c.l.b16 %v141
    %v286 = vunpack.c.l.b16 %v142
    %v287 = vunpack.c.l.b16 %v143
    %v288 = vpack.c.b16 %v225, %v224
    %v289 = vpack.c.b16 %v227, %v226
    %v290 = vpack.c.b16 %v229, %v228
    %v291 = vpack.c.b16 %v231, %v230
    %v292 = vpack.c.b16 %v233, %v232
    %v293 = vpack.c.b16 %v235, %v234
    %v294 = vpack.c.b16 %v237, %v236
    %v295 = vpack.c.b16 %v239, %v238
    %v296 = vpack.c.b16 %v241, %v240
    %v297 = vpack.c.b16 %v243, %v242
    %v298 = vpack.c.b16 %v245, %v244
    %v299 = vpack.c.b16 %v247, %v246
    %v300 = vpack.c.b16 %v249, %v248
    %v301 = vpack.c.b16 %v251, %v250
    %v302 = vpack.c.b16 %v253, %v252
    %v303 = vpack.c.b16 %v255, %v254
    %v304 = vpack.c.b16 %v257, %v256
    %v305 = vpack.c.b16 %v259, %v258
    %v306 = vpack.c.b16 %v261, %v260
    %v307 = vpack.c.b16 %v263, %v262
    %v308 = vpack.c.b16 %v265, %v264
    %v309 = vpack.c.b16 %v267, %v266
    %v310 = vpack.c.b16 %v269, %v268
    %v311 = vpack.c.b16 %v271, %v270
    %v312 = vpack.c.b16 %v273, %v272
    %v313 = vpack.c.b16 %v275, %v274
    %v314 = vpack.c.b16 %v277, %v276
    %v315 = vpack.c.b16 %v279, %v278
    %v316 = vpack.c.b16 %v281, %v280
    %v317 = vpack.c.b16 %v283, %v282
    %v318 = vpack.c.b16 %v285, %v284
    %v319 = vpack.c.b16 %v287, %v286
    %v368 = vunpack.c.l.b16 %v144
    %v369 = vunpack.c.l.b16 %v145
    %v370 = vunpack.c.l.b16 %v146
    %v371 = vunpack.c.l.b16 %v147
    %v372 = vunpack.c.l.b16 %v148
    %v373 = vunpack.c.l.b16 %v149
    %v374 = vunpack.c.l.b16 %v150
    %v375 = vunpack.c.l.b16 %v151
    %v376 = vunpack.c.l.b16 %v152
    %v377 = vunpack.c.l.b16 %v153
    %v378 = vunpack.c.l.b16 %v154
    %v379 = vunpack.c.l.b16 %v155
    %v380 = vunpack.c.l.b16 %v156
    %v381 = vunpack.c.l.b16 %v157
    %v382 = vunpack.c.l.b16 %v158
    %v383 = vunpack.c.l.b16 %v159
    %v384 = vpack.c.b16 %v369, %v368
    %v385 = vpack.c.b16 %v371, %v370
    %v386 = vpack.c.b16 %v373, %v372
    %v387 = vpack.c.b16 %v375, %v374
    %v388 = vpack.c.b16 %v377, %v376
    %v389 = vpack.c.b16 %v379, %v378
    %v390 = vpack.c.b16 %v381, %v380
    %v391 = vpack.c.b16 %v383, %v382
    %400 = vmatprep.subr.bf16.mxu0 0
    %401 = vmatpush1.bf16.msra.mxu0 %v391
    %402 = vmatprep.subr.bf16.mxu0 0
    %403 = vmatpush1.bf16.msra.mxu0 %v390
    %404 = vmatprep.subr.bf16.mxu0 0
    %405 = vmatpush1.bf16.msra.mxu0 %v389
    %406 = vmatprep.subr.bf16.mxu0 0
    %407 = vmatpush1.bf16.msra.mxu0 %v388
    %408 = vmatprep.subr.bf16.mxu0 0
    %409 = vmatpush1.bf16.msra.mxu0 %v387
    %410 = vmatprep.subr.bf16.mxu0 0
    %411 = vmatpush1.bf16.msra.mxu0 %v386
    %412 = vmatprep.subr.bf16.mxu0 0
    %413 = vmatpush1.bf16.msra.mxu0 %v385
    %414 = vmatprep.subr.bf16.mxu0 0
    %415 = vmatpush1.bf16.msra.mxu0 %v384
    %416 = vmatprep.subr.bf16.mxu0 0
    %417 = vmatpush2.bf16.msra.mxu0 0
    %418 = vmatprep.subr.bf16.mxu0 0
    %419 = vmatpush2.bf16.msra.mxu0 0
    %420 = vmatprep.subr.bf16.mxu0 0
    %421 = vmatpush2.bf16.msra.mxu0 0
    %422 = vmatprep.subr.bf16.mxu0 0
    %423 = vmatpush2.bf16.msra.mxu0 0
    %424 = vmatprep.subr.bf16.mxu0 0
    %425 = vmatpush2.bf16.msra.mxu0 0
    %426 = vmatprep.subr.bf16.mxu0 0
    %427 = vmatpush2.bf16.msra.mxu0 0
    %428 = vmatprep.subr.bf16.mxu0 0
    %429 = vmatpush2.bf16.msra.mxu0 0
    %430 = vmatprep.subr.bf16.mxu0 0
    %431 = vmatpush2.bf16.msra.mxu0 0
    %432 = vmatprep.mubr.bf16.mxu0 0
    %433 = vmatmul.mubr.bf16.gmra.mxu0 %v288
    %v434 = vpop.f32.mrf.mxu0
    %v435 = vadd.f32 0.0, %v434
    %v436 = vpop.f32.mrf.mxu0
    %v437 = vpop.f32.mrf.mxu0
    %v438 = vadd.f32 0.0, %v437
    %v439 = vpop.f32.mrf.mxu0
    %440 = vmatprep.mubr.bf16.mxu0 0
    %441 = vmatmul.mubr.bf16.gmra.mxu0 %v289
    %v442 = vpop.f32.mrf.mxu0
    %v443 = vadd.f32 0.0, %v442
    %v444 = vpop.f32.mrf.mxu0
    %v445 = vpop.f32.mrf.mxu0
    %v446 = vadd.f32 0.0, %v445
    %v447 = vpop.f32.mrf.mxu0
    %448 = vmatprep.mubr.bf16.mxu0 0
    %449 = vmatmul.mubr.bf16.gmra.mxu0 %v290
    %v450 = vpop.f32.mrf.mxu0
    %v451 = vadd.f32 0.0, %v450
    %v452 = vpop.f32.mrf.mxu0
    %v453 = vpop.f32.mrf.mxu0
    %v454 = vadd.f32 0.0, %v453
    %v455 = vpop.f32.mrf.mxu0
    %456 = vmatprep.mubr.bf16.mxu0 0
    %457 = vmatmul.mubr.bf16.gmra.mxu0 %v291
    %v458 = vpop.f32.mrf.mxu0
    %v459 = vadd.f32 0.0, %v458
    %v460 = vpop.f32.mrf.mxu0
    %v461 = vpop.f32.mrf.mxu0
    %v462 = vadd.f32 0.0, %v461
    %v463 = vpop.f32.mrf.mxu0
    %464 = vmatprep.mubr.bf16.mxu0 0
    %465 = vmatmul.mubr.bf16.gmra.mxu0 %v292
    %v466 = vpop.f32.mrf.mxu0
    %v467 = vadd.f32 0.0, %v466
    %v468 = vpop.f32.mrf.mxu0
    %v469 = vpop.f32.mrf.mxu0
    %v470 = vadd.f32 0.0, %v469
    %v471 = vpop.f32.mrf.mxu0
    %472 = vmatprep.mubr.bf16.mxu0 0
    %473 = vmatmul.mubr.bf16.gmra.mxu0 %v293
    %v474 = vpop.f32.mrf.mxu0
    %v475 = vadd.f32 0.0, %v474
    %v476 = vpop.f32.mrf.mxu0
    %v477 = vpop.f32.mrf.mxu0
    %v478 = vadd.f32 0.0, %v477
    %v479 = vpop.f32.mrf.mxu0
    %480 = vmatprep.mubr.bf16.mxu0 0
    %481 = vmatmul.mubr.bf16.gmra.mxu0 %v294
    %v482 = vpop.f32.mrf.mxu0
    %v483 = vadd.f32 0.0, %v482
    %v484 = vpop.f32.mrf.mxu0
    %v485 = vpop.f32.mrf.mxu0
    %v486 = vadd.f32 0.0, %v485
    %v487 = vpop.f32.mrf.mxu0
    %488 = vmatprep.mubr.bf16.mxu0 0
    %489 = vmatmul.mubr.bf16.gmra.mxu0 %v295
    %v490 = vpop.f32.mrf.mxu0
    %v491 = vadd.f32 0.0, %v490
    %v492 = vpop.f32.mrf.mxu0
    %v493 = vpop.f32.mrf.mxu0
    %v494 = vadd.f32 0.0, %v493
    %v495 = vpop.f32.mrf.mxu0
    %496 = vmatprep.mubr.bf16.mxu0 0
    %497 = vmatmul.mubr.bf16.gmra.mxu0 %v296
    %v498 = vpop.f32.mrf.mxu0
    %v499 = vadd.f32 0.0, %v498
    %v500 = vpop.f32.mrf.mxu0
    %v501 = vpop.f32.mrf.mxu0
    %v502 = vadd.f32 0.0, %v501
    %v503 = vpop.f32.mrf.mxu0
    %504 = vmatprep.mubr.bf16.mxu0 0
    %505 = vmatmul.mubr.bf16.gmra.mxu0 %v297
    %v506 = vpop.f32.mrf.mxu0
    %v507 = vadd.f32 0.0, %v506
    %v508 = vpop.f32.mrf.mxu0
    %v509 = vpop.f32.mrf.mxu0
    %v510 = vadd.f32 0.0, %v509
    %v511 = vpop.f32.mrf.mxu0
    %512 = vmatprep.mubr.bf16.mxu0 0
    %513 = vmatmul.mubr.bf16.gmra.mxu0 %v298
    %v514 = vpop.f32.mrf.mxu0
    %v515 = vadd.f32 0.0, %v514
    %v516 = vpop.f32.mrf.mxu0
    %v517 = vpop.f32.mrf.mxu0
    %v518 = vadd.f32 0.0, %v517
    %v519 = vpop.f32.mrf.mxu0
    %520 = vmatprep.mubr.bf16.mxu0 0
    %521 = vmatmul.mubr.bf16.gmra.mxu0 %v299
    %v522 = vpop.f32.mrf.mxu0
    %v523 = vadd.f32 0.0, %v522
    %v524 = vpop.f32.mrf.mxu0
    %v525 = vpop.f32.mrf.mxu0
    %v526 = vadd.f32 0.0, %v525
    %v527 = vpop.f32.mrf.mxu0
    %528 = vmatprep.mubr.bf16.mxu0 0
    %529 = vmatmul.mubr.bf16.gmra.mxu0 %v300
    %v530 = vpop.f32.mrf.mxu0
    %v531 = vadd.f32 0.0, %v530
    %v532 = vpop.f32.mrf.mxu0
    %v533 = vpop.f32.mrf.mxu0
    %v534 = vadd.f32 0.0, %v533
    %v535 = vpop.f32.mrf.mxu0
    %536 = vmatprep.mubr.bf16.mxu0 0
    %537 = vmatmul.mubr.bf16.gmra.mxu0 %v301
    %v538 = vpop.f32.mrf.mxu0
    %v539 = vadd.f32 0.0, %v538
    %v540 = vpop.f32.mrf.mxu0
    %v541 = vpop.f32.mrf.mxu0
    %v542 = vadd.f32 0.0, %v541
    %v543 = vpop.f32.mrf.mxu0
    %544 = vmatprep.mubr.bf16.mxu0 0
    %545 = vmatmul.mubr.bf16.gmra.mxu0 %v302
    %v546 = vpop.f32.mrf.mxu0
    %v547 = vadd.f32 0.0, %v546
    %v548 = vpop.f32.mrf.mxu0
    %v549 = vpop.f32.mrf.mxu0
    %v550 = vadd.f32 0.0, %v549
    %v551 = vpop.f32.mrf.mxu0
    %552 = vmatprep.mubr.bf16.mxu0 0
    %553 = vmatmul.mubr.bf16.gmra.mxu0 %v303
    %v554 = vpop.f32.mrf.mxu0
    %v555 = vadd.f32 0.0, %v554
    %v556 = vpop.f32.mrf.mxu0
    %v557 = vpop.f32.mrf.mxu0
    %v558 = vadd.f32 0.0, %v557
    %v559 = vpop.f32.mrf.mxu0
    %560 = vmatprep.mubr.bf16.mxu0 0
    %561 = vmatmul.mubr.bf16.gmra.mxu0 %v304
    %v562 = vpop.f32.mrf.mxu0
    %v563 = vadd.f32 0.0, %v562
    %v564 = vpop.f32.mrf.mxu0
    %v565 = vpop.f32.mrf.mxu0
    %v566 = vadd.f32 0.0, %v565
    %v567 = vpop.f32.mrf.mxu0
    %568 = vmatprep.mubr.bf16.mxu0 0
    %569 = vmatmul.mubr.bf16.gmra.mxu0 %v305
    %v570 = vpop.f32.mrf.mxu0
    %v571 = vadd.f32 0.0, %v570
    %v572 = vpop.f32.mrf.mxu0
    %v573 = vpop.f32.mrf.mxu0
    %v574 = vadd.f32 0.0, %v573
    %v575 = vpop.f32.mrf.mxu0
    %576 = vmatprep.mubr.bf16.mxu0 0
    %577 = vmatmul.mubr.bf16.gmra.mxu0 %v306
    %v578 = vpop.f32.mrf.mxu0
    %v579 = vadd.f32 0.0, %v578
    %v580 = vpop.f32.mrf.mxu0
    %v581 = vpop.f32.mrf.mxu0
    %v582 = vadd.f32 0.0, %v581
    %v583 = vpop.f32.mrf.mxu0
    %584 = vmatprep.mubr.bf16.mxu0 0
    %585 = vmatmul.mubr.bf16.gmra.mxu0 %v307
    %v586 = vpop.f32.mrf.mxu0
    %v587 = vadd.f32 0.0, %v586
    %v588 = vpop.f32.mrf.mxu0
    %v589 = vpop.f32.mrf.mxu0
    %v590 = vadd.f32 0.0, %v589
    %v591 = vpop.f32.mrf.mxu0
    %592 = vmatprep.mubr.bf16.mxu0 0
    %593 = vmatmul.mubr.bf16.gmra.mxu0 %v308
    %v594 = vpop.f32.mrf.mxu0
    %v595 = vadd.f32 0.0, %v594
    %v596 = vpop.f32.mrf.mxu0
    %v597 = vpop.f32.mrf.mxu0
    %v598 = vadd.f32 0.0, %v597
    %v599 = vpop.f32.mrf.mxu0
    %600 = vmatprep.mubr.bf16.mxu0 0
    %601 = vmatmul.mubr.bf16.gmra.mxu0 %v309
    %v602 = vpop.f32.mrf.mxu0
    %v603 = vadd.f32 0.0, %v602
    %v604 = vpop.f32.mrf.mxu0
    %v605 = vpop.f32.mrf.mxu0
    %v606 = vadd.f32 0.0, %v605
    %v607 = vpop.f32.mrf.mxu0
    %608 = vmatprep.mubr.bf16.mxu0 0
    %609 = vmatmul.mubr.bf16.gmra.mxu0 %v310
    %v610 = vpop.f32.mrf.mxu0
    %v611 = vadd.f32 0.0, %v610
    %v612 = vpop.f32.mrf.mxu0
    %v613 = vpop.f32.mrf.mxu0
    %v614 = vadd.f32 0.0, %v613
    %v615 = vpop.f32.mrf.mxu0
    %616 = vmatprep.mubr.bf16.mxu0 0
    %617 = vmatmul.mubr.bf16.gmra.mxu0 %v311
    %v618 = vpop.f32.mrf.mxu0
    %v619 = vadd.f32 0.0, %v618
    %v620 = vpop.f32.mrf.mxu0
    %v621 = vpop.f32.mrf.mxu0
    %v622 = vadd.f32 0.0, %v621
    %v623 = vpop.f32.mrf.mxu0
    %624 = vmatprep.mubr.bf16.mxu0 0
    %625 = vmatmul.mubr.bf16.gmra.mxu0 %v312
    %v626 = vpop.f32.mrf.mxu0
    %v627 = vadd.f32 0.0, %v626
    %v628 = vpop.f32.mrf.mxu0
    %v629 = vpop.f32.mrf.mxu0
    %v630 = vadd.f32 0.0, %v629
    %v631 = vpop.f32.mrf.mxu0
    %632 = vmatprep.mubr.bf16.mxu0 0
    %633 = vmatmul.mubr.bf16.gmra.mxu0 %v313
    %v634 = vpop.f32.mrf.mxu0
    %v635 = vadd.f32 0.0, %v634
    %v636 = vpop.f32.mrf.mxu0
    %v637 = vpop.f32.mrf.mxu0
    %v638 = vadd.f32 0.0, %v637
    %v639 = vpop.f32.mrf.mxu0
    %640 = vmatprep.mubr.bf16.mxu0 0
    %641 = vmatmul.mubr.bf16.gmra.mxu0 %v314
    %v642 = vpop.f32.mrf.mxu0
    %v643 = vadd.f32 0.0, %v642
    %v644 = vpop.f32.mrf.mxu0
    %v645 = vpop.f32.mrf.mxu0
    %v646 = vadd.f32 0.0, %v645
    %v647 = vpop.f32.mrf.mxu0
    %648 = vmatprep.mubr.bf16.mxu0 0
    %649 = vmatmul.mubr.bf16.gmra.mxu0 %v315
    %v650 = vpop.f32.mrf.mxu0
    %v651 = vadd.f32 0.0, %v650
    %v652 = vpop.f32.mrf.mxu0
    %v653 = vpop.f32.mrf.mxu0
    %v654 = vadd.f32 0.0, %v653
    %v655 = vpop.f32.mrf.mxu0
    %656 = vmatprep.mubr.bf16.mxu0 0
    %657 = vmatmul.mubr.bf16.gmra.mxu0 %v316
    %v658 = vpop.f32.mrf.mxu0
    %v659 = vadd.f32 0.0, %v658
    %v660 = vpop.f32.mrf.mxu0
    %v661 = vpop.f32.mrf.mxu0
    %v662 = vadd.f32 0.0, %v661
    %v663 = vpop.f32.mrf.mxu0
    %664 = vmatprep.mubr.bf16.mxu0 0
    %665 = vmatmul.mubr.bf16.gmra.mxu0 %v317
    %v666 = vpop.f32.mrf.mxu0
    %v667 = vadd.f32 0.0, %v666
    %v668 = vpop.f32.mrf.mxu0
    %v669 = vpop.f32.mrf.mxu0
    %v670 = vadd.f32 0.0, %v669
    %v671 = vpop.f32.mrf.mxu0
    %672 = vmatprep.mubr.bf16.mxu0 0
    %673 = vmatmul.mubr.bf16.gmra.mxu0 %v318
    %v674 = vpop.f32.mrf.mxu0
    %v675 = vadd.f32 0.0, %v674
    %v676 = vpop.f32.mrf.mxu0
    %v677 = vpop.f32.mrf.mxu0
    %v678 = vadd.f32 0.0, %v677
    %v679 = vpop.f32.mrf.mxu0
    %680 = vmatprep.mubr.bf16.mxu0 0
    %681 = vmatmul.mubr.bf16.gmra.mxu0 %v319
    %v682 = vpop.f32.mrf.mxu0
    %v683 = vadd.f32 0.0, %v682
    %v684 = vpop.f32.mrf.mxu0
    %v685 = vpop.f32.mrf.mxu0
    %v686 = vadd.f32 0.0, %v685
    %v687 = vpop.f32.mrf.mxu0
    %688 = vdwg.mxu0
    %v689 = vld [vmem:[#allocation5] sm:$0xff]
    %v690 = vld [vmem:[#allocation5 + $0x8] sm:$0xff]
    %v691 = vld [vmem:[#allocation5 + $0x10] sm:$0xff]
    %v692 = vld [vmem:[#allocation5 + $0x18] sm:$0xff]
    %v693 = vld [vmem:[#allocation5 + $0x20] sm:$0xff]
    %v694 = vld [vmem:[#allocation5 + $0x28] sm:$0xff]
    %v695 = vld [vmem:[#allocation5 + $0x30] sm:$0xff]
    %v696 = vld [vmem:[#allocation5 + $0x38] sm:$0xff]
    %v697 = vld [vmem:[#allocation5 + $0x40] sm:$0xff]
    %v698 = vld [vmem:[#allocation5 + $0x48] sm:$0xff]
    %v699 = vld [vmem:[#allocation5 + $0x50] sm:$0xff]
    %v700 = vld [vmem:[#allocation5 + $0x58] sm:$0xff]
    %v701 = vld [vmem:[#allocation5 + $0x60] sm:$0xff]
    %v702 = vld [vmem:[#allocation5 + $0x68] sm:$0xff]
    %v703 = vld [vmem:[#allocation5 + $0x70] sm:$0xff]
    %v704 = vld [vmem:[#allocation5 + $0x78] sm:$0xff]
    %v705 = vld [vmem:[#allocation5 + $0x80] sm:$0xff]
    %v706 = vld [vmem:[#allocation5 + $0x88] sm:$0xff]
    %v707 = vld [vmem:[#allocation5 + $0x90] sm:$0xff]
    %v708 = vld [vmem:[#allocation5 + $0x98] sm:$0xff]
    %v709 = vld [vmem:[#allocation5 + $0xa0] sm:$0xff]
    %v710 = vld [vmem:[#allocation5 + $0xa8] sm:$0xff]
    %v711 = vld [vmem:[#allocation5 + $0xb0] sm:$0xff]
    %v712 = vld [vmem:[#allocation5 + $0xb8] sm:$0xff]
    %v713 = vld [vmem:[#allocation5 + $0xc0] sm:$0xff]
    %v714 = vld [vmem:[#allocation5 + $0xc8] sm:$0xff]
    %v715 = vld [vmem:[#allocation5 + $0xd0] sm:$0xff]
    %v716 = vld [vmem:[#allocation5 + $0xd8] sm:$0xff]
    %v717 = vld [vmem:[#allocation5 + $0xe0] sm:$0xff]
    %v718 = vld [vmem:[#allocation5 + $0xe8] sm:$0xff]
    %v719 = vld [vmem:[#allocation5 + $0xf0] sm:$0xff]
    %v720 = vld [vmem:[#allocation5 + $0xf8] sm:$0xff]
    %v721 = vld [vmem:[#allocation5 + $0x100] sm:$0xff]
    %v722 = vld [vmem:[#allocation5 + $0x108] sm:$0xff]
    %v723 = vld [vmem:[#allocation5 + $0x110] sm:$0xff]
    %v724 = vld [vmem:[#allocation5 + $0x118] sm:$0xff]
    %v725 = vld [vmem:[#allocation5 + $0x120] sm:$0xff]
    %v726 = vld [vmem:[#allocation5 + $0x128] sm:$0xff]
    %v727 = vld [vmem:[#allocation5 + $0x130] sm:$0xff]
    %v728 = vld [vmem:[#allocation5 + $0x138] sm:$0xff]
    %v729 = vld [vmem:[#allocation5 + $0x140] sm:$0xff]
    %v730 = vld [vmem:[#allocation5 + $0x148] sm:$0xff]
    %v731 = vld [vmem:[#allocation5 + $0x150] sm:$0xff]
    %v732 = vld [vmem:[#allocation5 + $0x158] sm:$0xff]
    %v733 = vld [vmem:[#allocation5 + $0x160] sm:$0xff]
    %v734 = vld [vmem:[#allocation5 + $0x168] sm:$0xff]
    %v735 = vld [vmem:[#allocation5 + $0x170] sm:$0xff]
    %v736 = vld [vmem:[#allocation5 + $0x178] sm:$0xff]
    %v737 = vld [vmem:[#allocation5 + $0x180] sm:$0xff]
    %v738 = vld [vmem:[#allocation5 + $0x188] sm:$0xff]
    %v739 = vld [vmem:[#allocation5 + $0x190] sm:$0xff]
    %v740 = vld [vmem:[#allocation5 + $0x198] sm:$0xff]
    %v741 = vld [vmem:[#allocation5 + $0x1a0] sm:$0xff]
    %v742 = vld [vmem:[#allocation5 + $0x1a8] sm:$0xff]
    %v743 = vld [vmem:[#allocation5 + $0x1b0] sm:$0xff]
    %v744 = vld [vmem:[#allocation5 + $0x1b8] sm:$0xff]
    %v745 = vld [vmem:[#allocation5 + $0x1c0] sm:$0xff]
    %v746 = vld [vmem:[#allocation5 + $0x1c8] sm:$0xff]
    %v747 = vld [vmem:[#allocation5 + $0x1d0] sm:$0xff]
    %v748 = vld [vmem:[#allocation5 + $0x1d8] sm:$0xff]
    %v749 = vld [vmem:[#allocation5 + $0x1e0] sm:$0xff]
    %v750 = vld [vmem:[#allocation5 + $0x1e8] sm:$0xff]
    %v751 = vld [vmem:[#allocation5 + $0x1f0] sm:$0xff]
    %v752 = vld [vmem:[#allocation5 + $0x1f8] sm:$0xff]
    %v753 = vld [vmem:[#allocation5 + $0x200] sm:$0xff]
    %v754 = vld [vmem:[#allocation5 + $0x208] sm:$0xff]
    %v755 = vld [vmem:[#allocation5 + $0x210] sm:$0xff]
    %v756 = vld [vmem:[#allocation5 + $0x218] sm:$0xff]
    %v757 = vld [vmem:[#allocation5 + $0x220] sm:$0xff]
    %v758 = vld [vmem:[#allocation5 + $0x228] sm:$0xff]
    %v759 = vld [vmem:[#allocation5 + $0x230] sm:$0xff]
    %v760 = vld [vmem:[#allocation5 + $0x238] sm:$0xff]
    %v761 = vld [vmem:[#allocation5 + $0x240] sm:$0xff]
    %v762 = vld [vmem:[#allocation5 + $0x248] sm:$0xff]
    %v763 = vld [vmem:[#allocation5 + $0x250] sm:$0xff]
    %v764 = vld [vmem:[#allocation5 + $0x258] sm:$0xff]
    %v765 = vld [vmem:[#allocation5 + $0x260] sm:$0xff]
    %v766 = vld [vmem:[#allocation5 + $0x268] sm:$0xff]
    %v767 = vld [vmem:[#allocation5 + $0x270] sm:$0xff]
    %v768 = vld [vmem:[#allocation5 + $0x278] sm:$0xff]
    %v769 = vld [vmem:[#allocation5 + $0x280] sm:$0xff]
    %v770 = vld [vmem:[#allocation5 + $0x288] sm:$0xff]
    %v771 = vld [vmem:[#allocation5 + $0x290] sm:$0xff]
    %v772 = vld [vmem:[#allocation5 + $0x298] sm:$0xff]
    %v773 = vld [vmem:[#allocation5 + $0x2a0] sm:$0xff]
    %v774 = vld [vmem:[#allocation5 + $0x2a8] sm:$0xff]
    %v775 = vld [vmem:[#allocation5 + $0x2b0] sm:$0xff]
    %v776 = vld [vmem:[#allocation5 + $0x2b8] sm:$0xff]
    %v777 = vld [vmem:[#allocation5 + $0x2c0] sm:$0xff]
    %v778 = vld [vmem:[#allocation5 + $0x2c8] sm:$0xff]
    %v779 = vld [vmem:[#allocation5 + $0x2d0] sm:$0xff]
    %v780 = vld [vmem:[#allocation5 + $0x2d8] sm:$0xff]
    %v781 = vld [vmem:[#allocation5 + $0x2e0] sm:$0xff]
    %v782 = vld [vmem:[#allocation5 + $0x2e8] sm:$0xff]
    %v783 = vld [vmem:[#allocation5 + $0x2f0] sm:$0xff]
    %v784 = vld [vmem:[#allocation5 + $0x2f8] sm:$0xff]
    %v785 = vld [vmem:[#allocation5 + $0x300] sm:$0xff]
    %v786 = vld [vmem:[#allocation5 + $0x308] sm:$0xff]
    %v787 = vld [vmem:[#allocation5 + $0x310] sm:$0xff]
    %v788 = vld [vmem:[#allocation5 + $0x318] sm:$0xff]
    %v789 = vld [vmem:[#allocation5 + $0x320] sm:$0xff]
    %v790 = vld [vmem:[#allocation5 + $0x328] sm:$0xff]
    %v791 = vld [vmem:[#allocation5 + $0x330] sm:$0xff]
    %v792 = vld [vmem:[#allocation5 + $0x338] sm:$0xff]
    %v793 = vld [vmem:[#allocation5 + $0x340] sm:$0xff]
    %v794 = vld [vmem:[#allocation5 + $0x348] sm:$0xff]
    %v795 = vld [vmem:[#allocation5 + $0x350] sm:$0xff]
    %v796 = vld [vmem:[#allocation5 + $0x358] sm:$0xff]
    %v797 = vld [vmem:[#allocation5 + $0x360] sm:$0xff]
    %v798 = vld [vmem:[#allocation5 + $0x368] sm:$0xff]
    %v799 = vld [vmem:[#allocation5 + $0x370] sm:$0xff]
    %v800 = vld [vmem:[#allocation5 + $0x378] sm:$0xff]
    %v801 = vld [vmem:[#allocation5 + $0x380] sm:$0xff]
    %v802 = vld [vmem:[#allocation5 + $0x388] sm:$0xff]
    %v803 = vld [vmem:[#allocation5 + $0x390] sm:$0xff]
    %v804 = vld [vmem:[#allocation5 + $0x398] sm:$0xff]
    %v805 = vld [vmem:[#allocation5 + $0x3a0] sm:$0xff]
    %v806 = vld [vmem:[#allocation5 + $0x3a8] sm:$0xff]
    %v807 = vld [vmem:[#allocation5 + $0x3b0] sm:$0xff]
    %v808 = vld [vmem:[#allocation5 + $0x3b8] sm:$0xff]
    %v809 = vld [vmem:[#allocation5 + $0x3c0] sm:$0xff]
    %v810 = vld [vmem:[#allocation5 + $0x3c8] sm:$0xff]
    %v811 = vld [vmem:[#allocation5 + $0x3d0] sm:$0xff]
    %v812 = vld [vmem:[#allocation5 + $0x3d8] sm:$0xff]
    %v813 = vld [vmem:[#allocation5 + $0x3e0] sm:$0xff]
    %v814 = vld [vmem:[#allocation5 + $0x3e8] sm:$0xff]
    %v815 = vld [vmem:[#allocation5 + $0x3f0] sm:$0xff]
    %v816 = vld [vmem:[#allocation5 + $0x3f8] sm:$0xff]
    %v817 = vpack.c.bf16 %v438, %v435
    %v818 = vpack.c.bf16 %v446, %v443
    %v819 = vpack.c.bf16 %v454, %v451
    %v820 = vpack.c.bf16 %v462, %v459
    %v821 = vpack.c.bf16 %v470, %v467
    %v822 = vpack.c.bf16 %v478, %v475
    %v823 = vpack.c.bf16 %v486, %v483
    %v824 = vpack.c.bf16 %v494, %v491
    %v825 = vpack.c.bf16 %v502, %v499
    %v826 = vpack.c.bf16 %v510, %v507
    %v827 = vpack.c.bf16 %v518, %v515
    %v828 = vpack.c.bf16 %v526, %v523
    %v829 = vpack.c.bf16 %v534, %v531
    %v830 = vpack.c.bf16 %v542, %v539
    %v831 = vpack.c.bf16 %v550, %v547
    %v832 = vpack.c.bf16 %v558, %v555
    %v833 = vpack.c.bf16 %v566, %v563
    %v834 = vpack.c.bf16 %v574, %v571
    %v835 = vpack.c.bf16 %v582, %v579
    %v836 = vpack.c.bf16 %v590, %v587
    %v837 = vpack.c.bf16 %v598, %v595
    %v838 = vpack.c.bf16 %v606, %v603
    %v839 = vpack.c.bf16 %v614, %v611
    %v840 = vpack.c.bf16 %v622, %v619
    %v841 = vpack.c.bf16 %v630, %v627
    %v842 = vpack.c.bf16 %v638, %v635
    %v843 = vpack.c.bf16 %v646, %v643
    %v844 = vpack.c.bf16 %v654, %v651
    %v845 = vpack.c.bf16 %v662, %v659
    %v846 = vpack.c.bf16 %v670, %v667
    %v847 = vpack.c.bf16 %v678, %v675
    %v848 = vpack.c.bf16 %v686, %v683
    %v849 = vld [vmem:[%s3] sm:$0x1]
    %v851 = vlaneseq
    %v852 = vshrl.u32 %v851, 7
    %v853 = vsub.s32 0, %v852
    %v854 = vrot.slane %v849, %v853
    %v984 = vunpack.c.l.b16 %v689
    %v985 = vunpack.c.h.b16 %v689
    %v986 = vunpack.c.l.b16 %v690
    %v987 = vunpack.c.h.b16 %v690
    %v988 = vunpack.c.l.b16 %v691
    %v989 = vunpack.c.h.b16 %v691
    %v990 = vunpack.c.l.b16 %v692
    %v991 = vunpack.c.h.b16 %v692
    %v992 = vunpack.c.l.b16 %v693
    %v993 = vunpack.c.h.b16 %v693
    %v994 = vunpack.c.l.b16 %v694
    %v995 = vunpack.c.h.b16 %v694
    %v996 = vunpack.c.l.b16 %v695
    %v997 = vunpack.c.h.b16 %v695
    %v998 = vunpack.c.l.b16 %v696
    %v999 = vunpack.c.h.b16 %v696
    %v1000 = vunpack.c.l.b16 %v697
    %v1001 = vunpack.c.h.b16 %v697
    %v1002 = vunpack.c.l.b16 %v698
    %v1003 = vunpack.c.h.b16 %v698
    %v1004 = vunpack.c.l.b16 %v699
    %v1005 = vunpack.c.h.b16 %v699
    %v1006 = vunpack.c.l.b16 %v700
    %v1007 = vunpack.c.h.b16 %v700
    %v1008 = vunpack.c.l.b16 %v701
    %v1009 = vunpack.c.h.b16 %v701
    %v1010 = vunpack.c.l.b16 %v702
    %v1011 = vunpack.c.h.b16 %v702
    %v1012 = vunpack.c.l.b16 %v703
    %v1013 = vunpack.c.h.b16 %v703
    %v1014 = vunpack.c.l.b16 %v704
    %v1015 = vunpack.c.h.b16 %v704
    %v1016 = vunpack.c.l.b16 %v705
    %v1017 = vunpack.c.h.b16 %v705
    %v1018 = vunpack.c.l.b16 %v706
    %v1019 = vunpack.c.h.b16 %v706
    %v1020 = vunpack.c.l.b16 %v707
    %v1021 = vunpack.c.h.b16 %v707
    %v1022 = vunpack.c.l.b16 %v708
    %v1023 = vunpack.c.h.b16 %v708
    %v1024 = vunpack.c.l.b16 %v709
    %v1025 = vunpack.c.h.b16 %v709
    %v1026 = vunpack.c.l.b16 %v710
    %v1027 = vunpack.c.h.b16 %v710
    %v1028 = vunpack.c.l.b16 %v711
    %v1029 = vunpack.c.h.b16 %v711
    %v1030 = vunpack.c.l.b16 %v712
    %v1031 = vunpack.c.h.b16 %v712
    %v1032 = vunpack.c.l.b16 %v713
    %v1033 = vunpack.c.h.b16 %v713
    %v1034 = vunpack.c.l.b16 %v714
    %v1035 = vunpack.c.h.b16 %v714
    %v1036 = vunpack.c.l.b16 %v715
    %v1037 = vunpack.c.h.b16 %v715
    %v1038 = vunpack.c.l.b16 %v716
    %v1039 = vunpack.c.h.b16 %v716
    %v1040 = vunpack.c.l.b16 %v717
    %v1041 = vunpack.c.h.b16 %v717
    %v1042 = vunpack.c.l.b16 %v718
    %v1043 = vunpack.c.h.b16 %v718
    %v1044 = vunpack.c.l.b16 %v719
    %v1045 = vunpack.c.h.b16 %v719
    %v1046 = vunpack.c.l.b16 %v720
    %v1047 = vunpack.c.h.b16 %v720
    %v1048 = vunpack.c.l.b16 %v721
    %v1049 = vunpack.c.h.b16 %v721
    %v1050 = vunpack.c.l.b16 %v722
    %v1051 = vunpack.c.h.b16 %v722
    %v1052 = vunpack.c.l.b16 %v723
    %v1053 = vunpack.c.h.b16 %v723
    %v1054 = vunpack.c.l.b16 %v724
    %v1055 = vunpack.c.h.b16 %v724
    %v1056 = vunpack.c.l.b16 %v725
    %v1057 = vunpack.c.h.b16 %v725
    %v1058 = vunpack.c.l.b16 %v726
    %v1059 = vunpack.c.h.b16 %v726
    %v1060 = vunpack.c.l.b16 %v727
    %v1061 = vunpack.c.h.b16 %v727
    %v1062 = vunpack.c.l.b16 %v728
    %v1063 = vunpack.c.h.b16 %v728
    %v1064 = vunpack.c.l.b16 %v729
    %v1065 = vunpack.c.h.b16 %v729
    %v1066 = vunpack.c.l.b16 %v730
    %v1067 = vunpack.c.h.b16 %v730
    %v1068 = vunpack.c.l.b16 %v731
    %v1069 = vunpack.c.h.b16 %v731
    %v1070 = vunpack.c.l.b16 %v732
    %v1071 = vunpack.c.h.b16 %v732
    %v1072 = vunpack.c.l.b16 %v733
    %v1073 = vunpack.c.h.b16 %v733
    %v1074 = vunpack.c.l.b16 %v734
    %v1075 = vunpack.c.h.b16 %v734
    %v1076 = vunpack.c.l.b16 %v735
    %v1077 = vunpack.c.h.b16 %v735
    %v1078 = vunpack.c.l.b16 %v736
    %v1079 = vunpack.c.h.b16 %v736
    %v1080 = vunpack.c.l.b16 %v737
    %v1081 = vunpack.c.h.b16 %v737
    %v1082 = vunpack.c.l.b16 %v738
    %v1083 = vunpack.c.h.b16 %v738
    %v1084 = vunpack.c.l.b16 %v739
    %v1085 = vunpack.c.h.b16 %v739
    %v1086 = vunpack.c.l.b16 %v740
    %v1087 = vunpack.c.h.b16 %v740
    %v1088 = vunpack.c.l.b16 %v741
    %v1089 = vunpack.c.h.b16 %v741
    %v1090 = vunpack.c.l.b16 %v742
    %v1091 = vunpack.c.h.b16 %v742
    %v1092 = vunpack.c.l.b16 %v743
    %v1093 = vunpack.c.h.b16 %v743
    %v1094 = vunpack.c.l.b16 %v744
    %v1095 = vunpack.c.h.b16 %v744
    %v1096 = vunpack.c.l.b16 %v745
    %v1097 = vunpack.c.h.b16 %v745
    %v1098 = vunpack.c.l.b16 %v746
    %v1099 = vunpack.c.h.b16 %v746
    %v1100 = vunpack.c.l.b16 %v747
    %v1101 = vunpack.c.h.b16 %v747
    %v1102 = vunpack.c.l.b16 %v748
    %v1103 = vunpack.c.h.b16 %v748
    %v1104 = vunpack.c.l.b16 %v749
    %v1105 = vunpack.c.h.b16 %v749
    %v1106 = vunpack.c.l.b16 %v750
    %v1107 = vunpack.c.h.b16 %v750
    %v1108 = vunpack.c.l.b16 %v751
    %v1109 = vunpack.c.h.b16 %v751
    %v1110 = vunpack.c.l.b16 %v752
    %v1111 = vunpack.c.h.b16 %v752
    %v1112 = vunpack.c.l.b16 %v753
    %v1113 = vunpack.c.h.b16 %v753
    %v1114 = vunpack.c.l.b16 %v754
    %v1115 = vunpack.c.h.b16 %v754
    %v1116 = vunpack.c.l.b16 %v755
    %v1117 = vunpack.c.h.b16 %v755
    %v1118 = vunpack.c.l.b16 %v756
    %v1119 = vunpack.c.h.b16 %v756
    %v1120 = vunpack.c.l.b16 %v757
    %v1121 = vunpack.c.h.b16 %v757
    %v1122 = vunpack.c.l.b16 %v758
    %v1123 = vunpack.c.h.b16 %v758
    %v1124 = vunpack.c.l.b16 %v759
    %v1125 = vunpack.c.h.b16 %v759
    %v1126 = vunpack.c.l.b16 %v760
    %v1127 = vunpack.c.h.b16 %v760
    %v1128 = vunpack.c.l.b16 %v761
    %v1129 = vunpack.c.h.b16 %v761
    %v1130 = vunpack.c.l.b16 %v762
    %v1131 = vunpack.c.h.b16 %v762
    %v1132 = vunpack.c.l.b16 %v763
    %v1133 = vunpack.c.h.b16 %v763
    %v1134 = vunpack.c.l.b16 %v764
    %v1135 = vunpack.c.h.b16 %v764
    %v1136 = vunpack.c.l.b16 %v765
    %v1137 = vunpack.c.h.b16 %v765
    %v1138 = vunpack.c.l.b16 %v766
    %v1139 = vunpack.c.h.b16 %v766
    %v1140 = vunpack.c.l.b16 %v767
    %v1141 = vunpack.c.h.b16 %v767
    %v1142 = vunpack.c.l.b16 %v768
    %v1143 = vunpack.c.h.b16 %v768
    %v1144 = vunpack.c.l.b16 %v769
    %v1145 = vunpack.c.h.b16 %v769
    %v1146 = vunpack.c.l.b16 %v770
    %v1147 = vunpack.c.h.b16 %v770
    %v1148 = vunpack.c.l.b16 %v771
    %v1149 = vunpack.c.h.b16 %v771
    %v1150 = vunpack.c.l.b16 %v772
    %v1151 = vunpack.c.h.b16 %v772
    %v1152 = vunpack.c.l.b16 %v773
    %v1153 = vunpack.c.h.b16 %v773
    %v1154 = vunpack.c.l.b16 %v774
    %v1155 = vunpack.c.h.b16 %v774
    %v1156 = vunpack.c.l.b16 %v775
    %v1157 = vunpack.c.h.b16 %v775
    %v1158 = vunpack.c.l.b16 %v776
    %v1159 = vunpack.c.h.b16 %v776
    %v1160 = vunpack.c.l.b16 %v777
    %v1161 = vunpack.c.h.b16 %v777
    %v1162 = vunpack.c.l.b16 %v778
    %v1163 = vunpack.c.h.b16 %v778
    %v1164 = vunpack.c.l.b16 %v779
    %v1165 = vunpack.c.h.b16 %v779
    %v1166 = vunpack.c.l.b16 %v780
    %v1167 = vunpack.c.h.b16 %v780
    %v1168 = vunpack.c.l.b16 %v781
    %v1169 = vunpack.c.h.b16 %v781
    %v1170 = vunpack.c.l.b16 %v782
    %v1171 = vunpack.c.h.b16 %v782
    %v1172 = vunpack.c.l.b16 %v783
    %v1173 = vunpack.c.h.b16 %v783
    %v1174 = vunpack.c.l.b16 %v784
    %v1175 = vunpack.c.h.b16 %v784
    %v1176 = vunpack.c.l.b16 %v785
    %v1177 = vunpack.c.h.b16 %v785
    %v1178 = vunpack.c.l.b16 %v786
    %v1179 = vunpack.c.h.b16 %v786
    %v1180 = vunpack.c.l.b16 %v787
    %v1181 = vunpack.c.h.b16 %v787
    %v1182 = vunpack.c.l.b16 %v788
    %v1183 = vunpack.c.h.b16 %v788
    %v1184 = vunpack.c.l.b16 %v789
    %v1185 = vunpack.c.h.b16 %v789
    %v1186 = vunpack.c.l.b16 %v790
    %v1187 = vunpack.c.h.b16 %v790
    %v1188 = vunpack.c.l.b16 %v791
    %v1189 = vunpack.c.h.b16 %v791
    %v1190 = vunpack.c.l.b16 %v792
    %v1191 = vunpack.c.h.b16 %v792
    %v1192 = vunpack.c.l.b16 %v793
    %v1193 = vunpack.c.h.b16 %v793
    %v1194 = vunpack.c.l.b16 %v794
    %v1195 = vunpack.c.h.b16 %v794
    %v1196 = vunpack.c.l.b16 %v795
    %v1197 = vunpack.c.h.b16 %v795
    %v1198 = vunpack.c.l.b16 %v796
    %v1199 = vunpack.c.h.b16 %v796
    %v1200 = vunpack.c.l.b16 %v797
    %v1201 = vunpack.c.h.b16 %v797
    %v1202 = vunpack.c.l.b16 %v798
    %v1203 = vunpack.c.h.b16 %v798
    %v1204 = vunpack.c.l.b16 %v799
    %v1205 = vunpack.c.h.b16 %v799
    %v1206 = vunpack.c.l.b16 %v800
    %v1207 = vunpack.c.h.b16 %v800
    %v1208 = vunpack.c.l.b16 %v801
    %v1209 = vunpack.c.h.b16 %v801
    %v1210 = vunpack.c.l.b16 %v802
    %v1211 = vunpack.c.h.b16 %v802
    %v1212 = vunpack.c.l.b16 %v803
    %v1213 = vunpack.c.h.b16 %v803
    %v1214 = vunpack.c.l.b16 %v804
    %v1215 = vunpack.c.h.b16 %v804
    %v1216 = vunpack.c.l.b16 %v805
    %v1217 = vunpack.c.h.b16 %v805
    %v1218 = vunpack.c.l.b16 %v806
    %v1219 = vunpack.c.h.b16 %v806
    %v1220 = vunpack.c.l.b16 %v807
    %v1221 = vunpack.c.h.b16 %v807
    %v1222 = vunpack.c.l.b16 %v808
    %v1223 = vunpack.c.h.b16 %v808
    %v1224 = vunpack.c.l.b16 %v809
    %v1225 = vunpack.c.h.b16 %v809
    %v1226 = vunpack.c.l.b16 %v810
    %v1227 = vunpack.c.h.b16 %v810
    %v1228 = vunpack.c.l.b16 %v811
    %v1229 = vunpack.c.h.b16 %v811
    %v1230 = vunpack.c.l.b16 %v812
    %v1231 = vunpack.c.h.b16 %v812
    %v1232 = vunpack.c.l.b16 %v813
    %v1233 = vunpack.c.h.b16 %v813
    %v1234 = vunpack.c.l.b16 %v814
    %v1235 = vunpack.c.h.b16 %v814
    %v1236 = vunpack.c.l.b16 %v815
    %v1237 = vunpack.c.h.b16 %v815
    %v1238 = vunpack.c.l.b16 %v816
    %v1239 = vunpack.c.h.b16 %v816
    %v1240 = vpack.c.b16 %v988, %v984
    %v1241 = vpack.c.b16 %v989, %v985
    %v1242 = vpack.c.b16 %v990, %v986
    %v1243 = vpack.c.b16 %v991, %v987
    %v1244 = vpack.c.b16 %v996, %v992
    %v1245 = vpack.c.b16 %v997, %v993
    %v1246 = vpack.c.b16 %v998, %v994
    %v1247 = vpack.c.b16 %v999, %v995
    %v1248 = vpack.c.b16 %v1004, %v1000
    %v1249 = vpack.c.b16 %v1005, %v1001
    %v1250 = vpack.c.b16 %v1006, %v1002
    %v1251 = vpack.c.b16 %v1007, %v1003
    %v1252 = vpack.c.b16 %v1012, %v1008
    %v1253 = vpack.c.b16 %v1013, %v1009
    %v1254 = vpack.c.b16 %v1014, %v1010
    %v1255 = vpack.c.b16 %v1015, %v1011
    %v1256 = vpack.c.b16 %v1020, %v1016
    %v1257 = vpack.c.b16 %v1021, %v1017
    %v1258 = vpack.c.b16 %v1022, %v1018
    %v1259 = vpack.c.b16 %v1023, %v1019
    %v1260 = vpack.c.b16 %v1028, %v1024
    %v1261 = vpack.c.b16 %v1029, %v1025
    %v1262 = vpack.c.b16 %v1030, %v1026
    %v1263 = vpack.c.b16 %v1031, %v1027
    %v1264 = vpack.c.b16 %v1036, %v1032
    %v1265 = vpack.c.b16 %v1037, %v1033
    %v1266 = vpack.c.b16 %v1038, %v1034
    %v1267 = vpack.c.b16 %v1039, %v1035
    %v1268 = vpack.c.b16 %v1044, %v1040
    %v1269 = vpack.c.b16 %v1045, %v1041
    %v1270 = vpack.c.b16 %v1046, %v1042
    %v1271 = vpack.c.b16 %v1047, %v1043
    %v1272 = vpack.c.b16 %v1052, %v1048
    %v1273 = vpack.c.b16 %v1053, %v1049
    %v1274 = vpack.c.b16 %v1054, %v1050
    %v1275 = vpack.c.b16 %v1055, %v1051
    %v1276 = vpack.c.b16 %v1060, %v1056
    %v1277 = vpack.c.b16 %v1061, %v1057
    %v1278 = vpack.c.b16 %v1062, %v1058
    %v1279 = vpack.c.b16 %v1063, %v1059
    %v1280 = vpack.c.b16 %v1068, %v1064
    %v1281 = vpack.c.b16 %v1069, %v1065
    %v1282 = vpack.c.b16 %v1070, %v1066
    %v1283 = vpack.c.b16 %v1071, %v1067
    %v1284 = vpack.c.b16 %v1076, %v1072
    %v1285 = vpack.c.b16 %v1077, %v1073
    %v1286 = vpack.c.b16 %v1078, %v1074
    %v1287 = vpack.c.b16 %v1079, %v1075
    %v1288 = vpack.c.b16 %v1084, %v1080
    %v1289 = vpack.c.b16 %v1085, %v1081
    %v1290 = vpack.c.b16 %v1086, %v1082
    %v1291 = vpack.c.b16 %v1087, %v1083
    %v1292 = vpack.c.b16 %v1092, %v1088
    %v1293 = vpack.c.b16 %v1093, %v1089
    %v1294 = vpack.c.b16 %v1094, %v1090
    %v1295 = vpack.c.b16 %v1095, %v1091
    %v1296 = vpack.c.b16 %v1100, %v1096
    %v1297 = vpack.c.b16 %v1101, %v1097
    %v1298 = vpack.c.b16 %v1102, %v1098
    %v1299 = vpack.c.b16 %v1103, %v1099
    %v1300 = vpack.c.b16 %v1108, %v1104
    %v1301 = vpack.c.b16 %v1109, %v1105
    %v1302 = vpack.c.b16 %v1110, %v1106
    %v1303 = vpack.c.b16 %v1111, %v1107
    %v1304 = vpack.c.b16 %v1116, %v1112
    %v1305 = vpack.c.b16 %v1117, %v1113
    %v1306 = vpack.c.b16 %v1118, %v1114
    %v1307 = vpack.c.b16 %v1119, %v1115
    %v1308 = vpack.c.b16 %v1124, %v1120
    %v1309 = vpack.c.b16 %v1125, %v1121
    %v1310 = vpack.c.b16 %v1126, %v1122
    %v1311 = vpack.c.b16 %v1127, %v1123
    %v1312 = vpack.c.b16 %v1132, %v1128
    %v1313 = vpack.c.b16 %v1133, %v1129
    %v1314 = vpack.c.b16 %v1134, %v1130
    %v1315 = vpack.c.b16 %v1135, %v1131
    %v1316 = vpack.c.b16 %v1140, %v1136
    %v1317 = vpack.c.b16 %v1141, %v1137
    %v1318 = vpack.c.b16 %v1142, %v1138
    %v1319 = vpack.c.b16 %v1143, %v1139
    %v1320 = vpack.c.b16 %v1148, %v1144
    %v1321 = vpack.c.b16 %v1149, %v1145
    %v1322 = vpack.c.b16 %v1150, %v1146
    %v1323 = vpack.c.b16 %v1151, %v1147
    %v1324 = vpack.c.b16 %v1156, %v1152
    %v1325 = vpack.c.b16 %v1157, %v1153
    %v1326 = vpack.c.b16 %v1158, %v1154
    %v1327 = vpack.c.b16 %v1159, %v1155
    %v1328 = vpack.c.b16 %v1164, %v1160
    %v1329 = vpack.c.b16 %v1165, %v1161
    %v1330 = vpack.c.b16 %v1166, %v1162
    %v1331 = vpack.c.b16 %v1167, %v1163
    %v1332 = vpack.c.b16 %v1172, %v1168
    %v1333 = vpack.c.b16 %v1173, %v1169
    %v1334 = vpack.c.b16 %v1174, %v1170
    %v1335 = vpack.c.b16 %v1175, %v1171
    %v1336 = vpack.c.b16 %v1180, %v1176
    %v1337 = vpack.c.b16 %v1181, %v1177
    %v1338 = vpack.c.b16 %v1182, %v1178
    %v1339 = vpack.c.b16 %v1183, %v1179
    %v1340 = vpack.c.b16 %v1188, %v1184
    %v1341 = vpack.c.b16 %v1189, %v1185
    %v1342 = vpack.c.b16 %v1190, %v1186
    %v1343 = vpack.c.b16 %v1191, %v1187
    %v1344 = vpack.c.b16 %v1196, %v1192
    %v1345 = vpack.c.b16 %v1197, %v1193
    %v1346 = vpack.c.b16 %v1198, %v1194
    %v1347 = vpack.c.b16 %v1199, %v1195
    %v1348 = vpack.c.b16 %v1204, %v1200
    %v1349 = vpack.c.b16 %v1205, %v1201
    %v1350 = vpack.c.b16 %v1206, %v1202
    %v1351 = vpack.c.b16 %v1207, %v1203
    %v1352 = vpack.c.b16 %v1212, %v1208
    %v1353 = vpack.c.b16 %v1213, %v1209
    %v1354 = vpack.c.b16 %v1214, %v1210
    %v1355 = vpack.c.b16 %v1215, %v1211
    %v1356 = vpack.c.b16 %v1220, %v1216
    %v1357 = vpack.c.b16 %v1221, %v1217
    %v1358 = vpack.c.b16 %v1222, %v1218
    %v1359 = vpack.c.b16 %v1223, %v1219
    %v1360 = vpack.c.b16 %v1228, %v1224
    %v1361 = vpack.c.b16 %v1229, %v1225
    %v1362 = vpack.c.b16 %v1230, %v1226
    %v1363 = vpack.c.b16 %v1231, %v1227
    %v1364 = vpack.c.b16 %v1236, %v1232
    %v1365 = vpack.c.b16 %v1237, %v1233
    %v1366 = vpack.c.b16 %v1238, %v1234
    %v1367 = vpack.c.b16 %v1239, %v1235
    %1496 = vmatprep.subr.bf16.mxu0 0
    %1497 = vmatpush1.bf16.msra.mxu0 %v824
    %1498 = vmatprep.subr.bf16.mxu0 0
    %1499 = vmatpush1.bf16.msra.mxu0 %v823
    %1500 = vmatprep.subr.bf16.mxu0 0
    %1501 = vmatpush1.bf16.msra.mxu0 %v822
    %1502 = vmatprep.subr.bf16.mxu0 0
    %1503 = vmatpush1.bf16.msra.mxu0 %v821
    %1504 = vmatprep.subr.bf16.mxu0 0
    %1505 = vmatpush1.bf16.msra.mxu0 %v820
    %1506 = vmatprep.subr.bf16.mxu0 0
    %1507 = vmatpush1.bf16.msra.mxu0 %v819
    %1508 = vmatprep.subr.bf16.mxu0 0
    %1509 = vmatpush1.bf16.msra.mxu0 %v818
    %1510 = vmatprep.subr.bf16.mxu0 0
    %1511 = vmatpush1.bf16.msra.mxu0 %v817
    %1512 = vmatprep.subr.bf16.mxu0 0
    %1513 = vmatpush2.bf16.msra.mxu0 %v832
    %1514 = vmatprep.subr.bf16.mxu0 0
    %1515 = vmatpush2.bf16.msra.mxu0 %v831
    %1516 = vmatprep.subr.bf16.mxu0 0
    %1517 = vmatpush2.bf16.msra.mxu0 %v830
    %1518 = vmatprep.subr.bf16.mxu0 0
    %1519 = vmatpush2.bf16.msra.mxu0 %v829
    %1520 = vmatprep.subr.bf16.mxu0 0
    %1521 = vmatpush2.bf16.msra.mxu0 %v828
    %1522 = vmatprep.subr.bf16.mxu0 0
    %1523 = vmatpush2.bf16.msra.mxu0 %v827
    %1524 = vmatprep.subr.bf16.mxu0 0
    %1525 = vmatpush2.bf16.msra.mxu0 %v826
    %1526 = vmatprep.subr.bf16.mxu0 0
    %1527 = vmatpush2.bf16.msra.mxu0 %v825
    %1528 = vmatprep.mubr.bf16.mxu0 %v1241
    %1529 = vmatmul.mubr.bf16.gmra.mxu0 %v1240
    %v1530 = vpop.f32.mrf.mxu0
    %v1531 = vadd.f32 %v854, %v1530
    %v1532 = vpop.f32.mrf.mxu0
    %v1533 = vpop.f32.mrf.mxu0
    %v1534 = vadd.f32 %v854, %v1533
    %v1535 = vpop.f32.mrf.mxu0
    %1536 = vmatprep.mubr.bf16.mxu0 %v1245
    %1537 = vmatmul.mubr.bf16.gmra.mxu0 %v1244
    %v1538 = vpop.f32.mrf.mxu0
    %v1539 = vadd.f32 %v854, %v1538
    %v1540 = vpop.f32.mrf.mxu0
    %v1541 = vpop.f32.mrf.mxu0
    %v1542 = vadd.f32 %v854, %v1541
    %v1543 = vpop.f32.mrf.mxu0
    %1544 = vmatprep.mubr.bf16.mxu0 %v1249
    %1545 = vmatmul.mubr.bf16.gmra.mxu0 %v1248
    %v1546 = vpop.f32.mrf.mxu0
    %v1547 = vadd.f32 %v854, %v1546
    %v1548 = vpop.f32.mrf.mxu0
    %v1549 = vpop.f32.mrf.mxu0
    %v1550 = vadd.f32 %v854, %v1549
    %v1551 = vpop.f32.mrf.mxu0
    %1552 = vmatprep.mubr.bf16.mxu0 %v1253
    %1553 = vmatmul.mubr.bf16.gmra.mxu0 %v1252
    %v1554 = vpop.f32.mrf.mxu0
    %v1555 = vadd.f32 %v854, %v1554
    %v1556 = vpop.f32.mrf.mxu0
    %v1557 = vpop.f32.mrf.mxu0
    %v1558 = vadd.f32 %v854, %v1557
    %v1559 = vpop.f32.mrf.mxu0
    %1560 = vmatprep.mubr.bf16.mxu0 %v1257
    %1561 = vmatmul.mubr.bf16.gmra.mxu0 %v1256
    %v1562 = vpop.f32.mrf.mxu0
    %v1563 = vadd.f32 %v854, %v1562
    %v1564 = vpop.f32.mrf.mxu0
    %v1565 = vpop.f32.mrf.mxu0
    %v1566 = vadd.f32 %v854, %v1565
    %v1567 = vpop.f32.mrf.mxu0
    %1568 = vmatprep.mubr.bf16.mxu0 %v1261
    %1569 = vmatmul.mubr.bf16.gmra.mxu0 %v1260
    %v1570 = vpop.f32.mrf.mxu0
    %v1571 = vadd.f32 %v854, %v1570
    %v1572 = vpop.f32.mrf.mxu0
    %v1573 = vpop.f32.mrf.mxu0
    %v1574 = vadd.f32 %v854, %v1573
    %v1575 = vpop.f32.mrf.mxu0
    %1576 = vmatprep.mubr.bf16.mxu0 %v1265
    %1577 = vmatmul.mubr.bf16.gmra.mxu0 %v1264
    %v1578 = vpop.f32.mrf.mxu0
    %v1579 = vadd.f32 %v854, %v1578
    %v1580 = vpop.f32.mrf.mxu0
    %v1581 = vpop.f32.mrf.mxu0
    %v1582 = vadd.f32 %v854, %v1581
    %v1583 = vpop.f32.mrf.mxu0
    %1584 = vmatprep.mubr.bf16.mxu0 %v1269
    %1585 = vmatmul.mubr.bf16.gmra.mxu0 %v1268
    %v1586 = vpop.f32.mrf.mxu0
    %v1587 = vadd.f32 %v854, %v1586
    %v1588 = vpop.f32.mrf.mxu0
    %v1589 = vpop.f32.mrf.mxu0
    %v1590 = vadd.f32 %v854, %v1589
    %v1591 = vpop.f32.mrf.mxu0
    %1592 = vmatprep.mubr.bf16.mxu0 %v1273
    %1593 = vmatmul.mubr.bf16.gmra.mxu0 %v1272
    %v1594 = vpop.f32.mrf.mxu0
    %v1595 = vadd.f32 %v854, %v1594
    %v1596 = vpop.f32.mrf.mxu0
    %v1597 = vpop.f32.mrf.mxu0
    %v1598 = vadd.f32 %v854, %v1597
    %v1599 = vpop.f32.mrf.mxu0
    %1600 = vmatprep.mubr.bf16.mxu0 %v1277
    %1601 = vmatmul.mubr.bf16.gmra.mxu0 %v1276
    %v1602 = vpop.f32.mrf.mxu0
    %v1603 = vadd.f32 %v854, %v1602
    %v1604 = vpop.f32.mrf.mxu0
    %v1605 = vpop.f32.mrf.mxu0
    %v1606 = vadd.f32 %v854, %v1605
    %v1607 = vpop.f32.mrf.mxu0
    %1608 = vmatprep.mubr.bf16.mxu0 %v1281
    %1609 = vmatmul.mubr.bf16.gmra.mxu0 %v1280
    %v1610 = vpop.f32.mrf.mxu0
    %v1611 = vadd.f32 %v854, %v1610
    %v1612 = vpop.f32.mrf.mxu0
    %v1613 = vpop.f32.mrf.mxu0
    %v1614 = vadd.f32 %v854, %v1613
    %v1615 = vpop.f32.mrf.mxu0
    %1616 = vmatprep.mubr.bf16.mxu0 %v1285
    %1617 = vmatmul.mubr.bf16.gmra.mxu0 %v1284
    %v1618 = vpop.f32.mrf.mxu0
    %v1619 = vadd.f32 %v854, %v1618
    %v1620 = vpop.f32.mrf.mxu0
    %v1621 = vpop.f32.mrf.mxu0
    %v1622 = vadd.f32 %v854, %v1621
    %v1623 = vpop.f32.mrf.mxu0
    %1624 = vmatprep.mubr.bf16.mxu0 %v1289
    %1625 = vmatmul.mubr.bf16.gmra.mxu0 %v1288
    %v1626 = vpop.f32.mrf.mxu0
    %v1627 = vadd.f32 %v854, %v1626
    %v1628 = vpop.f32.mrf.mxu0
    %v1629 = vpop.f32.mrf.mxu0
    %v1630 = vadd.f32 %v854, %v1629
    %v1631 = vpop.f32.mrf.mxu0
    %1632 = vmatprep.mubr.bf16.mxu0 %v1293
    %1633 = vmatmul.mubr.bf16.gmra.mxu0 %v1292
    %v1634 = vpop.f32.mrf.mxu0
    %v1635 = vadd.f32 %v854, %v1634
    %v1636 = vpop.f32.mrf.mxu0
    %v1637 = vpop.f32.mrf.mxu0
    %v1638 = vadd.f32 %v854, %v1637
    %v1639 = vpop.f32.mrf.mxu0
    %1640 = vmatprep.mubr.bf16.mxu0 %v1297
    %1641 = vmatmul.mubr.bf16.gmra.mxu0 %v1296
    %v1642 = vpop.f32.mrf.mxu0
    %v1643 = vadd.f32 %v854, %v1642
    %v1644 = vpop.f32.mrf.mxu0
    %v1645 = vpop.f32.mrf.mxu0
    %v1646 = vadd.f32 %v854, %v1645
    %v1647 = vpop.f32.mrf.mxu0
    %1648 = vmatprep.mubr.bf16.mxu0 %v1301
    %1649 = vmatmul.mubr.bf16.gmra.mxu0 %v1300
    %v1650 = vpop.f32.mrf.mxu0
    %v1651 = vadd.f32 %v854, %v1650
    %v1652 = vpop.f32.mrf.mxu0
    %v1653 = vpop.f32.mrf.mxu0
    %v1654 = vadd.f32 %v854, %v1653
    %v1655 = vpop.f32.mrf.mxu0
    %1656 = vmatprep.mubr.bf16.mxu0 %v1305
    %1657 = vmatmul.mubr.bf16.gmra.mxu0 %v1304
    %v1658 = vpop.f32.mrf.mxu0
    %v1659 = vadd.f32 %v854, %v1658
    %v1660 = vpop.f32.mrf.mxu0
    %v1661 = vpop.f32.mrf.mxu0
    %v1662 = vadd.f32 %v854, %v1661
    %v1663 = vpop.f32.mrf.mxu0
    %1664 = vmatprep.mubr.bf16.mxu0 %v1309
    %1665 = vmatmul.mubr.bf16.gmra.mxu0 %v1308
    %v1666 = vpop.f32.mrf.mxu0
    %v1667 = vadd.f32 %v854, %v1666
    %v1668 = vpop.f32.mrf.mxu0
    %v1669 = vpop.f32.mrf.mxu0
    %v1670 = vadd.f32 %v854, %v1669
    %v1671 = vpop.f32.mrf.mxu0
    %1672 = vmatprep.mubr.bf16.mxu0 %v1313
    %1673 = vmatmul.mubr.bf16.gmra.mxu0 %v1312
    %v1674 = vpop.f32.mrf.mxu0
    %v1675 = vadd.f32 %v854, %v1674
    %v1676 = vpop.f32.mrf.mxu0
    %v1677 = vpop.f32.mrf.mxu0
    %v1678 = vadd.f32 %v854, %v1677
    %v1679 = vpop.f32.mrf.mxu0
    %1680 = vmatprep.mubr.bf16.mxu0 %v1317
    %1681 = vmatmul.mubr.bf16.gmra.mxu0 %v1316
    %v1682 = vpop.f32.mrf.mxu0
    %v1683 = vadd.f32 %v854, %v1682
    %v1684 = vpop.f32.mrf.mxu0
    %v1685 = vpop.f32.mrf.mxu0
    %v1686 = vadd.f32 %v854, %v1685
    %v1687 = vpop.f32.mrf.mxu0
    %1688 = vmatprep.mubr.bf16.mxu0 %v1321
    %1689 = vmatmul.mubr.bf16.gmra.mxu0 %v1320
    %v1690 = vpop.f32.mrf.mxu0
    %v1691 = vadd.f32 %v854, %v1690
    %v1692 = vpop.f32.mrf.mxu0
    %v1693 = vpop.f32.mrf.mxu0
    %v1694 = vadd.f32 %v854, %v1693
    %v1695 = vpop.f32.mrf.mxu0
    %1696 = vmatprep.mubr.bf16.mxu0 %v1325
    %1697 = vmatmul.mubr.bf16.gmra.mxu0 %v1324
    %v1698 = vpop.f32.mrf.mxu0
    %v1699 = vadd.f32 %v854, %v1698
    %v1700 = vpop.f32.mrf.mxu0
    %v1701 = vpop.f32.mrf.mxu0
    %v1702 = vadd.f32 %v854, %v1701
    %v1703 = vpop.f32.mrf.mxu0
    %1704 = vmatprep.mubr.bf16.mxu0 %v1329
    %1705 = vmatmul.mubr.bf16.gmra.mxu0 %v1328
    %v1706 = vpop.f32.mrf.mxu0
    %v1707 = vadd.f32 %v854, %v1706
    %v1708 = vpop.f32.mrf.mxu0
    %v1709 = vpop.f32.mrf.mxu0
    %v1710 = vadd.f32 %v854, %v1709
    %v1711 = vpop.f32.mrf.mxu0
    %1712 = vmatprep.mubr.bf16.mxu0 %v1333
    %1713 = vmatmul.mubr.bf16.gmra.mxu0 %v1332
    %v1714 = vpop.f32.mrf.mxu0
    %v1715 = vadd.f32 %v854, %v1714
    %v1716 = vpop.f32.mrf.mxu0
    %v1717 = vpop.f32.mrf.mxu0
    %v1718 = vadd.f32 %v854, %v1717
    %v1719 = vpop.f32.mrf.mxu0
    %1720 = vmatprep.mubr.bf16.mxu0 %v1337
    %1721 = vmatmul.mubr.bf16.gmra.mxu0 %v1336
    %v1722 = vpop.f32.mrf.mxu0
    %v1723 = vadd.f32 %v854, %v1722
    %v1724 = vpop.f32.mrf.mxu0
    %v1725 = vpop.f32.mrf.mxu0
    %v1726 = vadd.f32 %v854, %v1725
    %v1727 = vpop.f32.mrf.mxu0
    %1728 = vmatprep.mubr.bf16.mxu0 %v1341
    %1729 = vmatmul.mubr.bf16.gmra.mxu0 %v1340
    %v1730 = vpop.f32.mrf.mxu0
    %v1731 = vadd.f32 %v854, %v1730
    %v1732 = vpop.f32.mrf.mxu0
    %v1733 = vpop.f32.mrf.mxu0
    %v1734 = vadd.f32 %v854, %v1733
    %v1735 = vpop.f32.mrf.mxu0
    %1736 = vmatprep.mubr.bf16.mxu0 %v1345
    %1737 = vmatmul.mubr.bf16.gmra.mxu0 %v1344
    %v1738 = vpop.f32.mrf.mxu0
    %v1739 = vadd.f32 %v854, %v1738
    %v1740 = vpop.f32.mrf.mxu0
    %v1741 = vpop.f32.mrf.mxu0
    %v1742 = vadd.f32 %v854, %v1741
    %v1743 = vpop.f32.mrf.mxu0
    %1744 = vmatprep.mubr.bf16.mxu0 %v1349
    %1745 = vmatmul.mubr.bf16.gmra.mxu0 %v1348
    %v1746 = vpop.f32.mrf.mxu0
    %v1747 = vadd.f32 %v854, %v1746
    %v1748 = vpop.f32.mrf.mxu0
    %v1749 = vpop.f32.mrf.mxu0
    %v1750 = vadd.f32 %v854, %v1749
    %v1751 = vpop.f32.mrf.mxu0
    %1752 = vmatprep.mubr.bf16.mxu0 %v1353
    %1753 = vmatmul.mubr.bf16.gmra.mxu0 %v1352
    %v1754 = vpop.f32.mrf.mxu0
    %v1755 = vadd.f32 %v854, %v1754
    %v1756 = vpop.f32.mrf.mxu0
    %v1757 = vpop.f32.mrf.mxu0
    %v1758 = vadd.f32 %v854, %v1757
    %v1759 = vpop.f32.mrf.mxu0
    %1760 = vmatprep.mubr.bf16.mxu0 %v1357
    %1761 = vmatmul.mubr.bf16.gmra.mxu0 %v1356
    %v1762 = vpop.f32.mrf.mxu0
    %v1763 = vadd.f32 %v854, %v1762
    %v1764 = vpop.f32.mrf.mxu0
    %v1765 = vpop.f32.mrf.mxu0
    %v1766 = vadd.f32 %v854, %v1765
    %v1767 = vpop.f32.mrf.mxu0
    %1768 = vmatprep.mubr.bf16.mxu0 %v1361
    %1769 = vmatmul.mubr.bf16.gmra.mxu0 %v1360
    %v1770 = vpop.f32.mrf.mxu0
    %v1771 = vadd.f32 %v854, %v1770
    %v1772 = vpop.f32.mrf.mxu0
    %v1773 = vpop.f32.mrf.mxu0
    %v1774 = vadd.f32 %v854, %v1773
    %v1775 = vpop.f32.mrf.mxu0
    %1776 = vmatprep.mubr.bf16.mxu0 %v1365
    %1777 = vmatmul.mubr.bf16.gmra.mxu0 %v1364
    %v1778 = vpop.f32.mrf.mxu0
    %v1779 = vadd.f32 %v854, %v1778
    %v1780 = vpop.f32.mrf.mxu0
    %v1781 = vpop.f32.mrf.mxu0
    %v1782 = vadd.f32 %v854, %v1781
    %v1783 = vpop.f32.mrf.mxu0
    %1784 = vdwg.mxu0
    %1785 = vmatprep.subr.bf16.mxu0 0
    %1786 = vmatpush1.bf16.msra.mxu0 %v840
    %1787 = vmatprep.subr.bf16.mxu0 0
    %1788 = vmatpush1.bf16.msra.mxu0 %v839
    %1789 = vmatprep.subr.bf16.mxu0 0
    %1790 = vmatpush1.bf16.msra.mxu0 %v838
    %1791 = vmatprep.subr.bf16.mxu0 0
    %1792 = vmatpush1.bf16.msra.mxu0 %v837
    %1793 = vmatprep.subr.bf16.mxu0 0
    %1794 = vmatpush1.bf16.msra.mxu0 %v836
    %1795 = vmatprep.subr.bf16.mxu0 0
    %1796 = vmatpush1.bf16.msra.mxu0 %v835
    %1797 = vmatprep.subr.bf16.mxu0 0
    %1798 = vmatpush1.bf16.msra.mxu0 %v834
    %1799 = vmatprep.subr.bf16.mxu0 0
    %1800 = vmatpush1.bf16.msra.mxu0 %v833
    %1801 = vmatprep.subr.bf16.mxu0 0
    %1802 = vmatpush2.bf16.msra.mxu0 %v848
    %1803 = vmatprep.subr.bf16.mxu0 0
    %1804 = vmatpush2.bf16.msra.mxu0 %v847
    %1805 = vmatprep.subr.bf16.mxu0 0
    %1806 = vmatpush2.bf16.msra.mxu0 %v846
    %1807 = vmatprep.subr.bf16.mxu0 0
    %1808 = vmatpush2.bf16.msra.mxu0 %v845
    %1809 = vmatprep.subr.bf16.mxu0 0
    %1810 = vmatpush2.bf16.msra.mxu0 %v844
    %1811 = vmatprep.subr.bf16.mxu0 0
    %1812 = vmatpush2.bf16.msra.mxu0 %v843
    %1813 = vmatprep.subr.bf16.mxu0 0
    %1814 = vmatpush2.bf16.msra.mxu0 %v842
    %1815 = vmatprep.subr.bf16.mxu0 0
    %1816 = vmatpush2.bf16.msra.mxu0 %v841
    %1817 = vmatprep.mubr.bf16.mxu0 %v1243
    %1818 = vmatmul.mubr.bf16.gmra.mxu0 %v1242
    %v1819 = vpop.f32.mrf.mxu0
    %v1820 = vadd.f32 %v1531, %v1819
    %v1821 = vpop.f32.mrf.mxu0
    %v1822 = vpop.f32.mrf.mxu0
    %v1823 = vadd.f32 %v1534, %v1822
    %v1824 = vpop.f32.mrf.mxu0
    %1825 = vmatprep.mubr.bf16.mxu0 %v1247
    %1826 = vmatmul.mubr.bf16.gmra.mxu0 %v1246
    %v1827 = vpop.f32.mrf.mxu0
    %v1828 = vadd.f32 %v1539, %v1827
    %v1829 = vpop.f32.mrf.mxu0
    %v1830 = vpop.f32.mrf.mxu0
    %v1831 = vadd.f32 %v1542, %v1830
    %v1832 = vpop.f32.mrf.mxu0
    %1833 = vmatprep.mubr.bf16.mxu0 %v1251
    %1834 = vmatmul.mubr.bf16.gmra.mxu0 %v1250
    %v1835 = vpop.f32.mrf.mxu0
    %v1836 = vadd.f32 %v1547, %v1835
    %v1837 = vpop.f32.mrf.mxu0
    %v1838 = vpop.f32.mrf.mxu0
    %v1839 = vadd.f32 %v1550, %v1838
    %v1840 = vpop.f32.mrf.mxu0
    %1841 = vmatprep.mubr.bf16.mxu0 %v1255
    %1842 = vmatmul.mubr.bf16.gmra.mxu0 %v1254
    %v1843 = vpop.f32.mrf.mxu0
    %v1844 = vadd.f32 %v1555, %v1843
    %v1845 = vpop.f32.mrf.mxu0
    %v1846 = vpop.f32.mrf.mxu0
    %v1847 = vadd.f32 %v1558, %v1846
    %v1848 = vpop.f32.mrf.mxu0
    %1849 = vmatprep.mubr.bf16.mxu0 %v1259
    %1850 = vmatmul.mubr.bf16.gmra.mxu0 %v1258
    %v1851 = vpop.f32.mrf.mxu0
    %v1852 = vadd.f32 %v1563, %v1851
    %v1853 = vpop.f32.mrf.mxu0
    %v1854 = vpop.f32.mrf.mxu0
    %v1855 = vadd.f32 %v1566, %v1854
    %v1856 = vpop.f32.mrf.mxu0
    %1857 = vmatprep.mubr.bf16.mxu0 %v1263
    %1858 = vmatmul.mubr.bf16.gmra.mxu0 %v1262
    %v1859 = vpop.f32.mrf.mxu0
    %v1860 = vadd.f32 %v1571, %v1859
    %v1861 = vpop.f32.mrf.mxu0
    %v1862 = vpop.f32.mrf.mxu0
    %v1863 = vadd.f32 %v1574, %v1862
    %v1864 = vpop.f32.mrf.mxu0
    %1865 = vmatprep.mubr.bf16.mxu0 %v1267
    %1866 = vmatmul.mubr.bf16.gmra.mxu0 %v1266
    %v1867 = vpop.f32.mrf.mxu0
    %v1868 = vadd.f32 %v1579, %v1867
    %v1869 = vpop.f32.mrf.mxu0
    %v1870 = vpop.f32.mrf.mxu0
    %v1871 = vadd.f32 %v1582, %v1870
    %v1872 = vpop.f32.mrf.mxu0
    %1873 = vmatprep.mubr.bf16.mxu0 %v1271
    %1874 = vmatmul.mubr.bf16.gmra.mxu0 %v1270
    %v1875 = vpop.f32.mrf.mxu0
    %v1876 = vadd.f32 %v1587, %v1875
    %v1877 = vpop.f32.mrf.mxu0
    %v1878 = vpop.f32.mrf.mxu0
    %v1879 = vadd.f32 %v1590, %v1878
    %v1880 = vpop.f32.mrf.mxu0
    %1881 = vmatprep.mubr.bf16.mxu0 %v1275
    %1882 = vmatmul.mubr.bf16.gmra.mxu0 %v1274
    %v1883 = vpop.f32.mrf.mxu0
    %v1884 = vadd.f32 %v1595, %v1883
    %v1885 = vpop.f32.mrf.mxu0
    %v1886 = vpop.f32.mrf.mxu0
    %v1887 = vadd.f32 %v1598, %v1886
    %v1888 = vpop.f32.mrf.mxu0
    %1889 = vmatprep.mubr.bf16.mxu0 %v1279
    %1890 = vmatmul.mubr.bf16.gmra.mxu0 %v1278
    %v1891 = vpop.f32.mrf.mxu0
    %v1892 = vadd.f32 %v1603, %v1891
    %v1893 = vpop.f32.mrf.mxu0
    %v1894 = vpop.f32.mrf.mxu0
    %v1895 = vadd.f32 %v1606, %v1894
    %v1896 = vpop.f32.mrf.mxu0
    %1897 = vmatprep.mubr.bf16.mxu0 %v1283
    %1898 = vmatmul.mubr.bf16.gmra.mxu0 %v1282
    %v1899 = vpop.f32.mrf.mxu0
    %v1900 = vadd.f32 %v1611, %v1899
    %v1901 = vpop.f32.mrf.mxu0
    %v1902 = vpop.f32.mrf.mxu0
    %v1903 = vadd.f32 %v1614, %v1902
    %v1904 = vpop.f32.mrf.mxu0
    %1905 = vmatprep.mubr.bf16.mxu0 %v1287
    %1906 = vmatmul.mubr.bf16.gmra.mxu0 %v1286
    %v1907 = vpop.f32.mrf.mxu0
    %v1908 = vadd.f32 %v1619, %v1907
    %v1909 = vpop.f32.mrf.mxu0
    %v1910 = vpop.f32.mrf.mxu0
    %v1911 = vadd.f32 %v1622, %v1910
    %v1912 = vpop.f32.mrf.mxu0
    %1913 = vmatprep.mubr.bf16.mxu0 %v1291
    %1914 = vmatmul.mubr.bf16.gmra.mxu0 %v1290
    %v1915 = vpop.f32.mrf.mxu0
    %v1916 = vadd.f32 %v1627, %v1915
    %v1917 = vpop.f32.mrf.mxu0
    %v1918 = vpop.f32.mrf.mxu0
    %v1919 = vadd.f32 %v1630, %v1918
    %v1920 = vpop.f32.mrf.mxu0
    %1921 = vmatprep.mubr.bf16.mxu0 %v1295
    %1922 = vmatmul.mubr.bf16.gmra.mxu0 %v1294
    %v1923 = vpop.f32.mrf.mxu0
    %v1924 = vadd.f32 %v1635, %v1923
    %v1925 = vpop.f32.mrf.mxu0
    %v1926 = vpop.f32.mrf.mxu0
    %v1927 = vadd.f32 %v1638, %v1926
    %v1928 = vpop.f32.mrf.mxu0
    %1929 = vmatprep.mubr.bf16.mxu0 %v1299
    %1930 = vmatmul.mubr.bf16.gmra.mxu0 %v1298
    %v1931 = vpop.f32.mrf.mxu0
    %v1932 = vadd.f32 %v1643, %v1931
    %v1933 = vpop.f32.mrf.mxu0
    %v1934 = vpop.f32.mrf.mxu0
    %v1935 = vadd.f32 %v1646, %v1934
    %v1936 = vpop.f32.mrf.mxu0
    %1937 = vmatprep.mubr.bf16.mxu0 %v1303
    %1938 = vmatmul.mubr.bf16.gmra.mxu0 %v1302
    %v1939 = vpop.f32.mrf.mxu0
    %v1940 = vadd.f32 %v1651, %v1939
    %v1941 = vpop.f32.mrf.mxu0
    %v1942 = vpop.f32.mrf.mxu0
    %v1943 = vadd.f32 %v1654, %v1942
    %v1944 = vpop.f32.mrf.mxu0
    %1945 = vmatprep.mubr.bf16.mxu0 %v1307
    %1946 = vmatmul.mubr.bf16.gmra.mxu0 %v1306
    %v1947 = vpop.f32.mrf.mxu0
    %v1948 = vadd.f32 %v1659, %v1947
    %v1949 = vpop.f32.mrf.mxu0
    %v1950 = vpop.f32.mrf.mxu0
    %v1951 = vadd.f32 %v1662, %v1950
    %v1952 = vpop.f32.mrf.mxu0
    %1953 = vmatprep.mubr.bf16.mxu0 %v1311
    %1954 = vmatmul.mubr.bf16.gmra.mxu0 %v1310
    %v1955 = vpop.f32.mrf.mxu0
    %v1956 = vadd.f32 %v1667, %v1955
    %v1957 = vpop.f32.mrf.mxu0
    %v1958 = vpop.f32.mrf.mxu0
    %v1959 = vadd.f32 %v1670, %v1958
    %v1960 = vpop.f32.mrf.mxu0
    %1961 = vmatprep.mubr.bf16.mxu0 %v1315
    %1962 = vmatmul.mubr.bf16.gmra.mxu0 %v1314
    %v1963 = vpop.f32.mrf.mxu0
    %v1964 = vadd.f32 %v1675, %v1963
    %v1965 = vpop.f32.mrf.mxu0
    %v1966 = vpop.f32.mrf.mxu0
    %v1967 = vadd.f32 %v1678, %v1966
    %v1968 = vpop.f32.mrf.mxu0
    %1969 = vmatprep.mubr.bf16.mxu0 %v1319
    %1970 = vmatmul.mubr.bf16.gmra.mxu0 %v1318
    %v1971 = vpop.f32.mrf.mxu0
    %v1972 = vadd.f32 %v1683, %v1971
    %v1973 = vpop.f32.mrf.mxu0
    %v1974 = vpop.f32.mrf.mxu0
    %v1975 = vadd.f32 %v1686, %v1974
    %v1976 = vpop.f32.mrf.mxu0
    %1977 = vmatprep.mubr.bf16.mxu0 %v1323
    %1978 = vmatmul.mubr.bf16.gmra.mxu0 %v1322
    %v1979 = vpop.f32.mrf.mxu0
    %v1980 = vadd.f32 %v1691, %v1979
    %v1981 = vpop.f32.mrf.mxu0
    %v1982 = vpop.f32.mrf.mxu0
    %v1983 = vadd.f32 %v1694, %v1982
    %v1984 = vpop.f32.mrf.mxu0
    %1985 = vmatprep.mubr.bf16.mxu0 %v1327
    %1986 = vmatmul.mubr.bf16.gmra.mxu0 %v1326
    %v1987 = vpop.f32.mrf.mxu0
    %v1988 = vadd.f32 %v1699, %v1987
    %v1989 = vpop.f32.mrf.mxu0
    %v1990 = vpop.f32.mrf.mxu0
    %v1991 = vadd.f32 %v1702, %v1990
    %v1992 = vpop.f32.mrf.mxu0
    %1993 = vmatprep.mubr.bf16.mxu0 %v1331
    %1994 = vmatmul.mubr.bf16.gmra.mxu0 %v1330
    %v1995 = vpop.f32.mrf.mxu0
    %v1996 = vadd.f32 %v1707, %v1995
    %v1997 = vpop.f32.mrf.mxu0
    %v1998 = vpop.f32.mrf.mxu0
    %v1999 = vadd.f32 %v1710, %v1998
    %v2000 = vpop.f32.mrf.mxu0
    %2001 = vmatprep.mubr.bf16.mxu0 %v1335
    %2002 = vmatmul.mubr.bf16.gmra.mxu0 %v1334
    %v2003 = vpop.f32.mrf.mxu0
    %v2004 = vadd.f32 %v1715, %v2003
    %v2005 = vpop.f32.mrf.mxu0
    %v2006 = vpop.f32.mrf.mxu0
    %v2007 = vadd.f32 %v1718, %v2006
    %v2008 = vpop.f32.mrf.mxu0
    %2009 = vmatprep.mubr.bf16.mxu0 %v1339
    %2010 = vmatmul.mubr.bf16.gmra.mxu0 %v1338
    %v2011 = vpop.f32.mrf.mxu0
    %v2012 = vadd.f32 %v1723, %v2011
    %v2013 = vpop.f32.mrf.mxu0
    %v2014 = vpop.f32.mrf.mxu0
    %v2015 = vadd.f32 %v1726, %v2014
    %v2016 = vpop.f32.mrf.mxu0
    %2017 = vmatprep.mubr.bf16.mxu0 %v1343
    %2018 = vmatmul.mubr.bf16.gmra.mxu0 %v1342
    %v2019 = vpop.f32.mrf.mxu0
    %v2020 = vadd.f32 %v1731, %v2019
    %v2021 = vpop.f32.mrf.mxu0
    %v2022 = vpop.f32.mrf.mxu0
    %v2023 = vadd.f32 %v1734, %v2022
    %v2024 = vpop.f32.mrf.mxu0
    %2025 = vmatprep.mubr.bf16.mxu0 %v1347
    %2026 = vmatmul.mubr.bf16.gmra.mxu0 %v1346
    %v2027 = vpop.f32.mrf.mxu0
    %v2028 = vadd.f32 %v1739, %v2027
    %v2029 = vpop.f32.mrf.mxu0
    %v2030 = vpop.f32.mrf.mxu0
    %v2031 = vadd.f32 %v1742, %v2030
    %v2032 = vpop.f32.mrf.mxu0
    %2033 = vmatprep.mubr.bf16.mxu0 %v1351
    %2034 = vmatmul.mubr.bf16.gmra.mxu0 %v1350
    %v2035 = vpop.f32.mrf.mxu0
    %v2036 = vadd.f32 %v1747, %v2035
    %v2037 = vpop.f32.mrf.mxu0
    %v2038 = vpop.f32.mrf.mxu0
    %v2039 = vadd.f32 %v1750, %v2038
    %v2040 = vpop.f32.mrf.mxu0
    %2041 = vmatprep.mubr.bf16.mxu0 %v1355
    %2042 = vmatmul.mubr.bf16.gmra.mxu0 %v1354
    %v2043 = vpop.f32.mrf.mxu0
    %v2044 = vadd.f32 %v1755, %v2043
    %v2045 = vpop.f32.mrf.mxu0
    %v2046 = vpop.f32.mrf.mxu0
    %v2047 = vadd.f32 %v1758, %v2046
    %v2048 = vpop.f32.mrf.mxu0
    %2049 = vmatprep.mubr.bf16.mxu0 %v1359
    %2050 = vmatmul.mubr.bf16.gmra.mxu0 %v1358
    %v2051 = vpop.f32.mrf.mxu0
    %v2052 = vadd.f32 %v1763, %v2051
    %v2053 = vpop.f32.mrf.mxu0
    %v2054 = vpop.f32.mrf.mxu0
    %v2055 = vadd.f32 %v1766, %v2054
    %v2056 = vpop.f32.mrf.mxu0
    %2057 = vmatprep.mubr.bf16.mxu0 %v1363
    %2058 = vmatmul.mubr.bf16.gmra.mxu0 %v1362
    %v2059 = vpop.f32.mrf.mxu0
    %v2060 = vadd.f32 %v1771, %v2059
    %v2061 = vpop.f32.mrf.mxu0
    %v2062 = vpop.f32.mrf.mxu0
    %v2063 = vadd.f32 %v1774, %v2062
    %v2064 = vpop.f32.mrf.mxu0
    %2065 = vmatprep.mubr.bf16.mxu0 %v1367
    %2066 = vmatmul.mubr.bf16.gmra.mxu0 %v1366
    %v2067 = vpop.f32.mrf.mxu0
    %v2068 = vadd.f32 %v1779, %v2067
    %v2069 = vpop.f32.mrf.mxu0
    %v2070 = vpop.f32.mrf.mxu0
    %v2071 = vadd.f32 %v1782, %v2070
    %v2072 = vpop.f32.mrf.mxu0
    %2073 = vdwg.mxu0
    %v2074 = vmax.f32 %v1820, 0.0
    %v2075 = vmax.f32 %v1823, 0.0
    %v2076 = vmax.f32 %v1828, 0.0
    %v2077 = vmax.f32 %v1831, 0.0
    %v2078 = vmax.f32 %v1836, 0.0
    %v2079 = vmax.f32 %v1839, 0.0
    %v2080 = vmax.f32 %v1844, 0.0
    %v2081 = vmax.f32 %v1847, 0.0
    %v2082 = vmax.f32 %v1852, 0.0
    %v2083 = vmax.f32 %v1855, 0.0
    %v2084 = vmax.f32 %v1860, 0.0
    %v2085 = vmax.f32 %v1863, 0.0
    %v2086 = vmax.f32 %v1868, 0.0
    %v2087 = vmax.f32 %v1871, 0.0
    %v2088 = vmax.f32 %v1876, 0.0
    %v2089 = vmax.f32 %v1879, 0.0
    %v2090 = vmax.f32 %v1884, 0.0
    %v2091 = vmax.f32 %v1887, 0.0
    %v2092 = vmax.f32 %v1892, 0.0
    %v2093 = vmax.f32 %v1895, 0.0
    %v2094 = vmax.f32 %v1900, 0.0
    %v2095 = vmax.f32 %v1903, 0.0
    %v2096 = vmax.f32 %v1908, 0.0
    %v2097 = vmax.f32 %v1911, 0.0
    %v2098 = vmax.f32 %v1916, 0.0
    %v2099 = vmax.f32 %v1919, 0.0
    %v2100 = vmax.f32 %v1924, 0.0
    %v2101 = vmax.f32 %v1927, 0.0
    %v2102 = vmax.f32 %v1932, 0.0
    %v2103 = vmax.f32 %v1935, 0.0
    %v2104 = vmax.f32 %v1940, 0.0
    %v2105 = vmax.f32 %v1943, 0.0
    %v2106 = vmax.f32 %v1948, 0.0
    %v2107 = vmax.f32 %v1951, 0.0
    %v2108 = vmax.f32 %v1956, 0.0
    %v2109 = vmax.f32 %v1959, 0.0
    %v2110 = vmax.f32 %v1964, 0.0
    %v2111 = vmax.f32 %v1967, 0.0
    %v2112 = vmax.f32 %v1972, 0.0
    %v2113 = vmax.f32 %v1975, 0.0
    %v2114 = vmax.f32 %v1980, 0.0
    %v2115 = vmax.f32 %v1983, 0.0
    %v2116 = vmax.f32 %v1988, 0.0
    %v2117 = vmax.f32 %v1991, 0.0
    %v2118 = vmax.f32 %v1996, 0.0
    %v2119 = vmax.f32 %v1999, 0.0
    %v2120 = vmax.f32 %v2004, 0.0
    %v2121 = vmax.f32 %v2007, 0.0
    %v2122 = vmax.f32 %v2012, 0.0
    %v2123 = vmax.f32 %v2015, 0.0
    %v2124 = vmax.f32 %v2020, 0.0
    %v2125 = vmax.f32 %v2023, 0.0
    %v2126 = vmax.f32 %v2028, 0.0
    %v2127 = vmax.f32 %v2031, 0.0
    %v2128 = vmax.f32 %v2036, 0.0
    %v2129 = vmax.f32 %v2039, 0.0
    %v2130 = vmax.f32 %v2044, 0.0
    %v2131 = vmax.f32 %v2047, 0.0
    %v2132 = vmax.f32 %v2052, 0.0
    %v2133 = vmax.f32 %v2055, 0.0
    %v2134 = vmax.f32 %v2060, 0.0
    %v2135 = vmax.f32 %v2063, 0.0
    %v2136 = vmax.f32 %v2068, 0.0
    %v2137 = vmax.f32 %v2071, 0.0
    %v2138 = vpack.c.bf16 %v2075, %v2074
    %v2139 = vpack.c.bf16 %v2077, %v2076
    %v2140 = vpack.c.bf16 %v2079, %v2078
    %v2141 = vpack.c.bf16 %v2081, %v2080
    %v2142 = vpack.c.bf16 %v2083, %v2082
    %v2143 = vpack.c.bf16 %v2085, %v2084
    %v2144 = vpack.c.bf16 %v2087, %v2086
    %v2145 = vpack.c.bf16 %v2089, %v2088
    %v2146 = vpack.c.bf16 %v2091, %v2090
    %v2147 = vpack.c.bf16 %v2093, %v2092
    %v2148 = vpack.c.bf16 %v2095, %v2094
    %v2149 = vpack.c.bf16 %v2097, %v2096
    %v2150 = vpack.c.bf16 %v2099, %v2098
    %v2151 = vpack.c.bf16 %v2101, %v2100
    %v2152 = vpack.c.bf16 %v2103, %v2102
    %v2153 = vpack.c.bf16 %v2105, %v2104
    %v2154 = vpack.c.bf16 %v2107, %v2106
    %v2155 = vpack.c.bf16 %v2109, %v2108
    %v2156 = vpack.c.bf16 %v2111, %v2110
    %v2157 = vpack.c.bf16 %v2113, %v2112
    %v2158 = vpack.c.bf16 %v2115, %v2114
    %v2159 = vpack.c.bf16 %v2117, %v2116
    %v2160 = vpack.c.bf16 %v2119, %v2118
    %v2161 = vpack.c.bf16 %v2121, %v2120
    %v2162 = vpack.c.bf16 %v2123, %v2122
    %v2163 = vpack.c.bf16 %v2125, %v2124
    %v2164 = vpack.c.bf16 %v2127, %v2126
    %v2165 = vpack.c.bf16 %v2129, %v2128
    %v2166 = vpack.c.bf16 %v2131, %v2130
    %v2167 = vpack.c.bf16 %v2133, %v2132
    %v2168 = vpack.c.bf16 %v2135, %v2134
    %v2169 = vpack.c.bf16 %v2137, %v2136
    %v2170 = vld [vmem:[#allocation8] sm:$0xf]
    %v2171 = vld [vmem:[#allocation8 + $0x4] sm:$0xf]
    %v2172 = vld [vmem:[#allocation8 + $0x8] sm:$0xf]
    %v2173 = vld [vmem:[#allocation8 + $0xc] sm:$0xf]
    %v2174 = vld [vmem:[#allocation8 + $0x10] sm:$0xf]
    %v2175 = vld [vmem:[#allocation8 + $0x14] sm:$0xf]
    %v2176 = vld [vmem:[#allocation8 + $0x18] sm:$0xf]
    %v2177 = vld [vmem:[#allocation8 + $0x1c] sm:$0xf]
    %v2178 = vld [vmem:[#allocation8 + $0x20] sm:$0xf]
    %v2179 = vld [vmem:[#allocation8 + $0x24] sm:$0xf]
    %v2180 = vld [vmem:[#allocation8 + $0x28] sm:$0xf]
    %v2181 = vld [vmem:[#allocation8 + $0x2c] sm:$0xf]
    %v2182 = vld [vmem:[#allocation8 + $0x30] sm:$0xf]
    %v2183 = vld [vmem:[#allocation8 + $0x34] sm:$0xf]
    %v2184 = vld [vmem:[#allocation8 + $0x38] sm:$0xf]
    %v2185 = vld [vmem:[#allocation8 + $0x3c] sm:$0xf]
    %v2202 = vunpack.c.l.b16 %v2170
    %v2203 = vunpack.c.l.b16 %v2171
    %v2204 = vunpack.c.l.b16 %v2172
    %v2205 = vunpack.c.l.b16 %v2173
    %v2206 = vunpack.c.l.b16 %v2174
    %v2207 = vunpack.c.l.b16 %v2175
    %v2208 = vunpack.c.l.b16 %v2176
    %v2209 = vunpack.c.l.b16 %v2177
    %v2210 = vunpack.c.l.b16 %v2178
    %v2211 = vunpack.c.l.b16 %v2179
    %v2212 = vunpack.c.l.b16 %v2180
    %v2213 = vunpack.c.l.b16 %v2181
    %v2214 = vunpack.c.l.b16 %v2182
    %v2215 = vunpack.c.l.b16 %v2183
    %v2216 = vunpack.c.l.b16 %v2184
    %v2217 = vunpack.c.l.b16 %v2185
    %v2218 = vpack.c.b16 %v2203, %v2202
    %v2219 = vpack.c.b16 %v2205, %v2204
    %v2220 = vpack.c.b16 %v2207, %v2206
    %v2221 = vpack.c.b16 %v2209, %v2208
    %v2222 = vpack.c.b16 %v2211, %v2210
    %v2223 = vpack.c.b16 %v2213, %v2212
    %v2224 = vpack.c.b16 %v2215, %v2214
    %v2225 = vpack.c.b16 %v2217, %v2216
    %2234 = vmatprep.subr.bf16.mxu0 0
    %2235 = vmatpush1.bf16.msra.mxu0 %v2225
    %2236 = vmatprep.subr.bf16.mxu0 0
    %2237 = vmatpush1.bf16.msra.mxu0 %v2224
    %2238 = vmatprep.subr.bf16.mxu0 0
    %2239 = vmatpush1.bf16.msra.mxu0 %v2223
    %2240 = vmatprep.subr.bf16.mxu0 0
    %2241 = vmatpush1.bf16.msra.mxu0 %v2222
    %2242 = vmatprep.subr.bf16.mxu0 0
    %2243 = vmatpush1.bf16.msra.mxu0 %v2221
    %2244 = vmatprep.subr.bf16.mxu0 0
    %2245 = vmatpush1.bf16.msra.mxu0 %v2220
    %2246 = vmatprep.subr.bf16.mxu0 0
    %2247 = vmatpush1.bf16.msra.mxu0 %v2219
    %2248 = vmatprep.subr.bf16.mxu0 0
    %2249 = vmatpush1.bf16.msra.mxu0 %v2218
    %2250 = vmatprep.subr.bf16.mxu0 0
    %2251 = vmatpush2.bf16.msra.mxu0 0
    %2252 = vmatprep.subr.bf16.mxu0 0
    %2253 = vmatpush2.bf16.msra.mxu0 0
    %2254 = vmatprep.subr.bf16.mxu0 0
    %2255 = vmatpush2.bf16.msra.mxu0 0
    %2256 = vmatprep.subr.bf16.mxu0 0
    %2257 = vmatpush2.bf16.msra.mxu0 0
    %2258 = vmatprep.subr.bf16.mxu0 0
    %2259 = vmatpush2.bf16.msra.mxu0 0
    %2260 = vmatprep.subr.bf16.mxu0 0
    %2261 = vmatpush2.bf16.msra.mxu0 0
    %2262 = vmatprep.subr.bf16.mxu0 0
    %2263 = vmatpush2.bf16.msra.mxu0 0
    %2264 = vmatprep.subr.bf16.mxu0 0
    %2265 = vmatpush2.bf16.msra.mxu0 0
    %2266 = vmatprep.mubr.bf16.mxu0 0
    %2267 = vmatmul.mubr.bf16.gmra.mxu0 %v2138
    %v2268 = vpop.f32.mrf.mxu0
    %v2269 = vadd.f32 0.0, %v2268
    %v2270 = vpop.f32.mrf.mxu0
    %v2271 = vpop.f32.mrf.mxu0
    %v2272 = vadd.f32 0.0, %v2271
    %v2273 = vpop.f32.mrf.mxu0
    %2274 = vmatprep.mubr.bf16.mxu0 0
    %2275 = vmatmul.mubr.bf16.gmra.mxu0 %v2139
    %v2276 = vpop.f32.mrf.mxu0
    %v2277 = vadd.f32 0.0, %v2276
    %v2278 = vpop.f32.mrf.mxu0
    %v2279 = vpop.f32.mrf.mxu0
    %v2280 = vadd.f32 0.0, %v2279
    %v2281 = vpop.f32.mrf.mxu0
    %2282 = vmatprep.mubr.bf16.mxu0 0
    %2283 = vmatmul.mubr.bf16.gmra.mxu0 %v2140
    %v2284 = vpop.f32.mrf.mxu0
    %v2285 = vadd.f32 0.0, %v2284
    %v2286 = vpop.f32.mrf.mxu0
    %v2287 = vpop.f32.mrf.mxu0
    %v2288 = vadd.f32 0.0, %v2287
    %v2289 = vpop.f32.mrf.mxu0
    %2290 = vmatprep.mubr.bf16.mxu0 0
    %2291 = vmatmul.mubr.bf16.gmra.mxu0 %v2141
    %v2292 = vpop.f32.mrf.mxu0
    %v2293 = vadd.f32 0.0, %v2292
    %v2294 = vpop.f32.mrf.mxu0
    %v2295 = vpop.f32.mrf.mxu0
    %v2296 = vadd.f32 0.0, %v2295
    %v2297 = vpop.f32.mrf.mxu0
    %2298 = vmatprep.mubr.bf16.mxu0 0
    %2299 = vmatmul.mubr.bf16.gmra.mxu0 %v2142
    %v2300 = vpop.f32.mrf.mxu0
    %v2301 = vadd.f32 0.0, %v2300
    %v2302 = vpop.f32.mrf.mxu0
    %v2303 = vpop.f32.mrf.mxu0
    %v2304 = vadd.f32 0.0, %v2303
    %v2305 = vpop.f32.mrf.mxu0
    %2306 = vmatprep.mubr.bf16.mxu0 0
    %2307 = vmatmul.mubr.bf16.gmra.mxu0 %v2143
    %v2308 = vpop.f32.mrf.mxu0
    %v2309 = vadd.f32 0.0, %v2308
    %v2310 = vpop.f32.mrf.mxu0
    %v2311 = vpop.f32.mrf.mxu0
    %v2312 = vadd.f32 0.0, %v2311
    %v2313 = vpop.f32.mrf.mxu0
    %2314 = vmatprep.mubr.bf16.mxu0 0
    %2315 = vmatmul.mubr.bf16.gmra.mxu0 %v2144
    %v2316 = vpop.f32.mrf.mxu0
    %v2317 = vadd.f32 0.0, %v2316
    %v2318 = vpop.f32.mrf.mxu0
    %v2319 = vpop.f32.mrf.mxu0
    %v2320 = vadd.f32 0.0, %v2319
    %v2321 = vpop.f32.mrf.mxu0
    %2322 = vmatprep.mubr.bf16.mxu0 0
    %2323 = vmatmul.mubr.bf16.gmra.mxu0 %v2145
    %v2324 = vpop.f32.mrf.mxu0
    %v2325 = vadd.f32 0.0, %v2324
    %v2326 = vpop.f32.mrf.mxu0
    %v2327 = vpop.f32.mrf.mxu0
    %v2328 = vadd.f32 0.0, %v2327
    %v2329 = vpop.f32.mrf.mxu0
    %2330 = vmatprep.mubr.bf16.mxu0 0
    %2331 = vmatmul.mubr.bf16.gmra.mxu0 %v2146
    %v2332 = vpop.f32.mrf.mxu0
    %v2333 = vadd.f32 0.0, %v2332
    %v2334 = vpop.f32.mrf.mxu0
    %v2335 = vpop.f32.mrf.mxu0
    %v2336 = vadd.f32 0.0, %v2335
    %v2337 = vpop.f32.mrf.mxu0
    %2338 = vmatprep.mubr.bf16.mxu0 0
    %2339 = vmatmul.mubr.bf16.gmra.mxu0 %v2147
    %v2340 = vpop.f32.mrf.mxu0
    %v2341 = vadd.f32 0.0, %v2340
    %v2342 = vpop.f32.mrf.mxu0
    %v2343 = vpop.f32.mrf.mxu0
    %v2344 = vadd.f32 0.0, %v2343
    %v2345 = vpop.f32.mrf.mxu0
    %2346 = vmatprep.mubr.bf16.mxu0 0
    %2347 = vmatmul.mubr.bf16.gmra.mxu0 %v2148
    %v2348 = vpop.f32.mrf.mxu0
    %v2349 = vadd.f32 0.0, %v2348
    %v2350 = vpop.f32.mrf.mxu0
    %v2351 = vpop.f32.mrf.mxu0
    %v2352 = vadd.f32 0.0, %v2351
    %v2353 = vpop.f32.mrf.mxu0
    %2354 = vmatprep.mubr.bf16.mxu0 0
    %2355 = vmatmul.mubr.bf16.gmra.mxu0 %v2149
    %v2356 = vpop.f32.mrf.mxu0
    %v2357 = vadd.f32 0.0, %v2356
    %v2358 = vpop.f32.mrf.mxu0
    %v2359 = vpop.f32.mrf.mxu0
    %v2360 = vadd.f32 0.0, %v2359
    %v2361 = vpop.f32.mrf.mxu0
    %2362 = vmatprep.mubr.bf16.mxu0 0
    %2363 = vmatmul.mubr.bf16.gmra.mxu0 %v2150
    %v2364 = vpop.f32.mrf.mxu0
    %v2365 = vadd.f32 0.0, %v2364
    %v2366 = vpop.f32.mrf.mxu0
    %v2367 = vpop.f32.mrf.mxu0
    %v2368 = vadd.f32 0.0, %v2367
    %v2369 = vpop.f32.mrf.mxu0
    %2370 = vmatprep.mubr.bf16.mxu0 0
    %2371 = vmatmul.mubr.bf16.gmra.mxu0 %v2151
    %v2372 = vpop.f32.mrf.mxu0
    %v2373 = vadd.f32 0.0, %v2372
    %v2374 = vpop.f32.mrf.mxu0
    %v2375 = vpop.f32.mrf.mxu0
    %v2376 = vadd.f32 0.0, %v2375
    %v2377 = vpop.f32.mrf.mxu0
    %2378 = vmatprep.mubr.bf16.mxu0 0
    %2379 = vmatmul.mubr.bf16.gmra.mxu0 %v2152
    %v2380 = vpop.f32.mrf.mxu0
    %v2381 = vadd.f32 0.0, %v2380
    %v2382 = vpop.f32.mrf.mxu0
    %v2383 = vpop.f32.mrf.mxu0
    %v2384 = vadd.f32 0.0, %v2383
    %v2385 = vpop.f32.mrf.mxu0
    %2386 = vmatprep.mubr.bf16.mxu0 0
    %2387 = vmatmul.mubr.bf16.gmra.mxu0 %v2153
    %v2388 = vpop.f32.mrf.mxu0
    %v2389 = vadd.f32 0.0, %v2388
    %v2390 = vpop.f32.mrf.mxu0
    %v2391 = vpop.f32.mrf.mxu0
    %v2392 = vadd.f32 0.0, %v2391
    %v2393 = vpop.f32.mrf.mxu0
    %2394 = vmatprep.mubr.bf16.mxu0 0
    %2395 = vmatmul.mubr.bf16.gmra.mxu0 %v2154
    %v2396 = vpop.f32.mrf.mxu0
    %v2397 = vadd.f32 0.0, %v2396
    %v2398 = vpop.f32.mrf.mxu0
    %v2399 = vpop.f32.mrf.mxu0
    %v2400 = vadd.f32 0.0, %v2399
    %v2401 = vpop.f32.mrf.mxu0
    %2402 = vmatprep.mubr.bf16.mxu0 0
    %2403 = vmatmul.mubr.bf16.gmra.mxu0 %v2155
    %v2404 = vpop.f32.mrf.mxu0
    %v2405 = vadd.f32 0.0, %v2404
    %v2406 = vpop.f32.mrf.mxu0
    %v2407 = vpop.f32.mrf.mxu0
    %v2408 = vadd.f32 0.0, %v2407
    %v2409 = vpop.f32.mrf.mxu0
    %2410 = vmatprep.mubr.bf16.mxu0 0
    %2411 = vmatmul.mubr.bf16.gmra.mxu0 %v2156
    %v2412 = vpop.f32.mrf.mxu0
    %v2413 = vadd.f32 0.0, %v2412
    %v2414 = vpop.f32.mrf.mxu0
    %v2415 = vpop.f32.mrf.mxu0
    %v2416 = vadd.f32 0.0, %v2415
    %v2417 = vpop.f32.mrf.mxu0
    %2418 = vmatprep.mubr.bf16.mxu0 0
    %2419 = vmatmul.mubr.bf16.gmra.mxu0 %v2157
    %v2420 = vpop.f32.mrf.mxu0
    %v2421 = vadd.f32 0.0, %v2420
    %v2422 = vpop.f32.mrf.mxu0
    %v2423 = vpop.f32.mrf.mxu0
    %v2424 = vadd.f32 0.0, %v2423
    %v2425 = vpop.f32.mrf.mxu0
    %2426 = vmatprep.mubr.bf16.mxu0 0
    %2427 = vmatmul.mubr.bf16.gmra.mxu0 %v2158
    %v2428 = vpop.f32.mrf.mxu0
    %v2429 = vadd.f32 0.0, %v2428
    %v2430 = vpop.f32.mrf.mxu0
    %v2431 = vpop.f32.mrf.mxu0
    %v2432 = vadd.f32 0.0, %v2431
    %v2433 = vpop.f32.mrf.mxu0
    %2434 = vmatprep.mubr.bf16.mxu0 0
    %2435 = vmatmul.mubr.bf16.gmra.mxu0 %v2159
    %v2436 = vpop.f32.mrf.mxu0
    %v2437 = vadd.f32 0.0, %v2436
    %v2438 = vpop.f32.mrf.mxu0
    %v2439 = vpop.f32.mrf.mxu0
    %v2440 = vadd.f32 0.0, %v2439
    %v2441 = vpop.f32.mrf.mxu0
    %2442 = vmatprep.mubr.bf16.mxu0 0
    %2443 = vmatmul.mubr.bf16.gmra.mxu0 %v2160
    %v2444 = vpop.f32.mrf.mxu0
    %v2445 = vadd.f32 0.0, %v2444
    %v2446 = vpop.f32.mrf.mxu0
    %v2447 = vpop.f32.mrf.mxu0
    %v2448 = vadd.f32 0.0, %v2447
    %v2449 = vpop.f32.mrf.mxu0
    %2450 = vmatprep.mubr.bf16.mxu0 0
    %2451 = vmatmul.mubr.bf16.gmra.mxu0 %v2161
    %v2452 = vpop.f32.mrf.mxu0
    %v2453 = vadd.f32 0.0, %v2452
    %v2454 = vpop.f32.mrf.mxu0
    %v2455 = vpop.f32.mrf.mxu0
    %v2456 = vadd.f32 0.0, %v2455
    %v2457 = vpop.f32.mrf.mxu0
    %2458 = vmatprep.mubr.bf16.mxu0 0
    %2459 = vmatmul.mubr.bf16.gmra.mxu0 %v2162
    %v2460 = vpop.f32.mrf.mxu0
    %v2461 = vadd.f32 0.0, %v2460
    %v2462 = vpop.f32.mrf.mxu0
    %v2463 = vpop.f32.mrf.mxu0
    %v2464 = vadd.f32 0.0, %v2463
    %v2465 = vpop.f32.mrf.mxu0
    %2466 = vmatprep.mubr.bf16.mxu0 0
    %2467 = vmatmul.mubr.bf16.gmra.mxu0 %v2163
    %v2468 = vpop.f32.mrf.mxu0
    %v2469 = vadd.f32 0.0, %v2468
    %v2470 = vpop.f32.mrf.mxu0
    %v2471 = vpop.f32.mrf.mxu0
    %v2472 = vadd.f32 0.0, %v2471
    %v2473 = vpop.f32.mrf.mxu0
    %2474 = vmatprep.mubr.bf16.mxu0 0
    %2475 = vmatmul.mubr.bf16.gmra.mxu0 %v2164
    %v2476 = vpop.f32.mrf.mxu0
    %v2477 = vadd.f32 0.0, %v2476
    %v2478 = vpop.f32.mrf.mxu0
    %v2479 = vpop.f32.mrf.mxu0
    %v2480 = vadd.f32 0.0, %v2479
    %v2481 = vpop.f32.mrf.mxu0
    %2482 = vmatprep.mubr.bf16.mxu0 0
    %2483 = vmatmul.mubr.bf16.gmra.mxu0 %v2165
    %v2484 = vpop.f32.mrf.mxu0
    %v2485 = vadd.f32 0.0, %v2484
    %v2486 = vpop.f32.mrf.mxu0
    %v2487 = vpop.f32.mrf.mxu0
    %v2488 = vadd.f32 0.0, %v2487
    %v2489 = vpop.f32.mrf.mxu0
    %2490 = vmatprep.mubr.bf16.mxu0 0
    %2491 = vmatmul.mubr.bf16.gmra.mxu0 %v2166
    %v2492 = vpop.f32.mrf.mxu0
    %v2493 = vadd.f32 0.0, %v2492
    %v2494 = vpop.f32.mrf.mxu0
    %v2495 = vpop.f32.mrf.mxu0
    %v2496 = vadd.f32 0.0, %v2495
    %v2497 = vpop.f32.mrf.mxu0
    %2498 = vmatprep.mubr.bf16.mxu0 0
    %2499 = vmatmul.mubr.bf16.gmra.mxu0 %v2167
    %v2500 = vpop.f32.mrf.mxu0
    %v2501 = vadd.f32 0.0, %v2500
    %v2502 = vpop.f32.mrf.mxu0
    %v2503 = vpop.f32.mrf.mxu0
    %v2504 = vadd.f32 0.0, %v2503
    %v2505 = vpop.f32.mrf.mxu0
    %2506 = vmatprep.mubr.bf16.mxu0 0
    %2507 = vmatmul.mubr.bf16.gmra.mxu0 %v2168
    %v2508 = vpop.f32.mrf.mxu0
    %v2509 = vadd.f32 0.0, %v2508
    %v2510 = vpop.f32.mrf.mxu0
    %v2511 = vpop.f32.mrf.mxu0
    %v2512 = vadd.f32 0.0, %v2511
    %v2513 = vpop.f32.mrf.mxu0
    %2514 = vmatprep.mubr.bf16.mxu0 0
    %2515 = vmatmul.mubr.bf16.gmra.mxu0 %v2169
    %v2516 = vpop.f32.mrf.mxu0
    %v2517 = vadd.f32 0.0, %v2516
    %v2518 = vpop.f32.mrf.mxu0
    %v2519 = vpop.f32.mrf.mxu0
    %v2520 = vadd.f32 0.0, %v2519
    %v2521 = vpop.f32.mrf.mxu0
    %2522 = vdwg.mxu0
    %v2523 = vpack.c.bf16 %v2272, %v2269
    %v2524 = vpack.c.bf16 %v2280, %v2277
    %v2525 = vpack.c.bf16 %v2288, %v2285
    %v2526 = vpack.c.bf16 %v2296, %v2293
    %v2527 = vpack.c.bf16 %v2304, %v2301
    %v2528 = vpack.c.bf16 %v2312, %v2309
    %v2529 = vpack.c.bf16 %v2320, %v2317
    %v2530 = vpack.c.bf16 %v2328, %v2325
    %v2531 = vpack.c.bf16 %v2336, %v2333
    %v2532 = vpack.c.bf16 %v2344, %v2341
    %v2533 = vpack.c.bf16 %v2352, %v2349
    %v2534 = vpack.c.bf16 %v2360, %v2357
    %v2535 = vpack.c.bf16 %v2368, %v2365
    %v2536 = vpack.c.bf16 %v2376, %v2373
    %v2537 = vpack.c.bf16 %v2384, %v2381
    %v2538 = vpack.c.bf16 %v2392, %v2389
    %v2539 = vpack.c.bf16 %v2400, %v2397
    %v2540 = vpack.c.bf16 %v2408, %v2405
    %v2541 = vpack.c.bf16 %v2416, %v2413
    %v2542 = vpack.c.bf16 %v2424, %v2421
    %v2543 = vpack.c.bf16 %v2432, %v2429
    %v2544 = vpack.c.bf16 %v2440, %v2437
    %v2545 = vpack.c.bf16 %v2448, %v2445
    %v2546 = vpack.c.bf16 %v2456, %v2453
    %v2547 = vpack.c.bf16 %v2464, %v2461
    %v2548 = vpack.c.bf16 %v2472, %v2469
    %v2549 = vpack.c.bf16 %v2480, %v2477
    %v2550 = vpack.c.bf16 %v2488, %v2485
    %v2551 = vpack.c.bf16 %v2496, %v2493
    %v2552 = vpack.c.bf16 %v2504, %v2501
    %v2553 = vpack.c.bf16 %v2512, %v2509
    %v2554 = vpack.c.bf16 %v2520, %v2517
    %v2555 = vld [vmem:[%s5] sm:$0x1]
    %v2557 = vlaneseq
    %v2558 = vshrl.u32 %v2557, 7
    %v2559 = vsub.s32 0, %v2558
    %v2560 = vrot.slane %v2555, %v2559
    %2562 = vmatprep.subr.bf16.mxu0 0
    %2563 = vmatpush1.bf16.msra.mxu0 %v2530
    %2564 = vmatprep.subr.bf16.mxu0 0
    %2565 = vmatpush1.bf16.msra.mxu0 %v2529
    %2566 = vmatprep.subr.bf16.mxu0 0
    %2567 = vmatpush1.bf16.msra.mxu0 %v2528
    %2568 = vmatprep.subr.bf16.mxu0 0
    %2569 = vmatpush1.bf16.msra.mxu0 %v2527
    %2570 = vmatprep.subr.bf16.mxu0 0
    %2571 = vmatpush1.bf16.msra.mxu0 %v2526
    %2572 = vmatprep.subr.bf16.mxu0 0
    %2573 = vmatpush1.bf16.msra.mxu0 %v2525
    %2574 = vmatprep.subr.bf16.mxu0 0
    %2575 = vmatpush1.bf16.msra.mxu0 %v2524
    %2576 = vmatprep.subr.bf16.mxu0 0
    %2577 = vmatpush1.bf16.msra.mxu0 %v2523
    %2578 = vmatprep.subr.bf16.mxu0 0
    %2579 = vmatpush2.bf16.msra.mxu0 %v2538
    %2580 = vmatprep.subr.bf16.mxu0 0
    %2581 = vmatpush2.bf16.msra.mxu0 %v2537
    %2582 = vmatprep.subr.bf16.mxu0 0
    %2583 = vmatpush2.bf16.msra.mxu0 %v2536
    %2584 = vmatprep.subr.bf16.mxu0 0
    %2585 = vmatpush2.bf16.msra.mxu0 %v2535
    %2586 = vmatprep.subr.bf16.mxu0 0
    %2587 = vmatpush2.bf16.msra.mxu0 %v2534
    %2588 = vmatprep.subr.bf16.mxu0 0
    %2589 = vmatpush2.bf16.msra.mxu0 %v2533
    %2590 = vmatprep.subr.bf16.mxu0 0
    %2591 = vmatpush2.bf16.msra.mxu0 %v2532
    %2592 = vmatprep.subr.bf16.mxu0 0
    %2593 = vmatpush2.bf16.msra.mxu0 %v2531
    %2594 = vmatprep.mubr.bf16.mxu0 %v1241
    %2595 = vmatmul.mubr.bf16.gmra.mxu0 %v1240
    %v2596 = vpop.f32.mrf.mxu0
    %v2597 = vadd.f32 %v2560, %v2596
    %v2598 = vpop.f32.mrf.mxu0
    %v2599 = vpop.f32.mrf.mxu0
    %v2600 = vadd.f32 %v2560, %v2599
    %v2601 = vpop.f32.mrf.mxu0
    %2602 = vmatprep.mubr.bf16.mxu0 %v1245
    %2603 = vmatmul.mubr.bf16.gmra.mxu0 %v1244
    %v2604 = vpop.f32.mrf.mxu0
    %v2605 = vadd.f32 %v2560, %v2604
    %v2606 = vpop.f32.mrf.mxu0
    %v2607 = vpop.f32.mrf.mxu0
    %v2608 = vadd.f32 %v2560, %v2607
    %v2609 = vpop.f32.mrf.mxu0
    %2610 = vmatprep.mubr.bf16.mxu0 %v1249
    %2611 = vmatmul.mubr.bf16.gmra.mxu0 %v1248
    %v2612 = vpop.f32.mrf.mxu0
    %v2613 = vadd.f32 %v2560, %v2612
    %v2614 = vpop.f32.mrf.mxu0
    %v2615 = vpop.f32.mrf.mxu0
    %v2616 = vadd.f32 %v2560, %v2615
    %v2617 = vpop.f32.mrf.mxu0
    %2618 = vmatprep.mubr.bf16.mxu0 %v1253
    %2619 = vmatmul.mubr.bf16.gmra.mxu0 %v1252
    %v2620 = vpop.f32.mrf.mxu0
    %v2621 = vadd.f32 %v2560, %v2620
    %v2622 = vpop.f32.mrf.mxu0
    %v2623 = vpop.f32.mrf.mxu0
    %v2624 = vadd.f32 %v2560, %v2623
    %v2625 = vpop.f32.mrf.mxu0
    %2626 = vmatprep.mubr.bf16.mxu0 %v1257
    %2627 = vmatmul.mubr.bf16.gmra.mxu0 %v1256
    %v2628 = vpop.f32.mrf.mxu0
    %v2629 = vadd.f32 %v2560, %v2628
    %v2630 = vpop.f32.mrf.mxu0
    %v2631 = vpop.f32.mrf.mxu0
    %v2632 = vadd.f32 %v2560, %v2631
    %v2633 = vpop.f32.mrf.mxu0
    %2634 = vmatprep.mubr.bf16.mxu0 %v1261
    %2635 = vmatmul.mubr.bf16.gmra.mxu0 %v1260
    %v2636 = vpop.f32.mrf.mxu0
    %v2637 = vadd.f32 %v2560, %v2636
    %v2638 = vpop.f32.mrf.mxu0
    %v2639 = vpop.f32.mrf.mxu0
    %v2640 = vadd.f32 %v2560, %v2639
    %v2641 = vpop.f32.mrf.mxu0
    %2642 = vmatprep.mubr.bf16.mxu0 %v1265
    %2643 = vmatmul.mubr.bf16.gmra.mxu0 %v1264
    %v2644 = vpop.f32.mrf.mxu0
    %v2645 = vadd.f32 %v2560, %v2644
    %v2646 = vpop.f32.mrf.mxu0
    %v2647 = vpop.f32.mrf.mxu0
    %v2648 = vadd.f32 %v2560, %v2647
    %v2649 = vpop.f32.mrf.mxu0
    %2650 = vmatprep.mubr.bf16.mxu0 %v1269
    %2651 = vmatmul.mubr.bf16.gmra.mxu0 %v1268
    %v2652 = vpop.f32.mrf.mxu0
    %v2653 = vadd.f32 %v2560, %v2652
    %v2654 = vpop.f32.mrf.mxu0
    %v2655 = vpop.f32.mrf.mxu0
    %v2656 = vadd.f32 %v2560, %v2655
    %v2657 = vpop.f32.mrf.mxu0
    %2658 = vmatprep.mubr.bf16.mxu0 %v1273
    %2659 = vmatmul.mubr.bf16.gmra.mxu0 %v1272
    %v2660 = vpop.f32.mrf.mxu0
    %v2661 = vadd.f32 %v2560, %v2660
    %v2662 = vpop.f32.mrf.mxu0
    %v2663 = vpop.f32.mrf.mxu0
    %v2664 = vadd.f32 %v2560, %v2663
    %v2665 = vpop.f32.mrf.mxu0
    %2666 = vmatprep.mubr.bf16.mxu0 %v1277
    %2667 = vmatmul.mubr.bf16.gmra.mxu0 %v1276
    %v2668 = vpop.f32.mrf.mxu0
    %v2669 = vadd.f32 %v2560, %v2668
    %v2670 = vpop.f32.mrf.mxu0
    %v2671 = vpop.f32.mrf.mxu0
    %v2672 = vadd.f32 %v2560, %v2671
    %v2673 = vpop.f32.mrf.mxu0
    %2674 = vmatprep.mubr.bf16.mxu0 %v1281
    %2675 = vmatmul.mubr.bf16.gmra.mxu0 %v1280
    %v2676 = vpop.f32.mrf.mxu0
    %v2677 = vadd.f32 %v2560, %v2676
    %v2678 = vpop.f32.mrf.mxu0
    %v2679 = vpop.f32.mrf.mxu0
    %v2680 = vadd.f32 %v2560, %v2679
    %v2681 = vpop.f32.mrf.mxu0
    %2682 = vmatprep.mubr.bf16.mxu0 %v1285
    %2683 = vmatmul.mubr.bf16.gmra.mxu0 %v1284
    %v2684 = vpop.f32.mrf.mxu0
    %v2685 = vadd.f32 %v2560, %v2684
    %v2686 = vpop.f32.mrf.mxu0
    %v2687 = vpop.f32.mrf.mxu0
    %v2688 = vadd.f32 %v2560, %v2687
    %v2689 = vpop.f32.mrf.mxu0
    %2690 = vmatprep.mubr.bf16.mxu0 %v1289
    %2691 = vmatmul.mubr.bf16.gmra.mxu0 %v1288
    %v2692 = vpop.f32.mrf.mxu0
    %v2693 = vadd.f32 %v2560, %v2692
    %v2694 = vpop.f32.mrf.mxu0
    %v2695 = vpop.f32.mrf.mxu0
    %v2696 = vadd.f32 %v2560, %v2695
    %v2697 = vpop.f32.mrf.mxu0
    %2698 = vmatprep.mubr.bf16.mxu0 %v1293
    %2699 = vmatmul.mubr.bf16.gmra.mxu0 %v1292
    %v2700 = vpop.f32.mrf.mxu0
    %v2701 = vadd.f32 %v2560, %v2700
    %v2702 = vpop.f32.mrf.mxu0
    %v2703 = vpop.f32.mrf.mxu0
    %v2704 = vadd.f32 %v2560, %v2703
    %v2705 = vpop.f32.mrf.mxu0
    %2706 = vmatprep.mubr.bf16.mxu0 %v1297
    %2707 = vmatmul.mubr.bf16.gmra.mxu0 %v1296
    %v2708 = vpop.f32.mrf.mxu0
    %v2709 = vadd.f32 %v2560, %v2708
    %v2710 = vpop.f32.mrf.mxu0
    %v2711 = vpop.f32.mrf.mxu0
    %v2712 = vadd.f32 %v2560, %v2711
    %v2713 = vpop.f32.mrf.mxu0
    %2714 = vmatprep.mubr.bf16.mxu0 %v1301
    %2715 = vmatmul.mubr.bf16.gmra.mxu0 %v1300
    %v2716 = vpop.f32.mrf.mxu0
    %v2717 = vadd.f32 %v2560, %v2716
    %v2718 = vpop.f32.mrf.mxu0
    %v2719 = vpop.f32.mrf.mxu0
    %v2720 = vadd.f32 %v2560, %v2719
    %v2721 = vpop.f32.mrf.mxu0
    %2722 = vmatprep.mubr.bf16.mxu0 %v1305
    %2723 = vmatmul.mubr.bf16.gmra.mxu0 %v1304
    %v2724 = vpop.f32.mrf.mxu0
    %v2725 = vadd.f32 %v2560, %v2724
    %v2726 = vpop.f32.mrf.mxu0
    %v2727 = vpop.f32.mrf.mxu0
    %v2728 = vadd.f32 %v2560, %v2727
    %v2729 = vpop.f32.mrf.mxu0
    %2730 = vmatprep.mubr.bf16.mxu0 %v1309
    %2731 = vmatmul.mubr.bf16.gmra.mxu0 %v1308
    %v2732 = vpop.f32.mrf.mxu0
    %v2733 = vadd.f32 %v2560, %v2732
    %v2734 = vpop.f32.mrf.mxu0
    %v2735 = vpop.f32.mrf.mxu0
    %v2736 = vadd.f32 %v2560, %v2735
    %v2737 = vpop.f32.mrf.mxu0
    %2738 = vmatprep.mubr.bf16.mxu0 %v1313
    %2739 = vmatmul.mubr.bf16.gmra.mxu0 %v1312
    %v2740 = vpop.f32.mrf.mxu0
    %v2741 = vadd.f32 %v2560, %v2740
    %v2742 = vpop.f32.mrf.mxu0
    %v2743 = vpop.f32.mrf.mxu0
    %v2744 = vadd.f32 %v2560, %v2743
    %v2745 = vpop.f32.mrf.mxu0
    %2746 = vmatprep.mubr.bf16.mxu0 %v1317
    %2747 = vmatmul.mubr.bf16.gmra.mxu0 %v1316
    %v2748 = vpop.f32.mrf.mxu0
    %v2749 = vadd.f32 %v2560, %v2748
    %v2750 = vpop.f32.mrf.mxu0
    %v2751 = vpop.f32.mrf.mxu0
    %v2752 = vadd.f32 %v2560, %v2751
    %v2753 = vpop.f32.mrf.mxu0
    %2754 = vmatprep.mubr.bf16.mxu0 %v1321
    %2755 = vmatmul.mubr.bf16.gmra.mxu0 %v1320
    %v2756 = vpop.f32.mrf.mxu0
    %v2757 = vadd.f32 %v2560, %v2756
    %v2758 = vpop.f32.mrf.mxu0
    %v2759 = vpop.f32.mrf.mxu0
    %v2760 = vadd.f32 %v2560, %v2759
    %v2761 = vpop.f32.mrf.mxu0
    %2762 = vmatprep.mubr.bf16.mxu0 %v1325
    %2763 = vmatmul.mubr.bf16.gmra.mxu0 %v1324
    %v2764 = vpop.f32.mrf.mxu0
    %v2765 = vadd.f32 %v2560, %v2764
    %v2766 = vpop.f32.mrf.mxu0
    %v2767 = vpop.f32.mrf.mxu0
    %v2768 = vadd.f32 %v2560, %v2767
    %v2769 = vpop.f32.mrf.mxu0
    %2770 = vmatprep.mubr.bf16.mxu0 %v1329
    %2771 = vmatmul.mubr.bf16.gmra.mxu0 %v1328
    %v2772 = vpop.f32.mrf.mxu0
    %v2773 = vadd.f32 %v2560, %v2772
    %v2774 = vpop.f32.mrf.mxu0
    %v2775 = vpop.f32.mrf.mxu0
    %v2776 = vadd.f32 %v2560, %v2775
    %v2777 = vpop.f32.mrf.mxu0
    %2778 = vmatprep.mubr.bf16.mxu0 %v1333
    %2779 = vmatmul.mubr.bf16.gmra.mxu0 %v1332
    %v2780 = vpop.f32.mrf.mxu0
    %v2781 = vadd.f32 %v2560, %v2780
    %v2782 = vpop.f32.mrf.mxu0
    %v2783 = vpop.f32.mrf.mxu0
    %v2784 = vadd.f32 %v2560, %v2783
    %v2785 = vpop.f32.mrf.mxu0
    %2786 = vmatprep.mubr.bf16.mxu0 %v1337
    %2787 = vmatmul.mubr.bf16.gmra.mxu0 %v1336
    %v2788 = vpop.f32.mrf.mxu0
    %v2789 = vadd.f32 %v2560, %v2788
    %v2790 = vpop.f32.mrf.mxu0
    %v2791 = vpop.f32.mrf.mxu0
    %v2792 = vadd.f32 %v2560, %v2791
    %v2793 = vpop.f32.mrf.mxu0
    %2794 = vmatprep.mubr.bf16.mxu0 %v1341
    %2795 = vmatmul.mubr.bf16.gmra.mxu0 %v1340
    %v2796 = vpop.f32.mrf.mxu0
    %v2797 = vadd.f32 %v2560, %v2796
    %v2798 = vpop.f32.mrf.mxu0
    %v2799 = vpop.f32.mrf.mxu0
    %v2800 = vadd.f32 %v2560, %v2799
    %v2801 = vpop.f32.mrf.mxu0
    %2802 = vmatprep.mubr.bf16.mxu0 %v1345
    %2803 = vmatmul.mubr.bf16.gmra.mxu0 %v1344
    %v2804 = vpop.f32.mrf.mxu0
    %v2805 = vadd.f32 %v2560, %v2804
    %v2806 = vpop.f32.mrf.mxu0
    %v2807 = vpop.f32.mrf.mxu0
    %v2808 = vadd.f32 %v2560, %v2807
    %v2809 = vpop.f32.mrf.mxu0
    %2810 = vmatprep.mubr.bf16.mxu0 %v1349
    %2811 = vmatmul.mubr.bf16.gmra.mxu0 %v1348
    %v2812 = vpop.f32.mrf.mxu0
    %v2813 = vadd.f32 %v2560, %v2812
    %v2814 = vpop.f32.mrf.mxu0
    %v2815 = vpop.f32.mrf.mxu0
    %v2816 = vadd.f32 %v2560, %v2815
    %v2817 = vpop.f32.mrf.mxu0
    %2818 = vmatprep.mubr.bf16.mxu0 %v1353
    %2819 = vmatmul.mubr.bf16.gmra.mxu0 %v1352
    %v2820 = vpop.f32.mrf.mxu0
    %v2821 = vadd.f32 %v2560, %v2820
    %v2822 = vpop.f32.mrf.mxu0
    %v2823 = vpop.f32.mrf.mxu0
    %v2824 = vadd.f32 %v2560, %v2823
    %v2825 = vpop.f32.mrf.mxu0
    %2826 = vmatprep.mubr.bf16.mxu0 %v1357
    %2827 = vmatmul.mubr.bf16.gmra.mxu0 %v1356
    %v2828 = vpop.f32.mrf.mxu0
    %v2829 = vadd.f32 %v2560, %v2828
    %v2830 = vpop.f32.mrf.mxu0
    %v2831 = vpop.f32.mrf.mxu0
    %v2832 = vadd.f32 %v2560, %v2831
    %v2833 = vpop.f32.mrf.mxu0
    %2834 = vmatprep.mubr.bf16.mxu0 %v1361
    %2835 = vmatmul.mubr.bf16.gmra.mxu0 %v1360
    %v2836 = vpop.f32.mrf.mxu0
    %v2837 = vadd.f32 %v2560, %v2836
    %v2838 = vpop.f32.mrf.mxu0
    %v2839 = vpop.f32.mrf.mxu0
    %v2840 = vadd.f32 %v2560, %v2839
    %v2841 = vpop.f32.mrf.mxu0
    %2842 = vmatprep.mubr.bf16.mxu0 %v1365
    %2843 = vmatmul.mubr.bf16.gmra.mxu0 %v1364
    %v2844 = vpop.f32.mrf.mxu0
    %v2845 = vadd.f32 %v2560, %v2844
    %v2846 = vpop.f32.mrf.mxu0
    %v2847 = vpop.f32.mrf.mxu0
    %v2848 = vadd.f32 %v2560, %v2847
    %v2849 = vpop.f32.mrf.mxu0
    %2850 = vdwg.mxu0
    %2851 = vmatprep.subr.bf16.mxu0 0
    %2852 = vmatpush1.bf16.msra.mxu0 %v2546
    %2853 = vmatprep.subr.bf16.mxu0 0
    %2854 = vmatpush1.bf16.msra.mxu0 %v2545
    %2855 = vmatprep.subr.bf16.mxu0 0
    %2856 = vmatpush1.bf16.msra.mxu0 %v2544
    %2857 = vmatprep.subr.bf16.mxu0 0
    %2858 = vmatpush1.bf16.msra.mxu0 %v2543
    %2859 = vmatprep.subr.bf16.mxu0 0
    %2860 = vmatpush1.bf16.msra.mxu0 %v2542
    %2861 = vmatprep.subr.bf16.mxu0 0
    %2862 = vmatpush1.bf16.msra.mxu0 %v2541
    %2863 = vmatprep.subr.bf16.mxu0 0
    %2864 = vmatpush1.bf16.msra.mxu0 %v2540
    %2865 = vmatprep.subr.bf16.mxu0 0
    %2866 = vmatpush1.bf16.msra.mxu0 %v2539
    %2867 = vmatprep.subr.bf16.mxu0 0
    %2868 = vmatpush2.bf16.msra.mxu0 %v2554
    %2869 = vmatprep.subr.bf16.mxu0 0
    %2870 = vmatpush2.bf16.msra.mxu0 %v2553
    %2871 = vmatprep.subr.bf16.mxu0 0
    %2872 = vmatpush2.bf16.msra.mxu0 %v2552
    %2873 = vmatprep.subr.bf16.mxu0 0
    %2874 = vmatpush2.bf16.msra.mxu0 %v2551
    %2875 = vmatprep.subr.bf16.mxu0 0
    %2876 = vmatpush2.bf16.msra.mxu0 %v2550
    %2877 = vmatprep.subr.bf16.mxu0 0
    %2878 = vmatpush2.bf16.msra.mxu0 %v2549
    %2879 = vmatprep.subr.bf16.mxu0 0
    %2880 = vmatpush2.bf16.msra.mxu0 %v2548
    %2881 = vmatprep.subr.bf16.mxu0 0
    %2882 = vmatpush2.bf16.msra.mxu0 %v2547
    %2883 = vmatprep.mubr.bf16.mxu0 %v1243
    %2884 = vmatmul.mubr.bf16.gmra.mxu0 %v1242
    %v2885 = vpop.f32.mrf.mxu0
    %v2886 = vadd.f32 %v2597, %v2885
    %v2887 = vpop.f32.mrf.mxu0
    %v2888 = vpop.f32.mrf.mxu0
    %v2889 = vadd.f32 %v2600, %v2888
    %v2890 = vpop.f32.mrf.mxu0
    %2891 = vmatprep.mubr.bf16.mxu0 %v1247
    %2892 = vmatmul.mubr.bf16.gmra.mxu0 %v1246
    %v2893 = vpop.f32.mrf.mxu0
    %v2894 = vadd.f32 %v2605, %v2893
    %v2895 = vpop.f32.mrf.mxu0
    %v2896 = vpop.f32.mrf.mxu0
    %v2897 = vadd.f32 %v2608, %v2896
    %v2898 = vpop.f32.mrf.mxu0
    %2899 = vmatprep.mubr.bf16.mxu0 %v1251
    %2900 = vmatmul.mubr.bf16.gmra.mxu0 %v1250
    %v2901 = vpop.f32.mrf.mxu0
    %v2902 = vadd.f32 %v2613, %v2901
    %v2903 = vpop.f32.mrf.mxu0
    %v2904 = vpop.f32.mrf.mxu0
    %v2905 = vadd.f32 %v2616, %v2904
    %v2906 = vpop.f32.mrf.mxu0
    %2907 = vmatprep.mubr.bf16.mxu0 %v1255
    %2908 = vmatmul.mubr.bf16.gmra.mxu0 %v1254
    %v2909 = vpop.f32.mrf.mxu0
    %v2910 = vadd.f32 %v2621, %v2909
    %v2911 = vpop.f32.mrf.mxu0
    %v2912 = vpop.f32.mrf.mxu0
    %v2913 = vadd.f32 %v2624, %v2912
    %v2914 = vpop.f32.mrf.mxu0
    %2915 = vmatprep.mubr.bf16.mxu0 %v1259
    %2916 = vmatmul.mubr.bf16.gmra.mxu0 %v1258
    %v2917 = vpop.f32.mrf.mxu0
    %v2918 = vadd.f32 %v2629, %v2917
    %v2919 = vpop.f32.mrf.mxu0
    %v2920 = vpop.f32.mrf.mxu0
    %v2921 = vadd.f32 %v2632, %v2920
    %v2922 = vpop.f32.mrf.mxu0
    %2923 = vmatprep.mubr.bf16.mxu0 %v1263
    %2924 = vmatmul.mubr.bf16.gmra.mxu0 %v1262
    %v2925 = vpop.f32.mrf.mxu0
    %v2926 = vadd.f32 %v2637, %v2925
    %v2927 = vpop.f32.mrf.mxu0
    %v2928 = vpop.f32.mrf.mxu0
    %v2929 = vadd.f32 %v2640, %v2928
    %v2930 = vpop.f32.mrf.mxu0
    %2931 = vmatprep.mubr.bf16.mxu0 %v1267
    %2932 = vmatmul.mubr.bf16.gmra.mxu0 %v1266
    %v2933 = vpop.f32.mrf.mxu0
    %v2934 = vadd.f32 %v2645, %v2933
    %v2935 = vpop.f32.mrf.mxu0
    %v2936 = vpop.f32.mrf.mxu0
    %v2937 = vadd.f32 %v2648, %v2936
    %v2938 = vpop.f32.mrf.mxu0
    %2939 = vmatprep.mubr.bf16.mxu0 %v1271
    %2940 = vmatmul.mubr.bf16.gmra.mxu0 %v1270
    %v2941 = vpop.f32.mrf.mxu0
    %v2942 = vadd.f32 %v2653, %v2941
    %v2943 = vpop.f32.mrf.mxu0
    %v2944 = vpop.f32.mrf.mxu0
    %v2945 = vadd.f32 %v2656, %v2944
    %v2946 = vpop.f32.mrf.mxu0
    %2947 = vmatprep.mubr.bf16.mxu0 %v1275
    %2948 = vmatmul.mubr.bf16.gmra.mxu0 %v1274
    %v2949 = vpop.f32.mrf.mxu0
    %v2950 = vadd.f32 %v2661, %v2949
    %v2951 = vpop.f32.mrf.mxu0
    %v2952 = vpop.f32.mrf.mxu0
    %v2953 = vadd.f32 %v2664, %v2952
    %v2954 = vpop.f32.mrf.mxu0
    %2955 = vmatprep.mubr.bf16.mxu0 %v1279
    %2956 = vmatmul.mubr.bf16.gmra.mxu0 %v1278
    %v2957 = vpop.f32.mrf.mxu0
    %v2958 = vadd.f32 %v2669, %v2957
    %v2959 = vpop.f32.mrf.mxu0
    %v2960 = vpop.f32.mrf.mxu0
    %v2961 = vadd.f32 %v2672, %v2960
    %v2962 = vpop.f32.mrf.mxu0
    %2963 = vmatprep.mubr.bf16.mxu0 %v1283
    %2964 = vmatmul.mubr.bf16.gmra.mxu0 %v1282
    %v2965 = vpop.f32.mrf.mxu0
    %v2966 = vadd.f32 %v2677, %v2965
    %v2967 = vpop.f32.mrf.mxu0
    %v2968 = vpop.f32.mrf.mxu0
    %v2969 = vadd.f32 %v2680, %v2968
    %v2970 = vpop.f32.mrf.mxu0
    %2971 = vmatprep.mubr.bf16.mxu0 %v1287
    %2972 = vmatmul.mubr.bf16.gmra.mxu0 %v1286
    %v2973 = vpop.f32.mrf.mxu0
    %v2974 = vadd.f32 %v2685, %v2973
    %v2975 = vpop.f32.mrf.mxu0
    %v2976 = vpop.f32.mrf.mxu0
    %v2977 = vadd.f32 %v2688, %v2976
    %v2978 = vpop.f32.mrf.mxu0
    %2979 = vmatprep.mubr.bf16.mxu0 %v1291
    %2980 = vmatmul.mubr.bf16.gmra.mxu0 %v1290
    %v2981 = vpop.f32.mrf.mxu0
    %v2982 = vadd.f32 %v2693, %v2981
    %v2983 = vpop.f32.mrf.mxu0
    %v2984 = vpop.f32.mrf.mxu0
    %v2985 = vadd.f32 %v2696, %v2984
    %v2986 = vpop.f32.mrf.mxu0
    %2987 = vmatprep.mubr.bf16.mxu0 %v1295
    %2988 = vmatmul.mubr.bf16.gmra.mxu0 %v1294
    %v2989 = vpop.f32.mrf.mxu0
    %v2990 = vadd.f32 %v2701, %v2989
    %v2991 = vpop.f32.mrf.mxu0
    %v2992 = vpop.f32.mrf.mxu0
    %v2993 = vadd.f32 %v2704, %v2992
    %v2994 = vpop.f32.mrf.mxu0
    %2995 = vmatprep.mubr.bf16.mxu0 %v1299
    %2996 = vmatmul.mubr.bf16.gmra.mxu0 %v1298
    %v2997 = vpop.f32.mrf.mxu0
    %v2998 = vadd.f32 %v2709, %v2997
    %v2999 = vpop.f32.mrf.mxu0
    %v3000 = vpop.f32.mrf.mxu0
    %v3001 = vadd.f32 %v2712, %v3000
    %v3002 = vpop.f32.mrf.mxu0
    %3003 = vmatprep.mubr.bf16.mxu0 %v1303
    %3004 = vmatmul.mubr.bf16.gmra.mxu0 %v1302
    %v3005 = vpop.f32.mrf.mxu0
    %v3006 = vadd.f32 %v2717, %v3005
    %v3007 = vpop.f32.mrf.mxu0
    %v3008 = vpop.f32.mrf.mxu0
    %v3009 = vadd.f32 %v2720, %v3008
    %v3010 = vpop.f32.mrf.mxu0
    %3011 = vmatprep.mubr.bf16.mxu0 %v1307
    %3012 = vmatmul.mubr.bf16.gmra.mxu0 %v1306
    %v3013 = vpop.f32.mrf.mxu0
    %v3014 = vadd.f32 %v2725, %v3013
    %v3015 = vpop.f32.mrf.mxu0
    %v3016 = vpop.f32.mrf.mxu0
    %v3017 = vadd.f32 %v2728, %v3016
    %v3018 = vpop.f32.mrf.mxu0
    %3019 = vmatprep.mubr.bf16.mxu0 %v1311
    %3020 = vmatmul.mubr.bf16.gmra.mxu0 %v1310
    %v3021 = vpop.f32.mrf.mxu0
    %v3022 = vadd.f32 %v2733, %v3021
    %v3023 = vpop.f32.mrf.mxu0
    %v3024 = vpop.f32.mrf.mxu0
    %v3025 = vadd.f32 %v2736, %v3024
    %v3026 = vpop.f32.mrf.mxu0
    %3027 = vmatprep.mubr.bf16.mxu0 %v1315
    %3028 = vmatmul.mubr.bf16.gmra.mxu0 %v1314
    %v3029 = vpop.f32.mrf.mxu0
    %v3030 = vadd.f32 %v2741, %v3029
    %v3031 = vpop.f32.mrf.mxu0
    %v3032 = vpop.f32.mrf.mxu0
    %v3033 = vadd.f32 %v2744, %v3032
    %v3034 = vpop.f32.mrf.mxu0
    %3035 = vmatprep.mubr.bf16.mxu0 %v1319
    %3036 = vmatmul.mubr.bf16.gmra.mxu0 %v1318
    %v3037 = vpop.f32.mrf.mxu0
    %v3038 = vadd.f32 %v2749, %v3037
    %v3039 = vpop.f32.mrf.mxu0
    %v3040 = vpop.f32.mrf.mxu0
    %v3041 = vadd.f32 %v2752, %v3040
    %v3042 = vpop.f32.mrf.mxu0
    %3043 = vmatprep.mubr.bf16.mxu0 %v1323
    %3044 = vmatmul.mubr.bf16.gmra.mxu0 %v1322
    %v3045 = vpop.f32.mrf.mxu0
    %v3046 = vadd.f32 %v2757, %v3045
    %v3047 = vpop.f32.mrf.mxu0
    %v3048 = vpop.f32.mrf.mxu0
    %v3049 = vadd.f32 %v2760, %v3048
    %v3050 = vpop.f32.mrf.mxu0
    %3051 = vmatprep.mubr.bf16.mxu0 %v1327
    %3052 = vmatmul.mubr.bf16.gmra.mxu0 %v1326
    %v3053 = vpop.f32.mrf.mxu0
    %v3054 = vadd.f32 %v2765, %v3053
    %v3055 = vpop.f32.mrf.mxu0
    %v3056 = vpop.f32.mrf.mxu0
    %v3057 = vadd.f32 %v2768, %v3056
    %v3058 = vpop.f32.mrf.mxu0
    %3059 = vmatprep.mubr.bf16.mxu0 %v1331
    %3060 = vmatmul.mubr.bf16.gmra.mxu0 %v1330
    %v3061 = vpop.f32.mrf.mxu0
    %v3062 = vadd.f32 %v2773, %v3061
    %v3063 = vpop.f32.mrf.mxu0
    %v3064 = vpop.f32.mrf.mxu0
    %v3065 = vadd.f32 %v2776, %v3064
    %v3066 = vpop.f32.mrf.mxu0
    %3067 = vmatprep.mubr.bf16.mxu0 %v1335
    %3068 = vmatmul.mubr.bf16.gmra.mxu0 %v1334
    %v3069 = vpop.f32.mrf.mxu0
    %v3070 = vadd.f32 %v2781, %v3069
    %v3071 = vpop.f32.mrf.mxu0
    %v3072 = vpop.f32.mrf.mxu0
    %v3073 = vadd.f32 %v2784, %v3072
    %v3074 = vpop.f32.mrf.mxu0
    %3075 = vmatprep.mubr.bf16.mxu0 %v1339
    %3076 = vmatmul.mubr.bf16.gmra.mxu0 %v1338
    %v3077 = vpop.f32.mrf.mxu0
    %v3078 = vadd.f32 %v2789, %v3077
    %v3079 = vpop.f32.mrf.mxu0
    %v3080 = vpop.f32.mrf.mxu0
    %v3081 = vadd.f32 %v2792, %v3080
    %v3082 = vpop.f32.mrf.mxu0
    %3083 = vmatprep.mubr.bf16.mxu0 %v1343
    %3084 = vmatmul.mubr.bf16.gmra.mxu0 %v1342
    %v3085 = vpop.f32.mrf.mxu0
    %v3086 = vadd.f32 %v2797, %v3085
    %v3087 = vpop.f32.mrf.mxu0
    %v3088 = vpop.f32.mrf.mxu0
    %v3089 = vadd.f32 %v2800, %v3088
    %v3090 = vpop.f32.mrf.mxu0
    %3091 = vmatprep.mubr.bf16.mxu0 %v1347
    %3092 = vmatmul.mubr.bf16.gmra.mxu0 %v1346
    %v3093 = vpop.f32.mrf.mxu0
    %v3094 = vadd.f32 %v2805, %v3093
    %v3095 = vpop.f32.mrf.mxu0
    %v3096 = vpop.f32.mrf.mxu0
    %v3097 = vadd.f32 %v2808, %v3096
    %v3098 = vpop.f32.mrf.mxu0
    %3099 = vmatprep.mubr.bf16.mxu0 %v1351
    %3100 = vmatmul.mubr.bf16.gmra.mxu0 %v1350
    %v3101 = vpop.f32.mrf.mxu0
    %v3102 = vadd.f32 %v2813, %v3101
    %v3103 = vpop.f32.mrf.mxu0
    %v3104 = vpop.f32.mrf.mxu0
    %v3105 = vadd.f32 %v2816, %v3104
    %v3106 = vpop.f32.mrf.mxu0
    %3107 = vmatprep.mubr.bf16.mxu0 %v1355
    %3108 = vmatmul.mubr.bf16.gmra.mxu0 %v1354
    %v3109 = vpop.f32.mrf.mxu0
    %v3110 = vadd.f32 %v2821, %v3109
    %v3111 = vpop.f32.mrf.mxu0
    %v3112 = vpop.f32.mrf.mxu0
    %v3113 = vadd.f32 %v2824, %v3112
    %v3114 = vpop.f32.mrf.mxu0
    %3115 = vmatprep.mubr.bf16.mxu0 %v1359
    %3116 = vmatmul.mubr.bf16.gmra.mxu0 %v1358
    %v3117 = vpop.f32.mrf.mxu0
    %v3118 = vadd.f32 %v2829, %v3117
    %v3119 = vpop.f32.mrf.mxu0
    %v3120 = vpop.f32.mrf.mxu0
    %v3121 = vadd.f32 %v2832, %v3120
    %v3122 = vpop.f32.mrf.mxu0
    %3123 = vmatprep.mubr.bf16.mxu0 %v1363
    %3124 = vmatmul.mubr.bf16.gmra.mxu0 %v1362
    %v3125 = vpop.f32.mrf.mxu0
    %v3126 = vadd.f32 %v2837, %v3125
    %v3127 = vpop.f32.mrf.mxu0
    %v3128 = vpop.f32.mrf.mxu0
    %v3129 = vadd.f32 %v2840, %v3128
    %v3130 = vpop.f32.mrf.mxu0
    %3131 = vmatprep.mubr.bf16.mxu0 %v1367
    %3132 = vmatmul.mubr.bf16.gmra.mxu0 %v1366
    %v3133 = vpop.f32.mrf.mxu0
    %v3134 = vadd.f32 %v2845, %v3133
    %v3135 = vpop.f32.mrf.mxu0
    %v3136 = vpop.f32.mrf.mxu0
    %v3137 = vadd.f32 %v2848, %v3136
    %v3138 = vpop.f32.mrf.mxu0
    %3139 = vdwg.mxu0
    %v3140 = vlaneseq
    %v3141 = vand.u32 %v3140, 127
    %vm3142 = vcmp.lt.s32.totalorder %v3141, 8
    %v3143 = vsel %vm3142, %v2886, -1e+30
    %v3144 = vsel %vm3142, %v2889, -1e+30
    %v3145 = vsel %vm3142, %v2894, -1e+30
    %v3146 = vsel %vm3142, %v2897, -1e+30
    %v3147 = vsel %vm3142, %v2902, -1e+30
    %v3148 = vsel %vm3142, %v2905, -1e+30
    %v3149 = vsel %vm3142, %v2910, -1e+30
    %v3150 = vsel %vm3142, %v2913, -1e+30
    %v3151 = vsel %vm3142, %v2918, -1e+30
    %v3152 = vsel %vm3142, %v2921, -1e+30
    %v3153 = vsel %vm3142, %v2926, -1e+30
    %v3154 = vsel %vm3142, %v2929, -1e+30
    %v3155 = vsel %vm3142, %v2934, -1e+30
    %v3156 = vsel %vm3142, %v2937, -1e+30
    %v3157 = vsel %vm3142, %v2942, -1e+30
    %v3158 = vsel %vm3142, %v2945, -1e+30
    %v3159 = vsel %vm3142, %v2950, -1e+30
    %v3160 = vsel %vm3142, %v2953, -1e+30
    %v3161 = vsel %vm3142, %v2958, -1e+30
    %v3162 = vsel %vm3142, %v2961, -1e+30
    %v3163 = vsel %vm3142, %v2966, -1e+30
    %v3164 = vsel %vm3142, %v2969, -1e+30
    %v3165 = vsel %vm3142, %v2974, -1e+30
    %v3166 = vsel %vm3142, %v2977, -1e+30
    %v3167 = vsel %vm3142, %v2982, -1e+30
    %v3168 = vsel %vm3142, %v2985, -1e+30
    %v3169 = vsel %vm3142, %v2990, -1e+30
    %v3170 = vsel %vm3142, %v2993, -1e+30
    %v3171 = vsel %vm3142, %v2998, -1e+30
    %v3172 = vsel %vm3142, %v3001, -1e+30
    %v3173 = vsel %vm3142, %v3006, -1e+30
    %v3174 = vsel %vm3142, %v3009, -1e+30
    %v3175 = vsel %vm3142, %v3014, -1e+30
    %v3176 = vsel %vm3142, %v3017, -1e+30
    %v3177 = vsel %vm3142, %v3022, -1e+30
    %v3178 = vsel %vm3142, %v3025, -1e+30
    %v3179 = vsel %vm3142, %v3030, -1e+30
    %v3180 = vsel %vm3142, %v3033, -1e+30
    %v3181 = vsel %vm3142, %v3038, -1e+30
    %v3182 = vsel %vm3142, %v3041, -1e+30
    %v3183 = vsel %vm3142, %v3046, -1e+30
    %v3184 = vsel %vm3142, %v3049, -1e+30
    %v3185 = vsel %vm3142, %v3054, -1e+30
    %v3186 = vsel %vm3142, %v3057, -1e+30
    %v3187 = vsel %vm3142, %v3062, -1e+30
    %v3188 = vsel %vm3142, %v3065, -1e+30
    %v3189 = vsel %vm3142, %v3070, -1e+30
    %v3190 = vsel %vm3142, %v3073, -1e+30
    %v3191 = vsel %vm3142, %v3078, -1e+30
    %v3192 = vsel %vm3142, %v3081, -1e+30
    %v3193 = vsel %vm3142, %v3086, -1e+30
    %v3194 = vsel %vm3142, %v3089, -1e+30
    %v3195 = vsel %vm3142, %v3094, -1e+30
    %v3196 = vsel %vm3142, %v3097, -1e+30
    %v3197 = vsel %vm3142, %v3102, -1e+30
    %v3198 = vsel %vm3142, %v3105, -1e+30
    %v3199 = vsel %vm3142, %v3110, -1e+30
    %v3200 = vsel %vm3142, %v3113, -1e+30
    %v3201 = vsel %vm3142, %v3118, -1e+30
    %v3202 = vsel %vm3142, %v3121, -1e+30
    %v3203 = vsel %vm3142, %v3126, -1e+30
    %v3204 = vsel %vm3142, %v3129, -1e+30
    %v3205 = vsel %vm3142, %v3134, -1e+30
    %v3206 = vsel %vm3142, %v3137, -1e+30
    %3207 = vmax.xlane.f32.xlu0 %v3143
    %v3208 = vpop.xlane.xlu0 %3207
    %3209 = vmax.xlane.f32.xlu0 %v3144
    %v3210 = vpop.xlane.xlu0 %3209
    %3211 = vmax.xlane.f32.xlu0 %v3145
    %v3212 = vpop.xlane.xlu0 %3211
    %3213 = vmax.xlane.f32.xlu0 %v3146
    %v3214 = vpop.xlane.xlu0 %3213
    %3215 = vmax.xlane.f32.xlu0 %v3147
    %v3216 = vpop.xlane.xlu0 %3215
    %3217 = vmax.xlane.f32.xlu0 %v3148
    %v3218 = vpop.xlane.xlu0 %3217
    %3219 = vmax.xlane.f32.xlu0 %v3149
    %v3220 = vpop.xlane.xlu0 %3219
    %3221 = vmax.xlane.f32.xlu0 %v3150
    %v3222 = vpop.xlane.xlu0 %3221
    %3223 = vmax.xlane.f32.xlu0 %v3151
    %v3224 = vpop.xlane.xlu0 %3223
    %3225 = vmax.xlane.f32.xlu0 %v3152
    %v3226 = vpop.xlane.xlu0 %3225
    %3227 = vmax.xlane.f32.xlu0 %v3153
    %v3228 = vpop.xlane.xlu0 %3227
    %3229 = vmax.xlane.f32.xlu0 %v3154
    %v3230 = vpop.xlane.xlu0 %3229
    %3231 = vmax.xlane.f32.xlu0 %v3155
    %v3232 = vpop.xlane.xlu0 %3231
    %3233 = vmax.xlane.f32.xlu0 %v3156
    %v3234 = vpop.xlane.xlu0 %3233
    %3235 = vmax.xlane.f32.xlu0 %v3157
    %v3236 = vpop.xlane.xlu0 %3235
    %3237 = vmax.xlane.f32.xlu0 %v3158
    %v3238 = vpop.xlane.xlu0 %3237
    %3239 = vmax.xlane.f32.xlu0 %v3159
    %v3240 = vpop.xlane.xlu0 %3239
    %3241 = vmax.xlane.f32.xlu0 %v3160
    %v3242 = vpop.xlane.xlu0 %3241
    %3243 = vmax.xlane.f32.xlu0 %v3161
    %v3244 = vpop.xlane.xlu0 %3243
    %3245 = vmax.xlane.f32.xlu0 %v3162
    %v3246 = vpop.xlane.xlu0 %3245
    %3247 = vmax.xlane.f32.xlu0 %v3163
    %v3248 = vpop.xlane.xlu0 %3247
    %3249 = vmax.xlane.f32.xlu0 %v3164
    %v3250 = vpop.xlane.xlu0 %3249
    %3251 = vmax.xlane.f32.xlu0 %v3165
    %v3252 = vpop.xlane.xlu0 %3251
    %3253 = vmax.xlane.f32.xlu0 %v3166
    %v3254 = vpop.xlane.xlu0 %3253
    %3255 = vmax.xlane.f32.xlu0 %v3167
    %v3256 = vpop.xlane.xlu0 %3255
    %3257 = vmax.xlane.f32.xlu0 %v3168
    %v3258 = vpop.xlane.xlu0 %3257
    %3259 = vmax.xlane.f32.xlu0 %v3169
    %v3260 = vpop.xlane.xlu0 %3259
    %3261 = vmax.xlane.f32.xlu0 %v3170
    %v3262 = vpop.xlane.xlu0 %3261
    %3263 = vmax.xlane.f32.xlu0 %v3171
    %v3264 = vpop.xlane.xlu0 %3263
    %3265 = vmax.xlane.f32.xlu0 %v3172
    %v3266 = vpop.xlane.xlu0 %3265
    %3267 = vmax.xlane.f32.xlu0 %v3173
    %v3268 = vpop.xlane.xlu0 %3267
    %3269 = vmax.xlane.f32.xlu0 %v3174
    %v3270 = vpop.xlane.xlu0 %3269
    %3271 = vmax.xlane.f32.xlu0 %v3175
    %v3272 = vpop.xlane.xlu0 %3271
    %3273 = vmax.xlane.f32.xlu0 %v3176
    %v3274 = vpop.xlane.xlu0 %3273
    %3275 = vmax.xlane.f32.xlu0 %v3177
    %v3276 = vpop.xlane.xlu0 %3275
    %3277 = vmax.xlane.f32.xlu0 %v3178
    %v3278 = vpop.xlane.xlu0 %3277
    %3279 = vmax.xlane.f32.xlu0 %v3179
    %v3280 = vpop.xlane.xlu0 %3279
    %3281 = vmax.xlane.f32.xlu0 %v3180
    %v3282 = vpop.xlane.xlu0 %3281
    %3283 = vmax.xlane.f32.xlu0 %v3181
    %v3284 = vpop.xlane.xlu0 %3283
    %3285 = vmax.xlane.f32.xlu0 %v3182
    %v3286 = vpop.xlane.xlu0 %3285
    %3287 = vmax.xlane.f32.xlu0 %v3183
    %v3288 = vpop.xlane.xlu0 %3287
    %3289 = vmax.xlane.f32.xlu0 %v3184
    %v3290 = vpop.xlane.xlu0 %3289
    %3291 = vmax.xlane.f32.xlu0 %v3185
    %v3292 = vpop.xlane.xlu0 %3291
    %3293 = vmax.xlane.f32.xlu0 %v3186
    %v3294 = vpop.xlane.xlu0 %3293
    %3295 = vmax.xlane.f32.xlu0 %v3187
    %v3296 = vpop.xlane.xlu0 %3295
    %3297 = vmax.xlane.f32.xlu0 %v3188
    %v3298 = vpop.xlane.xlu0 %3297
    %3299 = vmax.xlane.f32.xlu0 %v3189
    %v3300 = vpop.xlane.xlu0 %3299
    %3301 = vmax.xlane.f32.xlu0 %v3190
    %v3302 = vpop.xlane.xlu0 %3301
    %3303 = vmax.xlane.f32.xlu0 %v3191
    %v3304 = vpop.xlane.xlu0 %3303
    %3305 = vmax.xlane.f32.xlu0 %v3192
    %v3306 = vpop.xlane.xlu0 %3305
    %3307 = vmax.xlane.f32.xlu0 %v3193
    %v3308 = vpop.xlane.xlu0 %3307
    %3309 = vmax.xlane.f32.xlu0 %v3194
    %v3310 = vpop.xlane.xlu0 %3309
    %3311 = vmax.xlane.f32.xlu0 %v3195
    %v3312 = vpop.xlane.xlu0 %3311
    %3313 = vmax.xlane.f32.xlu0 %v3196
    %v3314 = vpop.xlane.xlu0 %3313
    %3315 = vmax.xlane.f32.xlu0 %v3197
    %v3316 = vpop.xlane.xlu0 %3315
    %3317 = vmax.xlane.f32.xlu0 %v3198
    %v3318 = vpop.xlane.xlu0 %3317
    %3319 = vmax.xlane.f32.xlu0 %v3199
    %v3320 = vpop.xlane.xlu0 %3319
    %3321 = vmax.xlane.f32.xlu0 %v3200
    %v3322 = vpop.xlane.xlu0 %3321
    %3323 = vmax.xlane.f32.xlu0 %v3201
    %v3324 = vpop.xlane.xlu0 %3323
    %3325 = vmax.xlane.f32.xlu0 %v3202
    %v3326 = vpop.xlane.xlu0 %3325
    %3327 = vmax.xlane.f32.xlu0 %v3203
    %v3328 = vpop.xlane.xlu0 %3327
    %3329 = vmax.xlane.f32.xlu0 %v3204
    %v3330 = vpop.xlane.xlu0 %3329
    %3331 = vmax.xlane.f32.xlu0 %v3205
    %v3332 = vpop.xlane.xlu0 %3331
    %3333 = vmax.xlane.f32.xlu0 %v3206
    %v3334 = vpop.xlane.xlu0 %3333
    %v3335 = vsub.f32 %v3143, %v3208
    %v3336 = vsub.f32 %v3144, %v3210
    %v3337 = vsub.f32 %v3145, %v3212
    %v3338 = vsub.f32 %v3146, %v3214
    %v3339 = vsub.f32 %v3147, %v3216
    %v3340 = vsub.f32 %v3148, %v3218
    %v3341 = vsub.f32 %v3149, %v3220
    %v3342 = vsub.f32 %v3150, %v3222
    %v3343 = vsub.f32 %v3151, %v3224
    %v3344 = vsub.f32 %v3152, %v3226
    %v3345 = vsub.f32 %v3153, %v3228
    %v3346 = vsub.f32 %v3154, %v3230
    %v3347 = vsub.f32 %v3155, %v3232
    %v3348 = vsub.f32 %v3156, %v3234
    %v3349 = vsub.f32 %v3157, %v3236
    %v3350 = vsub.f32 %v3158, %v3238
    %v3351 = vsub.f32 %v3159, %v3240
    %v3352 = vsub.f32 %v3160, %v3242
    %v3353 = vsub.f32 %v3161, %v3244
    %v3354 = vsub.f32 %v3162, %v3246
    %v3355 = vsub.f32 %v3163, %v3248
    %v3356 = vsub.f32 %v3164, %v3250
    %v3357 = vsub.f32 %v3165, %v3252
    %v3358 = vsub.f32 %v3166, %v3254
    %v3359 = vsub.f32 %v3167, %v3256
    %v3360 = vsub.f32 %v3168, %v3258
    %v3361 = vsub.f32 %v3169, %v3260
    %v3362 = vsub.f32 %v3170, %v3262
    %v3363 = vsub.f32 %v3171, %v3264
    %v3364 = vsub.f32 %v3172, %v3266
    %v3365 = vsub.f32 %v3173, %v3268
    %v3366 = vsub.f32 %v3174, %v3270
    %v3367 = vsub.f32 %v3175, %v3272
    %v3368 = vsub.f32 %v3176, %v3274
    %v3369 = vsub.f32 %v3177, %v3276
    %v3370 = vsub.f32 %v3178, %v3278
    %v3371 = vsub.f32 %v3179, %v3280
    %v3372 = vsub.f32 %v3180, %v3282
    %v3373 = vsub.f32 %v3181, %v3284
    %v3374 = vsub.f32 %v3182, %v3286
    %v3375 = vsub.f32 %v3183, %v3288
    %v3376 = vsub.f32 %v3184, %v3290
    %v3377 = vsub.f32 %v3185, %v3292
    %v3378 = vsub.f32 %v3186, %v3294
    %v3379 = vsub.f32 %v3187, %v3296
    %v3380 = vsub.f32 %v3188, %v3298
    %v3381 = vsub.f32 %v3189, %v3300
    %v3382 = vsub.f32 %v3190, %v3302
    %v3383 = vsub.f32 %v3191, %v3304
    %v3384 = vsub.f32 %v3192, %v3306
    %v3385 = vsub.f32 %v3193, %v3308
    %v3386 = vsub.f32 %v3194, %v3310
    %v3387 = vsub.f32 %v3195, %v3312
    %v3388 = vsub.f32 %v3196, %v3314
    %v3389 = vsub.f32 %v3197, %v3316
    %v3390 = vsub.f32 %v3198, %v3318
    %v3391 = vsub.f32 %v3199, %v3320
    %v3392 = vsub.f32 %v3200, %v3322
    %v3393 = vsub.f32 %v3201, %v3324
    %v3394 = vsub.f32 %v3202, %v3326
    %v3395 = vsub.f32 %v3203, %v3328
    %v3396 = vsub.f32 %v3204, %v3330
    %v3397 = vsub.f32 %v3205, %v3332
    %v3398 = vsub.f32 %v3206, %v3334
    %v3399 = vmul.f32 %v3335, 1.442695
    %v3400 = vpow.pop %v3399
    %v3401 = vmul.f32 %v3336, 1.442695
    %v3402 = vpow.pop %v3401
    %v3403 = vmul.f32 %v3337, 1.442695
    %v3404 = vpow.pop %v3403
    %v3405 = vmul.f32 %v3338, 1.442695
    %v3406 = vpow.pop %v3405
    %v3407 = vmul.f32 %v3339, 1.442695
    %v3408 = vpow.pop %v3407
    %v3409 = vmul.f32 %v3340, 1.442695
    %v3410 = vpow.pop %v3409
    %v3411 = vmul.f32 %v3341, 1.442695
    %v3412 = vpow.pop %v3411
    %v3413 = vmul.f32 %v3342, 1.442695
    %v3414 = vpow.pop %v3413
    %v3415 = vmul.f32 %v3343, 1.442695
    %v3416 = vpow.pop %v3415
    %v3417 = vmul.f32 %v3344, 1.442695
    %v3418 = vpow.pop %v3417
    %v3419 = vmul.f32 %v3345, 1.442695
    %v3420 = vpow.pop %v3419
    %v3421 = vmul.f32 %v3346, 1.442695
    %v3422 = vpow.pop %v3421
    %v3423 = vmul.f32 %v3347, 1.442695
    %v3424 = vpow.pop %v3423
    %v3425 = vmul.f32 %v3348, 1.442695
    %v3426 = vpow.pop %v3425
    %v3427 = vmul.f32 %v3349, 1.442695
    %v3428 = vpow.pop %v3427
    %v3429 = vmul.f32 %v3350, 1.442695
    %v3430 = vpow.pop %v3429
    %v3431 = vmul.f32 %v3351, 1.442695
    %v3432 = vpow.pop %v3431
    %v3433 = vmul.f32 %v3352, 1.442695
    %v3434 = vpow.pop %v3433
    %v3435 = vmul.f32 %v3353, 1.442695
    %v3436 = vpow.pop %v3435
    %v3437 = vmul.f32 %v3354, 1.442695
    %v3438 = vpow.pop %v3437
    %v3439 = vmul.f32 %v3355, 1.442695
    %v3440 = vpow.pop %v3439
    %v3441 = vmul.f32 %v3356, 1.442695
    %v3442 = vpow.pop %v3441
    %v3443 = vmul.f32 %v3357, 1.442695
    %v3444 = vpow.pop %v3443
    %v3445 = vmul.f32 %v3358, 1.442695
    %v3446 = vpow.pop %v3445
    %v3447 = vmul.f32 %v3359, 1.442695
    %v3448 = vpow.pop %v3447
    %v3449 = vmul.f32 %v3360, 1.442695
    %v3450 = vpow.pop %v3449
    %v3451 = vmul.f32 %v3361, 1.442695
    %v3452 = vpow.pop %v3451
    %v3453 = vmul.f32 %v3362, 1.442695
    %v3454 = vpow.pop %v3453
    %v3455 = vmul.f32 %v3363, 1.442695
    %v3456 = vpow.pop %v3455
    %v3457 = vmul.f32 %v3364, 1.442695
    %v3458 = vpow.pop %v3457
    %v3459 = vmul.f32 %v3365, 1.442695
    %v3460 = vpow.pop %v3459
    %v3461 = vmul.f32 %v3366, 1.442695
    %v3462 = vpow.pop %v3461
    %v3463 = vmul.f32 %v3367, 1.442695
    %v3464 = vpow.pop %v3463
    %v3465 = vmul.f32 %v3368, 1.442695
    %v3466 = vpow.pop %v3465
    %v3467 = vmul.f32 %v3369, 1.442695
    %v3468 = vpow.pop %v3467
    %v3469 = vmul.f32 %v3370, 1.442695
    %v3470 = vpow.pop %v3469
    %v3471 = vmul.f32 %v3371, 1.442695
    %v3472 = vpow.pop %v3471
    %v3473 = vmul.f32 %v3372, 1.442695
    %v3474 = vpow.pop %v3473
    %v3475 = vmul.f32 %v3373, 1.442695
    %v3476 = vpow.pop %v3475
    %v3477 = vmul.f32 %v3374, 1.442695
    %v3478 = vpow.pop %v3477
    %v3479 = vmul.f32 %v3375, 1.442695
    %v3480 = vpow.pop %v3479
    %v3481 = vmul.f32 %v3376, 1.442695
    %v3482 = vpow.pop %v3481
    %v3483 = vmul.f32 %v3377, 1.442695
    %v3484 = vpow.pop %v3483
    %v3485 = vmul.f32 %v3378, 1.442695
    %v3486 = vpow.pop %v3485
    %v3487 = vmul.f32 %v3379, 1.442695
    %v3488 = vpow.pop %v3487
    %v3489 = vmul.f32 %v3380, 1.442695
    %v3490 = vpow.pop %v3489
    %v3491 = vmul.f32 %v3381, 1.442695
    %v3492 = vpow.pop %v3491
    %v3493 = vmul.f32 %v3382, 1.442695
    %v3494 = vpow.pop %v3493
    %v3495 = vmul.f32 %v3383, 1.442695
    %v3496 = vpow.pop %v3495
    %v3497 = vmul.f32 %v3384, 1.442695
    %v3498 = vpow.pop %v3497
    %v3499 = vmul.f32 %v3385, 1.442695
    %v3500 = vpow.pop %v3499
    %v3501 = vmul.f32 %v3386, 1.442695
    %v3502 = vpow.pop %v3501
    %v3503 = vmul.f32 %v3387, 1.442695
    %v3504 = vpow.pop %v3503
    %v3505 = vmul.f32 %v3388, 1.442695
    %v3506 = vpow.pop %v3505
    %v3507 = vmul.f32 %v3389, 1.442695
    %v3508 = vpow.pop %v3507
    %v3509 = vmul.f32 %v3390, 1.442695
    %v3510 = vpow.pop %v3509
    %v3511 = vmul.f32 %v3391, 1.442695
    %v3512 = vpow.pop %v3511
    %v3513 = vmul.f32 %v3392, 1.442695
    %v3514 = vpow.pop %v3513
    %v3515 = vmul.f32 %v3393, 1.442695
    %v3516 = vpow.pop %v3515
    %v3517 = vmul.f32 %v3394, 1.442695
    %v3518 = vpow.pop %v3517
    %v3519 = vmul.f32 %v3395, 1.442695
    %v3520 = vpow.pop %v3519
    %v3521 = vmul.f32 %v3396, 1.442695
    %v3522 = vpow.pop %v3521
    %v3523 = vmul.f32 %v3397, 1.442695
    %v3524 = vpow.pop %v3523
    %v3525 = vmul.f32 %v3398, 1.442695
    %v3526 = vpow.pop %v3525
    %3527 = vadd.xlane.f32.xlu0 %v3400
    %v3528 = vpop.xlane.xlu0 %3527
    %3529 = vadd.xlane.f32.xlu0 %v3402
    %v3530 = vpop.xlane.xlu0 %3529
    %3531 = vadd.xlane.f32.xlu0 %v3404
    %v3532 = vpop.xlane.xlu0 %3531
    %3533 = vadd.xlane.f32.xlu0 %v3406
    %v3534 = vpop.xlane.xlu0 %3533
    %3535 = vadd.xlane.f32.xlu0 %v3408
    %v3536 = vpop.xlane.xlu0 %3535
    %3537 = vadd.xlane.f32.xlu0 %v3410
    %v3538 = vpop.xlane.xlu0 %3537
    %3539 = vadd.xlane.f32.xlu0 %v3412
    %v3540 = vpop.xlane.xlu0 %3539
    %3541 = vadd.xlane.f32.xlu0 %v3414
    %v3542 = vpop.xlane.xlu0 %3541
    %3543 = vadd.xlane.f32.xlu0 %v3416
    %v3544 = vpop.xlane.xlu0 %3543
    %3545 = vadd.xlane.f32.xlu0 %v3418
    %v3546 = vpop.xlane.xlu0 %3545
    %3547 = vadd.xlane.f32.xlu0 %v3420
    %v3548 = vpop.xlane.xlu0 %3547
    %3549 = vadd.xlane.f32.xlu0 %v3422
    %v3550 = vpop.xlane.xlu0 %3549
    %3551 = vadd.xlane.f32.xlu0 %v3424
    %v3552 = vpop.xlane.xlu0 %3551
    %3553 = vadd.xlane.f32.xlu0 %v3426
    %v3554 = vpop.xlane.xlu0 %3553
    %3555 = vadd.xlane.f32.xlu0 %v3428
    %v3556 = vpop.xlane.xlu0 %3555
    %3557 = vadd.xlane.f32.xlu0 %v3430
    %v3558 = vpop.xlane.xlu0 %3557
    %3559 = vadd.xlane.f32.xlu0 %v3432
    %v3560 = vpop.xlane.xlu0 %3559
    %3561 = vadd.xlane.f32.xlu0 %v3434
    %v3562 = vpop.xlane.xlu0 %3561
    %3563 = vadd.xlane.f32.xlu0 %v3436
    %v3564 = vpop.xlane.xlu0 %3563
    %3565 = vadd.xlane.f32.xlu0 %v3438
    %v3566 = vpop.xlane.xlu0 %3565
    %3567 = vadd.xlane.f32.xlu0 %v3440
    %v3568 = vpop.xlane.xlu0 %3567
    %3569 = vadd.xlane.f32.xlu0 %v3442
    %v3570 = vpop.xlane.xlu0 %3569
    %3571 = vadd.xlane.f32.xlu0 %v3444
    %v3572 = vpop.xlane.xlu0 %3571
    %3573 = vadd.xlane.f32.xlu0 %v3446
    %v3574 = vpop.xlane.xlu0 %3573
    %3575 = vadd.xlane.f32.xlu0 %v3448
    %v3576 = vpop.xlane.xlu0 %3575
    %3577 = vadd.xlane.f32.xlu0 %v3450
    %v3578 = vpop.xlane.xlu0 %3577
    %3579 = vadd.xlane.f32.xlu0 %v3452
    %v3580 = vpop.xlane.xlu0 %3579
    %3581 = vadd.xlane.f32.xlu0 %v3454
    %v3582 = vpop.xlane.xlu0 %3581
    %3583 = vadd.xlane.f32.xlu0 %v3456
    %v3584 = vpop.xlane.xlu0 %3583
    %3585 = vadd.xlane.f32.xlu0 %v3458
    %v3586 = vpop.xlane.xlu0 %3585
    %3587 = vadd.xlane.f32.xlu0 %v3460
    %v3588 = vpop.xlane.xlu0 %3587
    %3589 = vadd.xlane.f32.xlu0 %v3462
    %v3590 = vpop.xlane.xlu0 %3589
    %3591 = vadd.xlane.f32.xlu0 %v3464
    %v3592 = vpop.xlane.xlu0 %3591
    %3593 = vadd.xlane.f32.xlu0 %v3466
    %v3594 = vpop.xlane.xlu0 %3593
    %3595 = vadd.xlane.f32.xlu0 %v3468
    %v3596 = vpop.xlane.xlu0 %3595
    %3597 = vadd.xlane.f32.xlu0 %v3470
    %v3598 = vpop.xlane.xlu0 %3597
    %3599 = vadd.xlane.f32.xlu0 %v3472
    %v3600 = vpop.xlane.xlu0 %3599
    %3601 = vadd.xlane.f32.xlu0 %v3474
    %v3602 = vpop.xlane.xlu0 %3601
    %3603 = vadd.xlane.f32.xlu0 %v3476
    %v3604 = vpop.xlane.xlu0 %3603
    %3605 = vadd.xlane.f32.xlu0 %v3478
    %v3606 = vpop.xlane.xlu0 %3605
    %3607 = vadd.xlane.f32.xlu0 %v3480
    %v3608 = vpop.xlane.xlu0 %3607
    %3609 = vadd.xlane.f32.xlu0 %v3482
    %v3610 = vpop.xlane.xlu0 %3609
    %3611 = vadd.xlane.f32.xlu0 %v3484
    %v3612 = vpop.xlane.xlu0 %3611
    %3613 = vadd.xlane.f32.xlu0 %v3486
    %v3614 = vpop.xlane.xlu0 %3613
    %3615 = vadd.xlane.f32.xlu0 %v3488
    %v3616 = vpop.xlane.xlu0 %3615
    %3617 = vadd.xlane.f32.xlu0 %v3490
    %v3618 = vpop.xlane.xlu0 %3617
    %3619 = vadd.xlane.f32.xlu0 %v3492
    %v3620 = vpop.xlane.xlu0 %3619
    %3621 = vadd.xlane.f32.xlu0 %v3494
    %v3622 = vpop.xlane.xlu0 %3621
    %3623 = vadd.xlane.f32.xlu0 %v3496
    %v3624 = vpop.xlane.xlu0 %3623
    %3625 = vadd.xlane.f32.xlu0 %v3498
    %v3626 = vpop.xlane.xlu0 %3625
    %3627 = vadd.xlane.f32.xlu0 %v3500
    %v3628 = vpop.xlane.xlu0 %3627
    %3629 = vadd.xlane.f32.xlu0 %v3502
    %v3630 = vpop.xlane.xlu0 %3629
    %3631 = vadd.xlane.f32.xlu0 %v3504
    %v3632 = vpop.xlane.xlu0 %3631
    %3633 = vadd.xlane.f32.xlu0 %v3506
    %v3634 = vpop.xlane.xlu0 %3633
    %3635 = vadd.xlane.f32.xlu0 %v3508
    %v3636 = vpop.xlane.xlu0 %3635
    %3637 = vadd.xlane.f32.xlu0 %v3510
    %v3638 = vpop.xlane.xlu0 %3637
    %3639 = vadd.xlane.f32.xlu0 %v3512
    %v3640 = vpop.xlane.xlu0 %3639
    %3641 = vadd.xlane.f32.xlu0 %v3514
    %v3642 = vpop.xlane.xlu0 %3641
    %3643 = vadd.xlane.f32.xlu0 %v3516
    %v3644 = vpop.xlane.xlu0 %3643
    %3645 = vadd.xlane.f32.xlu0 %v3518
    %v3646 = vpop.xlane.xlu0 %3645
    %3647 = vadd.xlane.f32.xlu0 %v3520
    %v3648 = vpop.xlane.xlu0 %3647
    %3649 = vadd.xlane.f32.xlu0 %v3522
    %v3650 = vpop.xlane.xlu0 %3649
    %3651 = vadd.xlane.f32.xlu0 %v3524
    %v3652 = vpop.xlane.xlu0 %3651
    %3653 = vadd.xlane.f32.xlu0 %v3526
    %v3654 = vpop.xlane.xlu0 %3653
    %v3655 = vlog2.pop %v3528
    %v3656 = vmul.f32 %v3655, 0.6931472
    %v3657 = vlog2.pop %v3530
    %v3658 = vmul.f32 %v3657, 0.6931472
    %v3659 = vlog2.pop %v3532
    %v3660 = vmul.f32 %v3659, 0.6931472
    %v3661 = vlog2.pop %v3534
    %v3662 = vmul.f32 %v3661, 0.6931472
    %v3663 = vlog2.pop %v3536
    %v3664 = vmul.f32 %v3663, 0.6931472
    %v3665 = vlog2.pop %v3538
    %v3666 = vmul.f32 %v3665, 0.6931472
    %v3667 = vlog2.pop %v3540
    %v3668 = vmul.f32 %v3667, 0.6931472
    %v3669 = vlog2.pop %v3542
    %v3670 = vmul.f32 %v3669, 0.6931472
    %v3671 = vlog2.pop %v3544
    %v3672 = vmul.f32 %v3671, 0.6931472
    %v3673 = vlog2.pop %v3546
    %v3674 = vmul.f32 %v3673, 0.6931472
    %v3675 = vlog2.pop %v3548
    %v3676 = vmul.f32 %v3675, 0.6931472
    %v3677 = vlog2.pop %v3550
    %v3678 = vmul.f32 %v3677, 0.6931472
    %v3679 = vlog2.pop %v3552
    %v3680 = vmul.f32 %v3679, 0.6931472
    %v3681 = vlog2.pop %v3554
    %v3682 = vmul.f32 %v3681, 0.6931472
    %v3683 = vlog2.pop %v3556
    %v3684 = vmul.f32 %v3683, 0.6931472
    %v3685 = vlog2.pop %v3558
    %v3686 = vmul.f32 %v3685, 0.6931472
    %v3687 = vlog2.pop %v3560
    %v3688 = vmul.f32 %v3687, 0.6931472
    %v3689 = vlog2.pop %v3562
    %v3690 = vmul.f32 %v3689, 0.6931472
    %v3691 = vlog2.pop %v3564
    %v3692 = vmul.f32 %v3691, 0.6931472
    %v3693 = vlog2.pop %v3566
    %v3694 = vmul.f32 %v3693, 0.6931472
    %v3695 = vlog2.pop %v3568
    %v3696 = vmul.f32 %v3695, 0.6931472
    %v3697 = vlog2.pop %v3570
    %v3698 = vmul.f32 %v3697, 0.6931472
    %v3699 = vlog2.pop %v3572
    %v3700 = vmul.f32 %v3699, 0.6931472
    %v3701 = vlog2.pop %v3574
    %v3702 = vmul.f32 %v3701, 0.6931472
    %v3703 = vlog2.pop %v3576
    %v3704 = vmul.f32 %v3703, 0.6931472
    %v3705 = vlog2.pop %v3578
    %v3706 = vmul.f32 %v3705, 0.6931472
    %v3707 = vlog2.pop %v3580
    %v3708 = vmul.f32 %v3707, 0.6931472
    %v3709 = vlog2.pop %v3582
    %v3710 = vmul.f32 %v3709, 0.6931472
    %v3711 = vlog2.pop %v3584
    %v3712 = vmul.f32 %v3711, 0.6931472
    %v3713 = vlog2.pop %v3586
    %v3714 = vmul.f32 %v3713, 0.6931472
    %v3715 = vlog2.pop %v3588
    %v3716 = vmul.f32 %v3715, 0.6931472
    %v3717 = vlog2.pop %v3590
    %v3718 = vmul.f32 %v3717, 0.6931472
    %v3719 = vlog2.pop %v3592
    %v3720 = vmul.f32 %v3719, 0.6931472
    %v3721 = vlog2.pop %v3594
    %v3722 = vmul.f32 %v3721, 0.6931472
    %v3723 = vlog2.pop %v3596
    %v3724 = vmul.f32 %v3723, 0.6931472
    %v3725 = vlog2.pop %v3598
    %v3726 = vmul.f32 %v3725, 0.6931472
    %v3727 = vlog2.pop %v3600
    %v3728 = vmul.f32 %v3727, 0.6931472
    %v3729 = vlog2.pop %v3602
    %v3730 = vmul.f32 %v3729, 0.6931472
    %v3731 = vlog2.pop %v3604
    %v3732 = vmul.f32 %v3731, 0.6931472
    %v3733 = vlog2.pop %v3606
    %v3734 = vmul.f32 %v3733, 0.6931472
    %v3735 = vlog2.pop %v3608
    %v3736 = vmul.f32 %v3735, 0.6931472
    %v3737 = vlog2.pop %v3610
    %v3738 = vmul.f32 %v3737, 0.6931472
    %v3739 = vlog2.pop %v3612
    %v3740 = vmul.f32 %v3739, 0.6931472
    %v3741 = vlog2.pop %v3614
    %v3742 = vmul.f32 %v3741, 0.6931472
    %v3743 = vlog2.pop %v3616
    %v3744 = vmul.f32 %v3743, 0.6931472
    %v3745 = vlog2.pop %v3618
    %v3746 = vmul.f32 %v3745, 0.6931472
    %v3747 = vlog2.pop %v3620
    %v3748 = vmul.f32 %v3747, 0.6931472
    %v3749 = vlog2.pop %v3622
    %v3750 = vmul.f32 %v3749, 0.6931472
    %v3751 = vlog2.pop %v3624
    %v3752 = vmul.f32 %v3751, 0.6931472
    %v3753 = vlog2.pop %v3626
    %v3754 = vmul.f32 %v3753, 0.6931472
    %v3755 = vlog2.pop %v3628
    %v3756 = vmul.f32 %v3755, 0.6931472
    %v3757 = vlog2.pop %v3630
    %v3758 = vmul.f32 %v3757, 0.6931472
    %v3759 = vlog2.pop %v3632
    %v3760 = vmul.f32 %v3759, 0.6931472
    %v3761 = vlog2.pop %v3634
    %v3762 = vmul.f32 %v3761, 0.6931472
    %v3763 = vlog2.pop %v3636
    %v3764 = vmul.f32 %v3763, 0.6931472
    %v3765 = vlog2.pop %v3638
    %v3766 = vmul.f32 %v3765, 0.6931472
    %v3767 = vlog2.pop %v3640
    %v3768 = vmul.f32 %v3767, 0.6931472
    %v3769 = vlog2.pop %v3642
    %v3770 = vmul.f32 %v3769, 0.6931472
    %v3771 = vlog2.pop %v3644
    %v3772 = vmul.f32 %v3771, 0.6931472
    %v3773 = vlog2.pop %v3646
    %v3774 = vmul.f32 %v3773, 0.6931472
    %v3775 = vlog2.pop %v3648
    %v3776 = vmul.f32 %v3775, 0.6931472
    %v3777 = vlog2.pop %v3650
    %v3778 = vmul.f32 %v3777, 0.6931472
    %v3779 = vlog2.pop %v3652
    %v3780 = vmul.f32 %v3779, 0.6931472
    %v3781 = vlog2.pop %v3654
    %v3782 = vmul.f32 %v3781, 0.6931472
    %v3783 = vsub.f32 %v3335, %v3656
    %v3784 = vsub.f32 %v3336, %v3658
    %v3785 = vsub.f32 %v3337, %v3660
    %v3786 = vsub.f32 %v3338, %v3662
    %v3787 = vsub.f32 %v3339, %v3664
    %v3788 = vsub.f32 %v3340, %v3666
    %v3789 = vsub.f32 %v3341, %v3668
    %v3790 = vsub.f32 %v3342, %v3670
    %v3791 = vsub.f32 %v3343, %v3672
    %v3792 = vsub.f32 %v3344, %v3674
    %v3793 = vsub.f32 %v3345, %v3676
    %v3794 = vsub.f32 %v3346, %v3678
    %v3795 = vsub.f32 %v3347, %v3680
    %v3796 = vsub.f32 %v3348, %v3682
    %v3797 = vsub.f32 %v3349, %v3684
    %v3798 = vsub.f32 %v3350, %v3686
    %v3799 = vsub.f32 %v3351, %v3688
    %v3800 = vsub.f32 %v3352, %v3690
    %v3801 = vsub.f32 %v3353, %v3692
    %v3802 = vsub.f32 %v3354, %v3694
    %v3803 = vsub.f32 %v3355, %v3696
    %v3804 = vsub.f32 %v3356, %v3698
    %v3805 = vsub.f32 %v3357, %v3700
    %v3806 = vsub.f32 %v3358, %v3702
    %v3807 = vsub.f32 %v3359, %v3704
    %v3808 = vsub.f32 %v3360, %v3706
    %v3809 = vsub.f32 %v3361, %v3708
    %v3810 = vsub.f32 %v3362, %v3710
    %v3811 = vsub.f32 %v3363, %v3712
    %v3812 = vsub.f32 %v3364, %v3714
    %v3813 = vsub.f32 %v3365, %v3716
    %v3814 = vsub.f32 %v3366, %v3718
    %v3815 = vsub.f32 %v3367, %v3720
    %v3816 = vsub.f32 %v3368, %v3722
    %v3817 = vsub.f32 %v3369, %v3724
    %v3818 = vsub.f32 %v3370, %v3726
    %v3819 = vsub.f32 %v3371, %v3728
    %v3820 = vsub.f32 %v3372, %v3730
    %v3821 = vsub.f32 %v3373, %v3732
    %v3822 = vsub.f32 %v3374, %v3734
    %v3823 = vsub.f32 %v3375, %v3736
    %v3824 = vsub.f32 %v3376, %v3738
    %v3825 = vsub.f32 %v3377, %v3740
    %v3826 = vsub.f32 %v3378, %v3742
    %v3827 = vsub.f32 %v3379, %v3744
    %v3828 = vsub.f32 %v3380, %v3746
    %v3829 = vsub.f32 %v3381, %v3748
    %v3830 = vsub.f32 %v3382, %v3750
    %v3831 = vsub.f32 %v3383, %v3752
    %v3832 = vsub.f32 %v3384, %v3754
    %v3833 = vsub.f32 %v3385, %v3756
    %v3834 = vsub.f32 %v3386, %v3758
    %v3835 = vsub.f32 %v3387, %v3760
    %v3836 = vsub.f32 %v3388, %v3762
    %v3837 = vsub.f32 %v3389, %v3764
    %v3838 = vsub.f32 %v3390, %v3766
    %v3839 = vsub.f32 %v3391, %v3768
    %v3840 = vsub.f32 %v3392, %v3770
    %v3841 = vsub.f32 %v3393, %v3772
    %v3842 = vsub.f32 %v3394, %v3774
    %v3843 = vsub.f32 %v3395, %v3776
    %v3844 = vsub.f32 %v3396, %v3778
    %v3845 = vsub.f32 %v3397, %v3780
    %v3846 = vsub.f32 %v3398, %v3782
    %3847 = vst [vmem:[#allocation10] sm:$0xff] %v3783
    %3848 = vst [vmem:[#allocation10 + $0x8] sm:$0xff] %v3784
    %3849 = vst [vmem:[#allocation10 + $0x10] sm:$0xff] %v3785
    %3850 = vst [vmem:[#allocation10 + $0x18] sm:$0xff] %v3786
    %3851 = vst [vmem:[#allocation10 + $0x20] sm:$0xff] %v3787
    %3852 = vst [vmem:[#allocation10 + $0x28] sm:$0xff] %v3788
    %3853 = vst [vmem:[#allocation10 + $0x30] sm:$0xff] %v3789
    %3854 = vst [vmem:[#allocation10 + $0x38] sm:$0xff] %v3790
    %3855 = vst [vmem:[#allocation10 + $0x40] sm:$0xff] %v3791
    %3856 = vst [vmem:[#allocation10 + $0x48] sm:$0xff] %v3792
    %3857 = vst [vmem:[#allocation10 + $0x50] sm:$0xff] %v3793
    %3858 = vst [vmem:[#allocation10 + $0x58] sm:$0xff] %v3794
    %3859 = vst [vmem:[#allocation10 + $0x60] sm:$0xff] %v3795
    %3860 = vst [vmem:[#allocation10 + $0x68] sm:$0xff] %v3796
    %3861 = vst [vmem:[#allocation10 + $0x70] sm:$0xff] %v3797
    %3862 = vst [vmem:[#allocation10 + $0x78] sm:$0xff] %v3798
    %3863 = vst [vmem:[#allocation10 + $0x80] sm:$0xff] %v3799
    %3864 = vst [vmem:[#allocation10 + $0x88] sm:$0xff] %v3800
    %3865 = vst [vmem:[#allocation10 + $0x90] sm:$0xff] %v3801
    %3866 = vst [vmem:[#allocation10 + $0x98] sm:$0xff] %v3802
    %3867 = vst [vmem:[#allocation10 + $0xa0] sm:$0xff] %v3803
    %3868 = vst [vmem:[#allocation10 + $0xa8] sm:$0xff] %v3804
    %3869 = vst [vmem:[#allocation10 + $0xb0] sm:$0xff] %v3805
    %3870 = vst [vmem:[#allocation10 + $0xb8] sm:$0xff] %v3806
    %3871 = vst [vmem:[#allocation10 + $0xc0] sm:$0xff] %v3807
    %3872 = vst [vmem:[#allocation10 + $0xc8] sm:$0xff] %v3808
    %3873 = vst [vmem:[#allocation10 + $0xd0] sm:$0xff] %v3809
    %3874 = vst [vmem:[#allocation10 + $0xd8] sm:$0xff] %v3810
    %3875 = vst [vmem:[#allocation10 + $0xe0] sm:$0xff] %v3811
    %3876 = vst [vmem:[#allocation10 + $0xe8] sm:$0xff] %v3812
    %3877 = vst [vmem:[#allocation10 + $0xf0] sm:$0xff] %v3813
    %3878 = vst [vmem:[#allocation10 + $0xf8] sm:$0xff] %v3814
    %3879 = vst [vmem:[#allocation10 + $0x100] sm:$0xff] %v3815
    %3880 = vst [vmem:[#allocation10 + $0x108] sm:$0xff] %v3816
    %3881 = vst [vmem:[#allocation10 + $0x110] sm:$0xff] %v3817
    %3882 = vst [vmem:[#allocation10 + $0x118] sm:$0xff] %v3818
    %3883 = vst [vmem:[#allocation10 + $0x120] sm:$0xff] %v3819
    %3884 = vst [vmem:[#allocation10 + $0x128] sm:$0xff] %v3820
    %3885 = vst [vmem:[#allocation10 + $0x130] sm:$0xff] %v3821
    %3886 = vst [vmem:[#allocation10 + $0x138] sm:$0xff] %v3822
    %3887 = vst [vmem:[#allocation10 + $0x140] sm:$0xff] %v3823
    %3888 = vst [vmem:[#allocation10 + $0x148] sm:$0xff] %v3824
    %3889 = vst [vmem:[#allocation10 + $0x150] sm:$0xff] %v3825
    %3890 = vst [vmem:[#allocation10 + $0x158] sm:$0xff] %v3826
    %3891 = vst [vmem:[#allocation10 + $0x160] sm:$0xff] %v3827
    %3892 = vst [vmem:[#allocation10 + $0x168] sm:$0xff] %v3828
    %3893 = vst [vmem:[#allocation10 + $0x170] sm:$0xff] %v3829
    %3894 = vst [vmem:[#allocation10 + $0x178] sm:$0xff] %v3830
    %3895 = vst [vmem:[#allocation10 + $0x180] sm:$0xff] %v3831
    %3896 = vst [vmem:[#allocation10 + $0x188] sm:$0xff] %v3832
    %3897 = vst [vmem:[#allocation10 + $0x190] sm:$0xff] %v3833
    %3898 = vst [vmem:[#allocation10 + $0x198] sm:$0xff] %v3834
    %3899 = vst [vmem:[#allocation10 + $0x1a0] sm:$0xff] %v3835
    %3900 = vst [vmem:[#allocation10 + $0x1a8] sm:$0xff] %v3836
    %3901 = vst [vmem:[#allocation10 + $0x1b0] sm:$0xff] %v3837
    %3902 = vst [vmem:[#allocation10 + $0x1b8] sm:$0xff] %v3838
    %3903 = vst [vmem:[#allocation10 + $0x1c0] sm:$0xff] %v3839
    %3904 = vst [vmem:[#allocation10 + $0x1c8] sm:$0xff] %v3840
    %3905 = vst [vmem:[#allocation10 + $0x1d0] sm:$0xff] %v3841
    %3906 = vst [vmem:[#allocation10 + $0x1d8] sm:$0xff] %v3842
    %3907 = vst [vmem:[#allocation10 + $0x1e0] sm:$0xff] %v3843
    %3908 = vst [vmem:[#allocation10 + $0x1e8] sm:$0xff] %v3844
    %3909 = vst [vmem:[#allocation10 + $0x1f0] sm:$0xff] %v3845
    %3910 = vst [vmem:[#allocation10 + $0x1f8] sm:$0xff] %v3846
    // Predicated region
    $region42: #{tpu_custom_call.1} parent=1 // pred_check
      _
    $region43: #{tpu_custom_call.1} parent=1 // pred_check_branch
      %3912 = sbr.rel (0) target = $region45
    $region44: #{tpu_custom_call.1} parent=1 // pred_region
      %s3914 = ssub.s32 8192, 8192
      %3915 = vsyncadd [#allocation4], %s3914
      %s3916 = sshll.u32 [#allocation10], 4
      %s3917 = int_to_ptr.vmem [resolvable:$true] %s3916
      %3922 = dma.vmem_to_hbm [thread:$0]  %s3917, 8192, %s6, [#allocation4], 128, 128, 8
    $region45: #{tpu_custom_call.1} parent=1 // pred_fallthru
      _
    // Predicated region
    $region46: #{tpu_custom_call.1} parent=1 // pred_check
      _
    $region47: #{tpu_custom_call.1} parent=1 // pred_check_branch
      %3924 = sbr.rel (0) target = $region49
    $region48: #{tpu_custom_call.1} parent=1 // pred_region
      %3925 = dma.done [#allocation4], 8192
    $region49: #{tpu_custom_call.1} parent=1 // pred_fallthru
      _
    %3926 = vsyncpa [#allocation3], 1
    %3927 = vsyncpa [#allocation6], 1
    %3928 = vsyncpa [#allocation9], 1
    %3929 = vsyncpa [#allocation4], 1

</llo_original>
